<compile_context>
chip_gen: v6e
topology: v6e:2x2x1
jax: 0.10.0
libtpu: 0.0.40
codegen_flags: <defaults>
</compile_context>

<pallas_src>
import jax
import jax.numpy as jnp
from jax.experimental import pallas as pl
from jax.experimental.pallas import tpu as pltpu


def _round_up(x, m):
    return ((x + m - 1) // m) * m


def _num_batch_blocks(Bp):
    """1 block on single-TC chips (v5e/v6e) -- the grid is a sequential loop on
    one TC and the recurrence is latency-bound, so splitting just multiplies
    wall-clock.  Exactly 2 blocks on v7x (2 TCs/chip) when the half-batch stays
    sublane-aligned."""
    try:
        kind = jax.devices()[0].device_kind.lower()
    except Exception:
        kind = ""
    if ("v7" in kind or "7x" in kind) and Bp >= 16 and Bp % 16 == 0:
        return 2
    return 1


def _vmem_budget_bytes(T, Bb, Ep, Hp, EMBp, L):
    bf16, f32 = 2, 4
    total = 2 * T * Bb * Ep * bf16                      # double-buffered embeds block
    for l in range(L):
        in_p = Ep if l == 0 else Hp
        total += 2 * (in_p * 4 * Hp * bf16 + Hp * 4 * Hp * bf16 + 4 * Hp * f32)
    total += 2 * (2 * L * Hp * EMBp * bf16 + EMBp * f32)  # fc weights + bias
    total += 2 * Bb * EMBp * f32                          # output block
    total += T * Bb * 4 * Hp * bf16                       # gx scratch (bf16)
    total += T * Bb * Hp * bf16                           # inter-layer seq scratch
    return total


def _make_kernel(Bb, T, Ep, Hp, L):
    FourH = 4 * Hp

    def kernel(*refs):
        # unpack: embeds, L x (w_ihT, w_hhT, b), fc_wT, fc_b, out, scratch(gx, seq)
        embeds_ref = refs[0]
        layer_refs = []
        idx = 1
        for _ in range(L):
            layer_refs.append((refs[idx], refs[idx + 1], refs[idx + 2]))
            idx += 3
        fc_wT_ref = refs[idx]
        fc_b_ref = refs[idx + 1]
        out_ref = refs[idx + 2]
        gx_ref = refs[idx + 3]   # (T, Bb, 4Hp) bf16  time-major gate preactivations
        seq_ref = refs[idx + 4]  # (T, Bb, Hp)  bf16  time-major inter-layer sequence

        unroll_amt = True if T <= 16 else 8

        feats = []  # [h_0, c_0, h_1, c_1, ...]  (matches torch cat(h,c,dim=2)+permute+reshape)

        # TODO(synk): layer-wavefront pipelining (layer l at step t with layer
        # l+1 at step t-1) and a MXU-resident W_hh via matmul_push_rhs would
        # further shorten the serial recurrence chain; not implemented here.
        for l in range(L):
            w_ihT_ref, w_hhT_ref, b_ref = layer_refs[l]
            in_p = Ep if l == 0 else Hp

            # Input to this layer (time-major): embeddings for layer 0, previous
            # layer's h-sequence otherwise.  Both are bf16.
            x_all = embeds_ref[...] if l == 0 else seq_ref[...]

            # Precompute x_t @ W_ih^T + b for all timesteps as one MXU matmul
            # (bf16 x bf16 -> f32 accumulate), stored bf16.
            # TODO(synk): for production shapes chunk this precompute along T
            # (emit_pipeline) instead of materializing (T, Bb, 4Hp) at once.
            gx = jax.lax.dot_general(
                x_all.reshape(T * Bb, in_p),
                w_ihT_ref[...],
                (((1,), (0,)), ((), ())),
                preferred_element_type=jnp.float32,
            )
            gx_ref[...] = (gx + b_ref[...]).reshape(T, Bb, FourH).astype(jnp.bfloat16)

            w_hhT = w_hhT_ref[...]            # (Hp, 4Hp) bf16, constant over time
            last_layer = (l == L - 1)

            def step(t, carry, _last=last_layer, _w=w_hhT):
                h, c = carry                  # h bf16 (Bb, Hp), c f32 (Bb, Hp)
                g = gx_ref[t] + jnp.dot(h, _w, preferred_element_type=jnp.float32)
                # Gates are laid out (i, f, o, g): one sigmoid over a contiguous
                # 3-lane-group slice + one tanh, instead of 3 sigmoids + 1 tanh.
                sig = jax.nn.sigmoid(g[:, 0:3 * Hp])
                i_g = sig[:, 0:Hp]
                f_g = sig[:, Hp:2 * Hp]
                o_g = sig[:, 2 * Hp:3 * Hp]
                g_g = jnp.tanh(g[:, 3 * Hp:4 * Hp])
                c_new = f_g * c + i_g * g_g
                h_new = (o_g * jnp.tanh(c_new)).astype(jnp.bfloat16)
                if not _last:
                    # lane-dense whole-tile store of this layer's output sequence
                    seq_ref[t] = h_new
                return h_new, c_new

            h0 = jnp.zeros((Bb, Hp), jnp.bfloat16)
            c0 = jnp.zeros((Bb, Hp), jnp.float32)
            h_fin, c_fin = jax.lax.fori_loop(0, T, step, (h0, c0), unroll=unroll_amt)
            feats.append(h_fin.astype(jnp.float32))
            feats.append(c_fin)

        feat = jnp.tanh(jnp.concatenate(feats, axis=1))        # (Bb, 2*L*Hp) f32
        out = jnp.dot(feat.astype(jnp.bfloat16), fc_wT_ref[...],
                      preferred_element_type=jnp.float32) + fc_b_ref[...]
        out_ref[...] = out.astype(out_ref.dtype)

    return kernel


# Destination gate-block order (i, f, o, g) built from torch's (i, f, g, o).
_GATE_SRC = (0, 1, 3, 2)


def _pad_and_cast_params(params, *, E, H, L, EMB, Ep, Hp, EMBp):
    """Zero-pad every gate / feature block to 128 lanes, reorder gates to
    (i, f, o, g), and cast matmul weights to bf16.  Padding is exact: padded
    weight rows/cols are zero, so padded h/c lanes stay zero through the
    recurrence and contribute nothing to the Linear."""
    f32 = jnp.float32
    emb = params["word_embeddings"].astype(f32)
    V = emb.shape[0]
    emb_p = jnp.zeros((V, Ep), f32).at[:, :E].set(emb).astype(jnp.bfloat16)

    layers = []
    for l in range(L):
        w_ihT, w_hhT, b = params["layers"][l]           # (in, 4H), (H, 4H), (1, 4H)
        in_dim = E if l == 0 else H
        in_p = Ep if l == 0 else Hp
        wi = jnp.zeros((in_p, 4 * Hp), f32)
        wh = jnp.zeros((Hp, 4 * Hp), f32)
        bp = jnp.zeros((1, 4 * Hp), f32)
        for dst, src in enumerate(_GATE_SRC):           # dst blocks: i, f, o, g
            wi = wi.at[:in_dim, dst * Hp:dst * Hp + H].set(w_ihT[:, src * H:(src + 1) * H])
            wh = wh.at[:H, dst * Hp:dst * Hp + H].set(w_hhT[:, src * H:(src + 1) * H])
            bp = bp.at[:, dst * Hp:dst * Hp + H].set(b[:, src * H:(src + 1) * H])
        layers.append((wi.astype(jnp.bfloat16), wh.astype(jnp.bfloat16), bp))

    fc_wT = params["fc_wT"].astype(f32)                  # (2*L*H, EMB)
    fc_b = params["fc_b"].astype(f32)                    # (1, EMB)
    fw = jnp.zeros((2 * L * Hp, EMBp), f32)
    for l in range(L):
        fw = fw.at[2 * l * Hp:2 * l * Hp + H, :EMB].set(
            fc_wT[2 * l * H:2 * l * H + H, :])           # h_l rows
        fw = fw.at[(2 * l + 1) * Hp:(2 * l + 1) * Hp + H, :EMB].set(
            fc_wT[2 * l * H + H:2 * (l + 1) * H, :])     # c_l rows
    fb = jnp.zeros((1, EMBp), f32).at[:, :EMB].set(fc_b)

    return {"word_embeddings": emb_p, "layers": layers,
            "fc_wT": fw.astype(jnp.bfloat16), "fc_b": fb}


def question_encoder_forward(question, params, *, B, T, E, H, L, EMB):
    Ep, Hp, EMBp = _round_up(E, 128), _round_up(H, 128), _round_up(EMB, 128)
    pp = _pad_and_cast_params(params, E=E, H=H, L=L, EMB=EMB, Ep=Ep, Hp=Hp, EMBp=EMBp)

    # Glue: frozen-embedding gather, time-major (T, B, Ep) bf16; pad batch to a
    # multiple of 8 with zero rows so all tiles are sublane-dense.
    # TODO(synk): at production B*T move the gather in-kernel (scalar-prefetched
    # ids + pl.Element BlockSpec or manual DMA from a pl.ANY table) to avoid the
    # extra HBM round trip of the padded activation tensor.
    Bp = _round_up(B, 8)
    embeds_tm = pp["word_embeddings"][question.T]                 # (T, B, Ep) bf16
    if Bp != B:
        embeds_tm = jnp.pad(embeds_tm, ((0, 0), (0, Bp - B), (0, 0)))

    n_blocks = _num_batch_blocks(Bp)
    Bb = Bp // n_blocks
    grid = (n_blocks,)

    kernel_inputs = [embeds_tm]
    in_specs = [pl.BlockSpec((T, Bb, Ep), lambda i: (0, i, 0))]
    for l in range(L):
        w_ihT, w_hhT, b = pp["layers"][l]
        kernel_inputs += [w_ihT, w_hhT, b]
        in_specs += [
            pl.BlockSpec(w_ihT.shape, lambda i: (0, 0)),
            pl.BlockSpec(w_hhT.shape, lambda i: (0, 0)),
            pl.BlockSpec(b.shape, lambda i: (0, 0)),
        ]
    kernel_inputs += [pp["fc_wT"], pp["fc_b"]]
    in_specs += [
        pl.BlockSpec(pp["fc_wT"].shape, lambda i: (0, 0)),
        pl.BlockSpec(pp["fc_b"].shape, lambda i: (0, 0)),
    ]

    # Explicit VMEM budget (double-buffered blocks + scratch), capped at v7x's
    # 64 MiB physical VMEM.
    budget = _vmem_budget_bytes(T, Bb, Ep, Hp, EMBp, L)
    vmem_limit = min(max(int(budget * 1.5) + (2 << 20), 16 << 20), 64 << 20)

    out_p = pl.pallas_call(
        _make_kernel(Bb, T, Ep, Hp, L),
        out_shape=jax.ShapeDtypeStruct((Bp, EMBp), jnp.float32),
        grid_spec=pltpu.PrefetchScalarGridSpec(
            num_scalar_prefetch=0,
            grid=grid,
            in_specs=in_specs,
            out_specs=pl.BlockSpec((Bb, EMBp), lambda i: (i, 0)),
            scratch_shapes=[
                pltpu.VMEM((T, Bb, 4 * Hp), jnp.bfloat16),  # time-major gate preacts
                pltpu.VMEM((T, Bb, Hp), jnp.bfloat16),      # time-major layer-output seq
            ],
        ),
        compiler_params=pltpu.CompilerParams(
            dimension_semantics=("parallel",),
            vmem_limit_bytes=vmem_limit,
        ),
    )(*kernel_inputs)

    return out_p[:B, :EMB]


def reference_forward(question, params, *, B, T, E, H, L, EMB):
    # Pure-f32, unpadded reference matching the PyTorch module semantics.
    x = params["word_embeddings"][question].astype(jnp.float32)
    feats = []
    inp = x
    for l in range(L):
        w_ihT, w_hhT, b = params["layers"][l]
        h = jnp.zeros((B, H), jnp.float32)
        c = jnp.zeros((B, H), jnp.float32)
        outs = []
        for t in range(T):
            g = inp[:, t, :] @ w_ihT + h @ w_hhT + b[0]
            i_g = jax.nn.sigmoid(g[:, :H])
            f_g = jax.nn.sigmoid(g[:, H:2 * H])
            g_g = jnp.tanh(g[:, 2 * H:3 * H])
            o_g = jax.nn.sigmoid(g[:, 3 * H:])
            c = f_g * c + i_g * g_g
            h = o_g * jnp.tanh(c)
            outs.append(h)
        inp = jnp.stack(outs, axis=1)
        feats += [h, c]
    feat = jnp.tanh(jnp.concatenate(feats, axis=1))
    return feat @ params["fc_wT"] + params["fc_b"][0]


if __name__ == "__main__":
    # Small, module-consistent shapes.
    B, T = 2, 8            # batch, sequence length
    V = 50                 # vocab size
    E = 32                 # word_embedding_dim
    H = 32                 # hidden_dim
    L = 2                  # num_layers
    EMB = 32               # embedding_dim (fc output)

    key = jax.random.PRNGKey(0)
    ks = jax.random.split(key, 4 + 4 * L)

    def u(k, shape, scale=0.1):
        return jax.random.uniform(k, shape, jnp.float32, -scale, scale)

    params = {
        "word_embeddings": u(ks[0], (V, E), 1.0),
        "layers": [],
    }
    ki = 1
    for l in range(L):
        in_dim = E if l == 0 else H
        w_ih = u(ks[ki], (4 * H, in_dim)); ki += 1      # torch weight_ih_l{l}
        w_hh = u(ks[ki], (4 * H, H)); ki += 1           # torch weight_hh_l{l}
        b_ih = u(ks[ki], (4 * H,)); ki += 1
        b_hh = u(ks[ki], (4 * H,)); ki += 1
        params["layers"].append(
            (w_ih.T, w_hh.T, (b_ih + b_hh)[None, :])    # transposed + fused bias
        )
    fc_w = u(ks[ki], (EMB, 2 * L * H)); ki += 1         # torch Linear.weight
    fc_b = u(ks[ki], (EMB,)); ki += 1
    params["fc_wT"] = fc_w.T
    params["fc_b"] = fc_b[None, :]

    question = jax.random.randint(jax.random.PRNGKey(1), (B, T), 0, V, jnp.int32)

    out = question_encoder_forward(question, params, B=B, T=T, E=E, H=H, L=L, EMB=EMB)
    out = jax.block_until_ready(out)

    ref = reference_forward(question, params, B=B, T=T, E=E, H=H, L=L, EMB=EMB)
    assert out.shape == (B, EMB)
    # Kernel runs its matmuls in bf16 (f32 accumulation) and stores gate
    # preactivations / h-carry in bf16; compare against the pure-f32 reference
    # with a matching tolerance.
    assert jnp.allclose(out, ref, rtol=2e-2, atol=2e-2), "mismatch vs pure-JAX reference"

    print("KERNEL_OK")
</pallas_src>

<mosaic_0001>
module attributes {stable_mosaic.version = 11 : i64} {
  func.func @kernel(%arg0: i32, %arg1: memref<8x8x128xbf16, #tpu.memory_space<vmem>>, %arg2: memref<128x512xbf16, #tpu.memory_space<vmem>>, %arg3: memref<128x512xbf16, #tpu.memory_space<vmem>>, %arg4: memref<1x512xf32, #tpu.memory_space<vmem>>, %arg5: memref<128x512xbf16, #tpu.memory_space<vmem>>, %arg6: memref<128x512xbf16, #tpu.memory_space<vmem>>, %arg7: memref<1x512xf32, #tpu.memory_space<vmem>>, %arg8: memref<512x128xbf16, #tpu.memory_space<vmem>>, %arg9: memref<1x128xf32, #tpu.memory_space<vmem>>, %arg10: memref<8x128xf32, #tpu.memory_space<vmem>>, %arg11: memref<8x8x512xbf16, #tpu.memory_space<vmem>>, %arg12: memref<8x8x128xbf16, #tpu.memory_space<vmem>>) attributes {dimension_semantics = [#tpu.dimension_semantics<parallel>], iteration_bounds = array<i64: 1>, scalar_prefetch = 0 : i64, scratch_operands = 2 : i64, tpu.core_type = #tpu.core_type<tc>, window_params = [{transform_indices = @transform_0, window_bounds = array<i64: 8, 8, 128>}, {pipeline_mode = #tpu.pipeline_mode<synchronous>, transform_indices = @transform_1, window_bounds = array<i64: 128, 512>}, {pipeline_mode = #tpu.pipeline_mode<synchronous>, transform_indices = @transform_2, window_bounds = array<i64: 128, 512>}, {pipeline_mode = #tpu.pipeline_mode<synchronous>, transform_indices = @transform_3, window_bounds = array<i64: 1, 512>}, {pipeline_mode = #tpu.pipeline_mode<synchronous>, transform_indices = @transform_4, window_bounds = array<i64: 128, 512>}, {pipeline_mode = #tpu.pipeline_mode<synchronous>, transform_indices = @transform_5, window_bounds = array<i64: 128, 512>}, {pipeline_mode = #tpu.pipeline_mode<synchronous>, transform_indices = @transform_6, window_bounds = array<i64: 1, 512>}, {pipeline_mode = #tpu.pipeline_mode<synchronous>, transform_indices = @transform_7, window_bounds = array<i64: 512, 128>}, {pipeline_mode = #tpu.pipeline_mode<synchronous>, transform_indices = @transform_8, window_bounds = array<i64: 1, 128>}, {transform_indices = @transform_9, window_bounds = array<i64: 8, 128>}]} {
    %c0 = arith.constant 0 : index
    %c0_0 = arith.constant 0 : index
    %c0_1 = arith.constant 0 : index
    %0 = vector.load %arg1[%c0, %c0_0, %c0_1] : memref<8x8x128xbf16, #tpu.memory_space<vmem>>, vector<8x8x128xbf16>
    %1 = vector.shape_cast %0 : vector<8x8x128xbf16> to vector<64x128xbf16>
    %c0_2 = arith.constant 0 : index
    %c0_3 = arith.constant 0 : index
    %2 = vector.load %arg2[%c0_2, %c0_3] : memref<128x512xbf16, #tpu.memory_space<vmem>>, vector<128x512xbf16>
    %cst = arith.constant dense<0.000000e+00> : vector<64x512xf32>
    %3 = tpu.matmul %1, %2, %cst {dimension_numbers = #tpu.dot_dimension_numbers<[1], [0], [0], [1], [0, 0, 1, 1], [], []>} : vector<64x128xbf16>, vector<128x512xbf16>, vector<64x512xf32> -> vector<64x512xf32>
    %c0_4 = arith.constant 0 : index
    %c0_5 = arith.constant 0 : index
    %4 = vector.load %arg4[%c0_4, %c0_5] : memref<1x512xf32, #tpu.memory_space<vmem>>, vector<1x512xf32>
    %5 = vector.broadcast %4 : vector<1x512xf32> to vector<64x512xf32>
    %6 = arith.addf %3, %5 : vector<64x512xf32>
    %7 = vector.shape_cast %6 : vector<64x512xf32> to vector<8x8x512xf32>
    %8 = arith.truncf %7 : vector<8x8x512xf32> to vector<8x8x512xbf16>
    %c0_6 = arith.constant 0 : index
    %c0_7 = arith.constant 0 : index
    %c0_8 = arith.constant 0 : index
    %9 = vector.load %arg11[%c0_6, %c0_7, %c0_8] : memref<8x8x512xbf16, #tpu.memory_space<vmem>>, vector<8x8x512xbf16>
    tpu.vector_store %arg11[%c0_6, %c0_7, %c0_8], %8 {strides = array<i32>} : memref<8x8x512xbf16, #tpu.memory_space<vmem>>, vector<8x8x512xbf16>,
    %c0_9 = arith.constant 0 : index
    %c0_10 = arith.constant 0 : index
    %10 = vector.load %arg3[%c0_9, %c0_10] : memref<128x512xbf16, #tpu.memory_space<vmem>>, vector<128x512xbf16>
    %cst_11 = arith.constant 0.000000e+00 : bf16
    %11 = vector.broadcast %cst_11 : bf16 to vector<8x128xbf16>
    %cst_12 = arith.constant 0.000000e+00 : f32
    %12 = vector.broadcast %cst_12 : f32 to vector<8x128xf32>
    %c0_i32 = arith.constant 0 : i32
    %13 = arith.index_cast %c0_i32 : i32 to index
    %c0_13 = arith.constant 0 : index
    %c0_14 = arith.constant 0 : index
    %14 = vector.load %arg11[%13, %c0_13, %c0_14] : memref<8x8x512xbf16, #tpu.memory_space<vmem>>, vector<1x8x512xbf16>
    %15 = vector.shape_cast %14 : vector<1x8x512xbf16> to vector<8x512xbf16>
    %cst_15 = arith.constant dense<0.000000e+00> : vector<8x512xf32>
    %16 = tpu.matmul %11, %10, %cst_15 {dimension_numbers = #tpu.dot_dimension_numbers<[1], [0], [0], [1], [0, 0, 1, 1], [], []>} : vector<8x128xbf16>, vector<128x512xbf16>, vector<8x512xf32> -> vector<8x512xf32>
    %17 = arith.extf %15 : vector<8x512xbf16> to vector<8x512xf32>
    %18 = arith.addf %17, %16 : vector<8x512xf32>
    %19 = vector.extract_strided_slice %18 {offsets = [0, 0], sizes = [8, 384], strides = [1, 1]} : vector<8x512xf32> to vector<8x384xf32>
    %20 = arith.negf %19 : vector<8x384xf32>
    %21 = math.exp %20 : vector<8x384xf32>
    %cst_16 = arith.constant 1.000000e+00 : f32
    %22 = vector.broadcast %cst_16 : f32 to vector<8x384xf32>
    %23 = arith.addf %22, %21 : vector<8x384xf32>
    %24 = arith.divf %22, %23 : vector<8x384xf32>
    %25 = vector.extract_strided_slice %24 {offsets = [0, 0], sizes = [8, 128], strides = [1, 1]} : vector<8x384xf32> to vector<8x128xf32>
    %26 = vector.extract_strided_slice %24 {offsets = [0, 128], sizes = [8, 128], strides = [1, 1]} : vector<8x384xf32> to vector<8x128xf32>
    %27 = vector.extract_strided_slice %24 {offsets = [0, 256], sizes = [8, 128], strides = [1, 1]} : vector<8x384xf32> to vector<8x128xf32>
    %28 = vector.extract_strided_slice %18 {offsets = [0, 384], sizes = [8, 128], strides = [1, 1]} : vector<8x512xf32> to vector<8x128xf32>
    %29 = math.tanh %28 : vector<8x128xf32>
    %30 = arith.mulf %26, %12 : vector<8x128xf32>
    %31 = arith.mulf %25, %29 : vector<8x128xf32>
    %32 = arith.addf %30, %31 : vector<8x128xf32>
    %33 = math.tanh %32 : vector<8x128xf32>
    %34 = arith.mulf %27, %33 : vector<8x128xf32>
    %35 = arith.truncf %34 : vector<8x128xf32> to vector<8x128xbf16>
    %36 = arith.index_cast %c0_i32 : i32 to index
    %c0_17 = arith.constant 0 : index
    %c0_18 = arith.constant 0 : index
    %37 = vector.load %arg12[%36, %c0_17, %c0_18] : memref<8x8x128xbf16, #tpu.memory_space<vmem>>, vector<1x8x128xbf16>
    %38 = vector.shape_cast %37 : vector<1x8x128xbf16> to vector<8x128xbf16>
    %39 = vector.shape_cast %35 : vector<8x128xbf16> to vector<1x8x128xbf16>
    tpu.vector_store %arg12[%36, %c0_17, %c0_18], %39 {strides = array<i32>} : memref<8x8x128xbf16, #tpu.memory_space<vmem>>, vector<1x8x128xbf16>,
    %c1_i32 = arith.constant 1 : i32
    %40 = arith.index_cast %c1_i32 : i32 to index
    %c0_19 = arith.constant 0 : index
    %c0_20 = arith.constant 0 : index
    %41 = vector.load %arg11[%40, %c0_19, %c0_20] : memref<8x8x512xbf16, #tpu.memory_space<vmem>>, vector<1x8x512xbf16>
    %42 = vector.shape_cast %41 : vector<1x8x512xbf16> to vector<8x512xbf16>
    %cst_21 = arith.constant dense<0.000000e+00> : vector<8x512xf32>
    %43 = tpu.matmul %35, %10, %cst_21 {dimension_numbers = #tpu.dot_dimension_numbers<[1], [0], [0], [1], [0, 0, 1, 1], [], []>} : vector<8x128xbf16>, vector<128x512xbf16>, vector<8x512xf32> -> vector<8x512xf32>
    %44 = arith.extf %42 : vector<8x512xbf16> to vector<8x512xf32>
    %45 = arith.addf %44, %43 : vector<8x512xf32>
    %46 = vector.extract_strided_slice %45 {offsets = [0, 0], sizes = [8, 384], strides = [1, 1]} : vector<8x512xf32> to vector<8x384xf32>
    %47 = arith.negf %46 : vector<8x384xf32>
    %48 = math.exp %47 : vector<8x384xf32>
    %cst_22 = arith.constant 1.000000e+00 : f32
    %49 = vector.broadcast %cst_22 : f32 to vector<8x384xf32>
    %50 = arith.addf %49, %48 : vector<8x384xf32>
    %51 = arith.divf %49, %50 : vector<8x384xf32>
    %52 = vector.extract_strided_slice %51 {offsets = [0, 0], sizes = [8, 128], strides = [1, 1]} : vector<8x384xf32> to vector<8x128xf32>
    %53 = vector.extract_strided_slice %51 {offsets = [0, 128], sizes = [8, 128], strides = [1, 1]} : vector<8x384xf32> to vector<8x128xf32>
    %54 = vector.extract_strided_slice %51 {offsets = [0, 256], sizes = [8, 128], strides = [1, 1]} : vector<8x384xf32> to vector<8x128xf32>
    %55 = vector.extract_strided_slice %45 {offsets = [0, 384], sizes = [8, 128], strides = [1, 1]} : vector<8x512xf32> to vector<8x128xf32>
    %56 = math.tanh %55 : vector<8x128xf32>
    %57 = arith.mulf %53, %32 : vector<8x128xf32>
    %58 = arith.mulf %52, %56 : vector<8x128xf32>
    %59 = arith.addf %57, %58 : vector<8x128xf32>
    %60 = math.tanh %59 : vector<8x128xf32>
    %61 = arith.mulf %54, %60 : vector<8x128xf32>
    %62 = arith.truncf %61 : vector<8x128xf32> to vector<8x128xbf16>
    %63 = arith.index_cast %c1_i32 : i32 to index
    %c0_23 = arith.constant 0 : index
    %c0_24 = arith.constant 0 : index
    %64 = vector.load %arg12[%63, %c0_23, %c0_24] : memref<8x8x128xbf16, #tpu.memory_space<vmem>>, vector<1x8x128xbf16>
    %65 = vector.shape_cast %64 : vector<1x8x128xbf16> to vector<8x128xbf16>
    %66 = vector.shape_cast %62 : vector<8x128xbf16> to vector<1x8x128xbf16>
    tpu.vector_store %arg12[%63, %c0_23, %c0_24], %66 {strides = array<i32>} : memref<8x8x128xbf16, #tpu.memory_space<vmem>>, vector<1x8x128xbf16>,
    %c2_i32 = arith.constant 2 : i32
    %67 = arith.index_cast %c2_i32 : i32 to index
    %c0_25 = arith.constant 0 : index
    %c0_26 = arith.constant 0 : index
    %68 = vector.load %arg11[%67, %c0_25, %c0_26] : memref<8x8x512xbf16, #tpu.memory_space<vmem>>, vector<1x8x512xbf16>
    %69 = vector.shape_cast %68 : vector<1x8x512xbf16> to vector<8x512xbf16>
    %cst_27 = arith.constant dense<0.000000e+00> : vector<8x512xf32>
    %70 = tpu.matmul %62, %10, %cst_27 {dimension_numbers = #tpu.dot_dimension_numbers<[1], [0], [0], [1], [0, 0, 1, 1], [], []>} : vector<8x128xbf16>, vector<128x512xbf16>, vector<8x512xf32> -> vector<8x512xf32>
    %71 = arith.extf %69 : vector<8x512xbf16> to vector<8x512xf32>
    %72 = arith.addf %71, %70 : vector<8x512xf32>
    %73 = vector.extract_strided_slice %72 {offsets = [0, 0], sizes = [8, 384], strides = [1, 1]} : vector<8x512xf32> to vector<8x384xf32>
    %74 = arith.negf %73 : vector<8x384xf32>
    %75 = math.exp %74 : vector<8x384xf32>
    %cst_28 = arith.constant 1.000000e+00 : f32
    %76 = vector.broadcast %cst_28 : f32 to vector<8x384xf32>
    %77 = arith.addf %76, %75 : vector<8x384xf32>
    %78 = arith.divf %76, %77 : vector<8x384xf32>
    %79 = vector.extract_strided_slice %78 {offsets = [0, 0], sizes = [8, 128], strides = [1, 1]} : vector<8x384xf32> to vector<8x128xf32>
    %80 = vector.extract_strided_slice %78 {offsets = [0, 128], sizes = [8, 128], strides = [1, 1]} : vector<8x384xf32> to vector<8x128xf32>
    %81 = vector.extract_strided_slice %78 {offsets = [0, 256], sizes = [8, 128], strides = [1, 1]} : vector<8x384xf32> to vector<8x128xf32>
    %82 = vector.extract_strided_slice %72 {offsets = [0, 384], sizes = [8, 128], strides = [1, 1]} : vector<8x512xf32> to vector<8x128xf32>
    %83 = math.tanh %82 : vector<8x128xf32>
    %84 = arith.mulf %80, %59 : vector<8x128xf32>
    %85 = arith.mulf %79, %83 : vector<8x128xf32>
    %86 = arith.addf %84, %85 : vector<8x128xf32>
    %87 = math.tanh %86 : vector<8x128xf32>
    %88 = arith.mulf %81, %87 : vector<8x128xf32>
    %89 = arith.truncf %88 : vector<8x128xf32> to vector<8x128xbf16>
    %90 = arith.index_cast %c2_i32 : i32 to index
    %c0_29 = arith.constant 0 : index
    %c0_30 = arith.constant 0 : index
    %91 = vector.load %arg12[%90, %c0_29, %c0_30] : memref<8x8x128xbf16, #tpu.memory_space<vmem>>, vector<1x8x128xbf16>
    %92 = vector.shape_cast %91 : vector<1x8x128xbf16> to vector<8x128xbf16>
    %93 = vector.shape_cast %89 : vector<8x128xbf16> to vector<1x8x128xbf16>
    tpu.vector_store %arg12[%90, %c0_29, %c0_30], %93 {strides = array<i32>} : memref<8x8x128xbf16, #tpu.memory_space<vmem>>, vector<1x8x128xbf16>,
    %c3_i32 = arith.constant 3 : i32
    %94 = arith.index_cast %c3_i32 : i32 to index
    %c0_31 = arith.constant 0 : index
    %c0_32 = arith.constant 0 : index
    %95 = vector.load %arg11[%94, %c0_31, %c0_32] : memref<8x8x512xbf16, #tpu.memory_space<vmem>>, vector<1x8x512xbf16>
    %96 = vector.shape_cast %95 : vector<1x8x512xbf16> to vector<8x512xbf16>
    %cst_33 = arith.constant dense<0.000000e+00> : vector<8x512xf32>
    %97 = tpu.matmul %89, %10, %cst_33 {dimension_numbers = #tpu.dot_dimension_numbers<[1], [0], [0], [1], [0, 0, 1, 1], [], []>} : vector<8x128xbf16>, vector<128x512xbf16>, vector<8x512xf32> -> vector<8x512xf32>
    %98 = arith.extf %96 : vector<8x512xbf16> to vector<8x512xf32>
    %99 = arith.addf %98, %97 : vector<8x512xf32>
    %100 = vector.extract_strided_slice %99 {offsets = [0, 0], sizes = [8, 384], strides = [1, 1]} : vector<8x512xf32> to vector<8x384xf32>
    %101 = arith.negf %100 : vector<8x384xf32>
    %102 = math.exp %101 : vector<8x384xf32>
    %cst_34 = arith.constant 1.000000e+00 : f32
    %103 = vector.broadcast %cst_34 : f32 to vector<8x384xf32>
    %104 = arith.addf %103, %102 : vector<8x384xf32>
    %105 = arith.divf %103, %104 : vector<8x384xf32>
    %106 = vector.extract_strided_slice %105 {offsets = [0, 0], sizes = [8, 128], strides = [1, 1]} : vector<8x384xf32> to vector<8x128xf32>
    %107 = vector.extract_strided_slice %105 {offsets = [0, 128], sizes = [8, 128], strides = [1, 1]} : vector<8x384xf32> to vector<8x128xf32>
    %108 = vector.extract_strided_slice %105 {offsets = [0, 256], sizes = [8, 128], strides = [1, 1]} : vector<8x384xf32> to vector<8x128xf32>
    %109 = vector.extract_strided_slice %99 {offsets = [0, 384], sizes = [8, 128], strides = [1, 1]} : vector<8x512xf32> to vector<8x128xf32>
    %110 = math.tanh %109 : vector<8x128xf32>
    %111 = arith.mulf %107, %86 : vector<8x128xf32>
    %112 = arith.mulf %106, %110 : vector<8x128xf32>
    %113 = arith.addf %111, %112 : vector<8x128xf32>
    %114 = math.tanh %113 : vector<8x128xf32>
    %115 = arith.mulf %108, %114 : vector<8x128xf32>
    %116 = arith.truncf %115 : vector<8x128xf32> to vector<8x128xbf16>
    %117 = arith.index_cast %c3_i32 : i32 to index
    %c0_35 = arith.constant 0 : index
    %c0_36 = arith.constant 0 : index
    %118 = vector.load %arg12[%117, %c0_35, %c0_36] : memref<8x8x128xbf16, #tpu.memory_space<vmem>>, vector<1x8x128xbf16>
    %119 = vector.shape_cast %118 : vector<1x8x128xbf16> to vector<8x128xbf16>
    %120 = vector.shape_cast %116 : vector<8x128xbf16> to vector<1x8x128xbf16>
    tpu.vector_store %arg12[%117, %c0_35, %c0_36], %120 {strides = array<i32>} : memref<8x8x128xbf16, #tpu.memory_space<vmem>>, vector<1x8x128xbf16>,
    %c4_i32 = arith.constant 4 : i32
    %121 = arith.index_cast %c4_i32 : i32 to index
    %c0_37 = arith.constant 0 : index
    %c0_38 = arith.constant 0 : index
    %122 = vector.load %arg11[%121, %c0_37, %c0_38] : memref<8x8x512xbf16, #tpu.memory_space<vmem>>, vector<1x8x512xbf16>
    %123 = vector.shape_cast %122 : vector<1x8x512xbf16> to vector<8x512xbf16>
    %cst_39 = arith.constant dense<0.000000e+00> : vector<8x512xf32>
    %124 = tpu.matmul %116, %10, %cst_39 {dimension_numbers = #tpu.dot_dimension_numbers<[1], [0], [0], [1], [0, 0, 1, 1], [], []>} : vector<8x128xbf16>, vector<128x512xbf16>, vector<8x512xf32> -> vector<8x512xf32>
    %125 = arith.extf %123 : vector<8x512xbf16> to vector<8x512xf32>
    %126 = arith.addf %125, %124 : vector<8x512xf32>
    %127 = vector.extract_strided_slice %126 {offsets = [0, 0], sizes = [8, 384], strides = [1, 1]} : vector<8x512xf32> to vector<8x384xf32>
    %128 = arith.negf %127 : vector<8x384xf32>
    %129 = math.exp %128 : vector<8x384xf32>
    %cst_40 = arith.constant 1.000000e+00 : f32
    %130 = vector.broadcast %cst_40 : f32 to vector<8x384xf32>
    %131 = arith.addf %130, %129 : vector<8x384xf32>
    %132 = arith.divf %130, %131 : vector<8x384xf32>
    %133 = vector.extract_strided_slice %132 {offsets = [0, 0], sizes = [8, 128], strides = [1, 1]} : vector<8x384xf32> to vector<8x128xf32>
    %134 = vector.extract_strided_slice %132 {offsets = [0, 128], sizes = [8, 128], strides = [1, 1]} : vector<8x384xf32> to vector<8x128xf32>
    %135 = vector.extract_strided_slice %132 {offsets = [0, 256], sizes = [8, 128], strides = [1, 1]} : vector<8x384xf32> to vector<8x128xf32>
    %136 = vector.extract_strided_slice %126 {offsets = [0, 384], sizes = [8, 128], strides = [1, 1]} : vector<8x512xf32> to vector<8x128xf32>
    %137 = math.tanh %136 : vector<8x128xf32>
    %138 = arith.mulf %134, %113 : vector<8x128xf32>
    %139 = arith.mulf %133, %137 : vector<8x128xf32>
    %140 = arith.addf %138, %139 : vector<8x128xf32>
    %141 = math.tanh %140 : vector<8x128xf32>
    %142 = arith.mulf %135, %141 : vector<8x128xf32>
    %143 = arith.truncf %142 : vector<8x128xf32> to vector<8x128xbf16>
    %144 = arith.index_cast %c4_i32 : i32 to index
    %c0_41 = arith.constant 0 : index
    %c0_42 = arith.constant 0 : index
    %145 = vector.load %arg12[%144, %c0_41, %c0_42] : memref<8x8x128xbf16, #tpu.memory_space<vmem>>, vector<1x8x128xbf16>
    %146 = vector.shape_cast %145 : vector<1x8x128xbf16> to vector<8x128xbf16>
    %147 = vector.shape_cast %143 : vector<8x128xbf16> to vector<1x8x128xbf16>
    tpu.vector_store %arg12[%144, %c0_41, %c0_42], %147 {strides = array<i32>} : memref<8x8x128xbf16, #tpu.memory_space<vmem>>, vector<1x8x128xbf16>,
    %c5_i32 = arith.constant 5 : i32
    %148 = arith.index_cast %c5_i32 : i32 to index
    %c0_43 = arith.constant 0 : index
    %c0_44 = arith.constant 0 : index
    %149 = vector.load %arg11[%148, %c0_43, %c0_44] : memref<8x8x512xbf16, #tpu.memory_space<vmem>>, vector<1x8x512xbf16>
    %150 = vector.shape_cast %149 : vector<1x8x512xbf16> to vector<8x512xbf16>
    %cst_45 = arith.constant dense<0.000000e+00> : vector<8x512xf32>
    %151 = tpu.matmul %143, %10, %cst_45 {dimension_numbers = #tpu.dot_dimension_numbers<[1], [0], [0], [1], [0, 0, 1, 1], [], []>} : vector<8x128xbf16>, vector<128x512xbf16>, vector<8x512xf32> -> vector<8x512xf32>
    %152 = arith.extf %150 : vector<8x512xbf16> to vector<8x512xf32>
    %153 = arith.addf %152, %151 : vector<8x512xf32>
    %154 = vector.extract_strided_slice %153 {offsets = [0, 0], sizes = [8, 384], strides = [1, 1]} : vector<8x512xf32> to vector<8x384xf32>
    %155 = arith.negf %154 : vector<8x384xf32>
    %156 = math.exp %155 : vector<8x384xf32>
    %cst_46 = arith.constant 1.000000e+00 : f32
    %157 = vector.broadcast %cst_46 : f32 to vector<8x384xf32>
    %158 = arith.addf %157, %156 : vector<8x384xf32>
    %159 = arith.divf %157, %158 : vector<8x384xf32>
    %160 = vector.extract_strided_slice %159 {offsets = [0, 0], sizes = [8, 128], strides = [1, 1]} : vector<8x384xf32> to vector<8x128xf32>
    %161 = vector.extract_strided_slice %159 {offsets = [0, 128], sizes = [8, 128], strides = [1, 1]} : vector<8x384xf32> to vector<8x128xf32>
    %162 = vector.extract_strided_slice %159 {offsets = [0, 256], sizes = [8, 128], strides = [1, 1]} : vector<8x384xf32> to vector<8x128xf32>
    %163 = vector.extract_strided_slice %153 {offsets = [0, 384], sizes = [8, 128], strides = [1, 1]} : vector<8x512xf32> to vector<8x128xf32>
    %164 = math.tanh %163 : vector<8x128xf32>
    %165 = arith.mulf %161, %140 : vector<8x128xf32>
    %166 = arith.mulf %160, %164 : vector<8x128xf32>
    %167 = arith.addf %165, %166 : vector<8x128xf32>
    %168 = math.tanh %167 : vector<8x128xf32>
    %169 = arith.mulf %162, %168 : vector<8x128xf32>
    %170 = arith.truncf %169 : vector<8x128xf32> to vector<8x128xbf16>
    %171 = arith.index_cast %c5_i32 : i32 to index
    %c0_47 = arith.constant 0 : index
    %c0_48 = arith.constant 0 : index
    %172 = vector.load %arg12[%171, %c0_47, %c0_48] : memref<8x8x128xbf16, #tpu.memory_space<vmem>>, vector<1x8x128xbf16>
    %173 = vector.shape_cast %172 : vector<1x8x128xbf16> to vector<8x128xbf16>
    %174 = vector.shape_cast %170 : vector<8x128xbf16> to vector<1x8x128xbf16>
    tpu.vector_store %arg12[%171, %c0_47, %c0_48], %174 {strides = array<i32>} : memref<8x8x128xbf16, #tpu.memory_space<vmem>>, vector<1x8x128xbf16>,
    %c6_i32 = arith.constant 6 : i32
    %175 = arith.index_cast %c6_i32 : i32 to index
    %c0_49 = arith.constant 0 : index
    %c0_50 = arith.constant 0 : index
    %176 = vector.load %arg11[%175, %c0_49, %c0_50] : memref<8x8x512xbf16, #tpu.memory_space<vmem>>, vector<1x8x512xbf16>
    %177 = vector.shape_cast %176 : vector<1x8x512xbf16> to vector<8x512xbf16>
    %cst_51 = arith.constant dense<0.000000e+00> : vector<8x512xf32>
    %178 = tpu.matmul %170, %10, %cst_51 {dimension_numbers = #tpu.dot_dimension_numbers<[1], [0], [0], [1], [0, 0, 1, 1], [], []>} : vector<8x128xbf16>, vector<128x512xbf16>, vector<8x512xf32> -> vector<8x512xf32>
    %179 = arith.extf %177 : vector<8x512xbf16> to vector<8x512xf32>
    %180 = arith.addf %179, %178 : vector<8x512xf32>
    %181 = vector.extract_strided_slice %180 {offsets = [0, 0], sizes = [8, 384], strides = [1, 1]} : vector<8x512xf32> to vector<8x384xf32>
    %182 = arith.negf %181 : vector<8x384xf32>
    %183 = math.exp %182 : vector<8x384xf32>
    %cst_52 = arith.constant 1.000000e+00 : f32
    %184 = vector.broadcast %cst_52 : f32 to vector<8x384xf32>
    %185 = arith.addf %184, %183 : vector<8x384xf32>
    %186 = arith.divf %184, %185 : vector<8x384xf32>
    %187 = vector.extract_strided_slice %186 {offsets = [0, 0], sizes = [8, 128], strides = [1, 1]} : vector<8x384xf32> to vector<8x128xf32>
    %188 = vector.extract_strided_slice %186 {offsets = [0, 128], sizes = [8, 128], strides = [1, 1]} : vector<8x384xf32> to vector<8x128xf32>
    %189 = vector.extract_strided_slice %186 {offsets = [0, 256], sizes = [8, 128], strides = [1, 1]} : vector<8x384xf32> to vector<8x128xf32>
    %190 = vector.extract_strided_slice %180 {offsets = [0, 384], sizes = [8, 128], strides = [1, 1]} : vector<8x512xf32> to vector<8x128xf32>
    %191 = math.tanh %190 : vector<8x128xf32>
    %192 = arith.mulf %188, %167 : vector<8x128xf32>
    %193 = arith.mulf %187, %191 : vector<8x128xf32>
    %194 = arith.addf %192, %193 : vector<8x128xf32>
    %195 = math.tanh %194 : vector<8x128xf32>
    %196 = arith.mulf %189, %195 : vector<8x128xf32>
    %197 = arith.truncf %196 : vector<8x128xf32> to vector<8x128xbf16>
    %198 = arith.index_cast %c6_i32 : i32 to index
    %c0_53 = arith.constant 0 : index
    %c0_54 = arith.constant 0 : index
    %199 = vector.load %arg12[%198, %c0_53, %c0_54] : memref<8x8x128xbf16, #tpu.memory_space<vmem>>, vector<1x8x128xbf16>
    %200 = vector.shape_cast %199 : vector<1x8x128xbf16> to vector<8x128xbf16>
    %201 = vector.shape_cast %197 : vector<8x128xbf16> to vector<1x8x128xbf16>
    tpu.vector_store %arg12[%198, %c0_53, %c0_54], %201 {strides = array<i32>} : memref<8x8x128xbf16, #tpu.memory_space<vmem>>, vector<1x8x128xbf16>,
    %c7_i32 = arith.constant 7 : i32
    %202 = arith.index_cast %c7_i32 : i32 to index
    %c0_55 = arith.constant 0 : index
    %c0_56 = arith.constant 0 : index
    %203 = vector.load %arg11[%202, %c0_55, %c0_56] : memref<8x8x512xbf16, #tpu.memory_space<vmem>>, vector<1x8x512xbf16>
    %204 = vector.shape_cast %203 : vector<1x8x512xbf16> to vector<8x512xbf16>
    %cst_57 = arith.constant dense<0.000000e+00> : vector<8x512xf32>
    %205 = tpu.matmul %197, %10, %cst_57 {dimension_numbers = #tpu.dot_dimension_numbers<[1], [0], [0], [1], [0, 0, 1, 1], [], []>} : vector<8x128xbf16>, vector<128x512xbf16>, vector<8x512xf32> -> vector<8x512xf32>
    %206 = arith.extf %204 : vector<8x512xbf16> to vector<8x512xf32>
    %207 = arith.addf %206, %205 : vector<8x512xf32>
    %208 = vector.extract_strided_slice %207 {offsets = [0, 0], sizes = [8, 384], strides = [1, 1]} : vector<8x512xf32> to vector<8x384xf32>
    %209 = arith.negf %208 : vector<8x384xf32>
    %210 = math.exp %209 : vector<8x384xf32>
    %cst_58 = arith.constant 1.000000e+00 : f32
    %211 = vector.broadcast %cst_58 : f32 to vector<8x384xf32>
    %212 = arith.addf %211, %210 : vector<8x384xf32>
    %213 = arith.divf %211, %212 : vector<8x384xf32>
    %214 = vector.extract_strided_slice %213 {offsets = [0, 0], sizes = [8, 128], strides = [1, 1]} : vector<8x384xf32> to vector<8x128xf32>
    %215 = vector.extract_strided_slice %213 {offsets = [0, 128], sizes = [8, 128], strides = [1, 1]} : vector<8x384xf32> to vector<8x128xf32>
    %216 = vector.extract_strided_slice %213 {offsets = [0, 256], sizes = [8, 128], strides = [1, 1]} : vector<8x384xf32> to vector<8x128xf32>
    %217 = vector.extract_strided_slice %207 {offsets = [0, 384], sizes = [8, 128], strides = [1, 1]} : vector<8x512xf32> to vector<8x128xf32>
    %218 = math.tanh %217 : vector<8x128xf32>
    %219 = arith.mulf %215, %194 : vector<8x128xf32>
    %220 = arith.mulf %214, %218 : vector<8x128xf32>
    %221 = arith.addf %219, %220 : vector<8x128xf32>
    %222 = math.tanh %221 : vector<8x128xf32>
    %223 = arith.mulf %216, %222 : vector<8x128xf32>
    %224 = arith.truncf %223 : vector<8x128xf32> to vector<8x128xbf16>
    %225 = arith.index_cast %c7_i32 : i32 to index
    %c0_59 = arith.constant 0 : index
    %c0_60 = arith.constant 0 : index
    %226 = vector.load %arg12[%225, %c0_59, %c0_60] : memref<8x8x128xbf16, #tpu.memory_space<vmem>>, vector<1x8x128xbf16>
    %227 = vector.shape_cast %226 : vector<1x8x128xbf16> to vector<8x128xbf16>
    %228 = vector.shape_cast %224 : vector<8x128xbf16> to vector<1x8x128xbf16>
    tpu.vector_store %arg12[%225, %c0_59, %c0_60], %228 {strides = array<i32>} : memref<8x8x128xbf16, #tpu.memory_space<vmem>>, vector<1x8x128xbf16>,
    %c8_i32 = arith.constant 8 : i32
    %229 = arith.extf %224 : vector<8x128xbf16> to vector<8x128xf32>
    %c0_61 = arith.constant 0 : index
    %c0_62 = arith.constant 0 : index
    %c0_63 = arith.constant 0 : index
    %230 = vector.load %arg12[%c0_61, %c0_62, %c0_63] : memref<8x8x128xbf16, #tpu.memory_space<vmem>>, vector<8x8x128xbf16>
    %231 = vector.shape_cast %230 : vector<8x8x128xbf16> to vector<64x128xbf16>
    %c0_64 = arith.constant 0 : index
    %c0_65 = arith.constant 0 : index
    %232 = vector.load %arg5[%c0_64, %c0_65] : memref<128x512xbf16, #tpu.memory_space<vmem>>, vector<128x512xbf16>
    %cst_66 = arith.constant dense<0.000000e+00> : vector<64x512xf32>
    %233 = tpu.matmul %231, %232, %cst_66 {dimension_numbers = #tpu.dot_dimension_numbers<[1], [0], [0], [1], [0, 0, 1, 1], [], []>} : vector<64x128xbf16>, vector<128x512xbf16>, vector<64x512xf32> -> vector<64x512xf32>
    %c0_67 = arith.constant 0 : index
    %c0_68 = arith.constant 0 : index
    %234 = vector.load %arg7[%c0_67, %c0_68] : memref<1x512xf32, #tpu.memory_space<vmem>>, vector<1x512xf32>
    %235 = vector.broadcast %234 : vector<1x512xf32> to vector<64x512xf32>
    %236 = arith.addf %233, %235 : vector<64x512xf32>
    %237 = vector.shape_cast %236 : vector<64x512xf32> to vector<8x8x512xf32>
    %238 = arith.truncf %237 : vector<8x8x512xf32> to vector<8x8x512xbf16>
    %c0_69 = arith.constant 0 : index
    %c0_70 = arith.constant 0 : index
    %c0_71 = arith.constant 0 : index
    %239 = vector.load %arg11[%c0_69, %c0_70, %c0_71] : memref<8x8x512xbf16, #tpu.memory_space<vmem>>, vector<8x8x512xbf16>
    tpu.vector_store %arg11[%c0_69, %c0_70, %c0_71], %238 {strides = array<i32>} : memref<8x8x512xbf16, #tpu.memory_space<vmem>>, vector<8x8x512xbf16>,
    %c0_72 = arith.constant 0 : index
    %c0_73 = arith.constant 0 : index
    %240 = vector.load %arg6[%c0_72, %c0_73] : memref<128x512xbf16, #tpu.memory_space<vmem>>, vector<128x512xbf16>
    %cst_74 = arith.constant 0.000000e+00 : bf16
    %241 = vector.broadcast %cst_74 : bf16 to vector<8x128xbf16>
    %cst_75 = arith.constant 0.000000e+00 : f32
    %242 = vector.broadcast %cst_75 : f32 to vector<8x128xf32>
    %c0_i32_76 = arith.constant 0 : i32
    %243 = arith.index_cast %c0_i32_76 : i32 to index
    %c0_77 = arith.constant 0 : index
    %c0_78 = arith.constant 0 : index
    %244 = vector.load %arg11[%243, %c0_77, %c0_78] : memref<8x8x512xbf16, #tpu.memory_space<vmem>>, vector<1x8x512xbf16>
    %245 = vector.shape_cast %244 : vector<1x8x512xbf16> to vector<8x512xbf16>
    %cst_79 = arith.constant dense<0.000000e+00> : vector<8x512xf32>
    %246 = tpu.matmul %241, %240, %cst_79 {dimension_numbers = #tpu.dot_dimension_numbers<[1], [0], [0], [1], [0, 0, 1, 1], [], []>} : vector<8x128xbf16>, vector<128x512xbf16>, vector<8x512xf32> -> vector<8x512xf32>
    %247 = arith.extf %245 : vector<8x512xbf16> to vector<8x512xf32>
    %248 = arith.addf %247, %246 : vector<8x512xf32>
    %249 = vector.extract_strided_slice %248 {offsets = [0, 0], sizes = [8, 384], strides = [1, 1]} : vector<8x512xf32> to vector<8x384xf32>
    %250 = arith.negf %249 : vector<8x384xf32>
    %251 = math.exp %250 : vector<8x384xf32>
    %cst_80 = arith.constant 1.000000e+00 : f32
    %252 = vector.broadcast %cst_80 : f32 to vector<8x384xf32>
    %253 = arith.addf %252, %251 : vector<8x384xf32>
    %254 = arith.divf %252, %253 : vector<8x384xf32>
    %255 = vector.extract_strided_slice %254 {offsets = [0, 0], sizes = [8, 128], strides = [1, 1]} : vector<8x384xf32> to vector<8x128xf32>
    %256 = vector.extract_strided_slice %254 {offsets = [0, 128], sizes = [8, 128], strides = [1, 1]} : vector<8x384xf32> to vector<8x128xf32>
    %257 = vector.extract_strided_slice %254 {offsets = [0, 256], sizes = [8, 128], strides = [1, 1]} : vector<8x384xf32> to vector<8x128xf32>
    %258 = vector.extract_strided_slice %248 {offsets = [0, 384], sizes = [8, 128], strides = [1, 1]} : vector<8x512xf32> to vector<8x128xf32>
    %259 = math.tanh %258 : vector<8x128xf32>
    %260 = arith.mulf %256, %242 : vector<8x128xf32>
    %261 = arith.mulf %255, %259 : vector<8x128xf32>
    %262 = arith.addf %260, %261 : vector<8x128xf32>
    %263 = math.tanh %262 : vector<8x128xf32>
    %264 = arith.mulf %257, %263 : vector<8x128xf32>
    %265 = arith.truncf %264 : vector<8x128xf32> to vector<8x128xbf16>
    %c1_i32_81 = arith.constant 1 : i32
    %266 = arith.index_cast %c1_i32_81 : i32 to index
    %c0_82 = arith.constant 0 : index
    %c0_83 = arith.constant 0 : index
    %267 = vector.load %arg11[%266, %c0_82, %c0_83] : memref<8x8x512xbf16, #tpu.memory_space<vmem>>, vector<1x8x512xbf16>
    %268 = vector.shape_cast %267 : vector<1x8x512xbf16> to vector<8x512xbf16>
    %cst_84 = arith.constant dense<0.000000e+00> : vector<8x512xf32>
    %269 = tpu.matmul %265, %240, %cst_84 {dimension_numbers = #tpu.dot_dimension_numbers<[1], [0], [0], [1], [0, 0, 1, 1], [], []>} : vector<8x128xbf16>, vector<128x512xbf16>, vector<8x512xf32> -> vector<8x512xf32>
    %270 = arith.extf %268 : vector<8x512xbf16> to vector<8x512xf32>
    %271 = arith.addf %270, %269 : vector<8x512xf32>
    %272 = vector.extract_strided_slice %271 {offsets = [0, 0], sizes = [8, 384], strides = [1, 1]} : vector<8x512xf32> to vector<8x384xf32>
    %273 = arith.negf %272 : vector<8x384xf32>
    %274 = math.exp %273 : vector<8x384xf32>
    %cst_85 = arith.constant 1.000000e+00 : f32
    %275 = vector.broadcast %cst_85 : f32 to vector<8x384xf32>
    %276 = arith.addf %275, %274 : vector<8x384xf32>
    %277 = arith.divf %275, %276 : vector<8x384xf32>
    %278 = vector.extract_strided_slice %277 {offsets = [0, 0], sizes = [8, 128], strides = [1, 1]} : vector<8x384xf32> to vector<8x128xf32>
    %279 = vector.extract_strided_slice %277 {offsets = [0, 128], sizes = [8, 128], strides = [1, 1]} : vector<8x384xf32> to vector<8x128xf32>
    %280 = vector.extract_strided_slice %277 {offsets = [0, 256], sizes = [8, 128], strides = [1, 1]} : vector<8x384xf32> to vector<8x128xf32>
    %281 = vector.extract_strided_slice %271 {offsets = [0, 384], sizes = [8, 128], strides = [1, 1]} : vector<8x512xf32> to vector<8x128xf32>
    %282 = math.tanh %281 : vector<8x128xf32>
    %283 = arith.mulf %279, %262 : vector<8x128xf32>
    %284 = arith.mulf %278, %282 : vector<8x128xf32>
    %285 = arith.addf %283, %284 : vector<8x128xf32>
    %286 = math.tanh %285 : vector<8x128xf32>
    %287 = arith.mulf %280, %286 : vector<8x128xf32>
    %288 = arith.truncf %287 : vector<8x128xf32> to vector<8x128xbf16>
    %c2_i32_86 = arith.constant 2 : i32
    %289 = arith.index_cast %c2_i32_86 : i32 to index
    %c0_87 = arith.constant 0 : index
    %c0_88 = arith.constant 0 : index
    %290 = vector.load %arg11[%289, %c0_87, %c0_88] : memref<8x8x512xbf16, #tpu.memory_space<vmem>>, vector<1x8x512xbf16>
    %291 = vector.shape_cast %290 : vector<1x8x512xbf16> to vector<8x512xbf16>
    %cst_89 = arith.constant dense<0.000000e+00> : vector<8x512xf32>
    %292 = tpu.matmul %288, %240, %cst_89 {dimension_numbers = #tpu.dot_dimension_numbers<[1], [0], [0], [1], [0, 0, 1, 1], [], []>} : vector<8x128xbf16>, vector<128x512xbf16>, vector<8x512xf32> -> vector<8x512xf32>
    %293 = arith.extf %291 : vector<8x512xbf16> to vector<8x512xf32>
    %294 = arith.addf %293, %292 : vector<8x512xf32>
    %295 = vector.extract_strided_slice %294 {offsets = [0, 0], sizes = [8, 384], strides = [1, 1]} : vector<8x512xf32> to vector<8x384xf32>
    %296 = arith.negf %295 : vector<8x384xf32>
    %297 = math.exp %296 : vector<8x384xf32>
    %cst_90 = arith.constant 1.000000e+00 : f32
    %298 = vector.broadcast %cst_90 : f32 to vector<8x384xf32>
    %299 = arith.addf %298, %297 : vector<8x384xf32>
    %300 = arith.divf %298, %299 : vector<8x384xf32>
    %301 = vector.extract_strided_slice %300 {offsets = [0, 0], sizes = [8, 128], strides = [1, 1]} : vector<8x384xf32> to vector<8x128xf32>
    %302 = vector.extract_strided_slice %300 {offsets = [0, 128], sizes = [8, 128], strides = [1, 1]} : vector<8x384xf32> to vector<8x128xf32>
    %303 = vector.extract_strided_slice %300 {offsets = [0, 256], sizes = [8, 128], strides = [1, 1]} : vector<8x384xf32> to vector<8x128xf32>
    %304 = vector.extract_strided_slice %294 {offsets = [0, 384], sizes = [8, 128], strides = [1, 1]} : vector<8x512xf32> to vector<8x128xf32>
    %305 = math.tanh %304 : vector<8x128xf32>
    %306 = arith.mulf %302, %285 : vector<8x128xf32>
    %307 = arith.mulf %301, %305 : vector<8x128xf32>
    %308 = arith.addf %306, %307 : vector<8x128xf32>
    %309 = math.tanh %308 : vector<8x128xf32>
    %310 = arith.mulf %303, %309 : vector<8x128xf32>
    %311 = arith.truncf %310 : vector<8x128xf32> to vector<8x128xbf16>
    %c3_i32_91 = arith.constant 3 : i32
    %312 = arith.index_cast %c3_i32_91 : i32 to index
    %c0_92 = arith.constant 0 : index
    %c0_93 = arith.constant 0 : index
    %313 = vector.load %arg11[%312, %c0_92, %c0_93] : memref<8x8x512xbf16, #tpu.memory_space<vmem>>, vector<1x8x512xbf16>
    %314 = vector.shape_cast %313 : vector<1x8x512xbf16> to vector<8x512xbf16>
    %cst_94 = arith.constant dense<0.000000e+00> : vector<8x512xf32>
    %315 = tpu.matmul %311, %240, %cst_94 {dimension_numbers = #tpu.dot_dimension_numbers<[1], [0], [0], [1], [0, 0, 1, 1], [], []>} : vector<8x128xbf16>, vector<128x512xbf16>, vector<8x512xf32> -> vector<8x512xf32>
    %316 = arith.extf %314 : vector<8x512xbf16> to vector<8x512xf32>
    %317 = arith.addf %316, %315 : vector<8x512xf32>
    %318 = vector.extract_strided_slice %317 {offsets = [0, 0], sizes = [8, 384], strides = [1, 1]} : vector<8x512xf32> to vector<8x384xf32>
    %319 = arith.negf %318 : vector<8x384xf32>
    %320 = math.exp %319 : vector<8x384xf32>
    %cst_95 = arith.constant 1.000000e+00 : f32
    %321 = vector.broadcast %cst_95 : f32 to vector<8x384xf32>
    %322 = arith.addf %321, %320 : vector<8x384xf32>
    %323 = arith.divf %321, %322 : vector<8x384xf32>
    %324 = vector.extract_strided_slice %323 {offsets = [0, 0], sizes = [8, 128], strides = [1, 1]} : vector<8x384xf32> to vector<8x128xf32>
    %325 = vector.extract_strided_slice %323 {offsets = [0, 128], sizes = [8, 128], strides = [1, 1]} : vector<8x384xf32> to vector<8x128xf32>
    %326 = vector.extract_strided_slice %323 {offsets = [0, 256], sizes = [8, 128], strides = [1, 1]} : vector<8x384xf32> to vector<8x128xf32>
    %327 = vector.extract_strided_slice %317 {offsets = [0, 384], sizes = [8, 128], strides = [1, 1]} : vector<8x512xf32> to vector<8x128xf32>
    %328 = math.tanh %327 : vector<8x128xf32>
    %329 = arith.mulf %325, %308 : vector<8x128xf32>
    %330 = arith.mulf %324, %328 : vector<8x128xf32>
    %331 = arith.addf %329, %330 : vector<8x128xf32>
    %332 = math.tanh %331 : vector<8x128xf32>
    %333 = arith.mulf %326, %332 : vector<8x128xf32>
    %334 = arith.truncf %333 : vector<8x128xf32> to vector<8x128xbf16>
    %c4_i32_96 = arith.constant 4 : i32
    %335 = arith.index_cast %c4_i32_96 : i32 to index
    %c0_97 = arith.constant 0 : index
    %c0_98 = arith.constant 0 : index
    %336 = vector.load %arg11[%335, %c0_97, %c0_98] : memref<8x8x512xbf16, #tpu.memory_space<vmem>>, vector<1x8x512xbf16>
    %337 = vector.shape_cast %336 : vector<1x8x512xbf16> to vector<8x512xbf16>
    %cst_99 = arith.constant dense<0.000000e+00> : vector<8x512xf32>
    %338 = tpu.matmul %334, %240, %cst_99 {dimension_numbers = #tpu.dot_dimension_numbers<[1], [0], [0], [1], [0, 0, 1, 1], [], []>} : vector<8x128xbf16>, vector<128x512xbf16>, vector<8x512xf32> -> vector<8x512xf32>
    %339 = arith.extf %337 : vector<8x512xbf16> to vector<8x512xf32>
    %340 = arith.addf %339, %338 : vector<8x512xf32>
    %341 = vector.extract_strided_slice %340 {offsets = [0, 0], sizes = [8, 384], strides = [1, 1]} : vector<8x512xf32> to vector<8x384xf32>
    %342 = arith.negf %341 : vector<8x384xf32>
    %343 = math.exp %342 : vector<8x384xf32>
    %cst_100 = arith.constant 1.000000e+00 : f32
    %344 = vector.broadcast %cst_100 : f32 to vector<8x384xf32>
    %345 = arith.addf %344, %343 : vector<8x384xf32>
    %346 = arith.divf %344, %345 : vector<8x384xf32>
    %347 = vector.extract_strided_slice %346 {offsets = [0, 0], sizes = [8, 128], strides = [1, 1]} : vector<8x384xf32> to vector<8x128xf32>
    %348 = vector.extract_strided_slice %346 {offsets = [0, 128], sizes = [8, 128], strides = [1, 1]} : vector<8x384xf32> to vector<8x128xf32>
    %349 = vector.extract_strided_slice %346 {offsets = [0, 256], sizes = [8, 128], strides = [1, 1]} : vector<8x384xf32> to vector<8x128xf32>
    %350 = vector.extract_strided_slice %340 {offsets = [0, 384], sizes = [8, 128], strides = [1, 1]} : vector<8x512xf32> to vector<8x128xf32>
    %351 = math.tanh %350 : vector<8x128xf32>
    %352 = arith.mulf %348, %331 : vector<8x128xf32>
    %353 = arith.mulf %347, %351 : vector<8x128xf32>
    %354 = arith.addf %352, %353 : vector<8x128xf32>
    %355 = math.tanh %354 : vector<8x128xf32>
    %356 = arith.mulf %349, %355 : vector<8x128xf32>
    %357 = arith.truncf %356 : vector<8x128xf32> to vector<8x128xbf16>
    %c5_i32_101 = arith.constant 5 : i32
    %358 = arith.index_cast %c5_i32_101 : i32 to index
    %c0_102 = arith.constant 0 : index
    %c0_103 = arith.constant 0 : index
    %359 = vector.load %arg11[%358, %c0_102, %c0_103] : memref<8x8x512xbf16, #tpu.memory_space<vmem>>, vector<1x8x512xbf16>
    %360 = vector.shape_cast %359 : vector<1x8x512xbf16> to vector<8x512xbf16>
    %cst_104 = arith.constant dense<0.000000e+00> : vector<8x512xf32>
    %361 = tpu.matmul %357, %240, %cst_104 {dimension_numbers = #tpu.dot_dimension_numbers<[1], [0], [0], [1], [0, 0, 1, 1], [], []>} : vector<8x128xbf16>, vector<128x512xbf16>, vector<8x512xf32> -> vector<8x512xf32>
    %362 = arith.extf %360 : vector<8x512xbf16> to vector<8x512xf32>
    %363 = arith.addf %362, %361 : vector<8x512xf32>
    %364 = vector.extract_strided_slice %363 {offsets = [0, 0], sizes = [8, 384], strides = [1, 1]} : vector<8x512xf32> to vector<8x384xf32>
    %365 = arith.negf %364 : vector<8x384xf32>
    %366 = math.exp %365 : vector<8x384xf32>
    %cst_105 = arith.constant 1.000000e+00 : f32
    %367 = vector.broadcast %cst_105 : f32 to vector<8x384xf32>
    %368 = arith.addf %367, %366 : vector<8x384xf32>
    %369 = arith.divf %367, %368 : vector<8x384xf32>
    %370 = vector.extract_strided_slice %369 {offsets = [0, 0], sizes = [8, 128], strides = [1, 1]} : vector<8x384xf32> to vector<8x128xf32>
    %371 = vector.extract_strided_slice %369 {offsets = [0, 128], sizes = [8, 128], strides = [1, 1]} : vector<8x384xf32> to vector<8x128xf32>
    %372 = vector.extract_strided_slice %369 {offsets = [0, 256], sizes = [8, 128], strides = [1, 1]} : vector<8x384xf32> to vector<8x128xf32>
    %373 = vector.extract_strided_slice %363 {offsets = [0, 384], sizes = [8, 128], strides = [1, 1]} : vector<8x512xf32> to vector<8x128xf32>
    %374 = math.tanh %373 : vector<8x128xf32>
    %375 = arith.mulf %371, %354 : vector<8x128xf32>
    %376 = arith.mulf %370, %374 : vector<8x128xf32>
    %377 = arith.addf %375, %376 : vector<8x128xf32>
    %378 = math.tanh %377 : vector<8x128xf32>
    %379 = arith.mulf %372, %378 : vector<8x128xf32>
    %380 = arith.truncf %379 : vector<8x128xf32> to vector<8x128xbf16>
    %c6_i32_106 = arith.constant 6 : i32
    %381 = arith.index_cast %c6_i32_106 : i32 to index
    %c0_107 = arith.constant 0 : index
    %c0_108 = arith.constant 0 : index
    %382 = vector.load %arg11[%381, %c0_107, %c0_108] : memref<8x8x512xbf16, #tpu.memory_space<vmem>>, vector<1x8x512xbf16>
    %383 = vector.shape_cast %382 : vector<1x8x512xbf16> to vector<8x512xbf16>
    %cst_109 = arith.constant dense<0.000000e+00> : vector<8x512xf32>
    %384 = tpu.matmul %380, %240, %cst_109 {dimension_numbers = #tpu.dot_dimension_numbers<[1], [0], [0], [1], [0, 0, 1, 1], [], []>} : vector<8x128xbf16>, vector<128x512xbf16>, vector<8x512xf32> -> vector<8x512xf32>
    %385 = arith.extf %383 : vector<8x512xbf16> to vector<8x512xf32>
    %386 = arith.addf %385, %384 : vector<8x512xf32>
    %387 = vector.extract_strided_slice %386 {offsets = [0, 0], sizes = [8, 384], strides = [1, 1]} : vector<8x512xf32> to vector<8x384xf32>
    %388 = arith.negf %387 : vector<8x384xf32>
    %389 = math.exp %388 : vector<8x384xf32>
    %cst_110 = arith.constant 1.000000e+00 : f32
    %390 = vector.broadcast %cst_110 : f32 to vector<8x384xf32>
    %391 = arith.addf %390, %389 : vector<8x384xf32>
    %392 = arith.divf %390, %391 : vector<8x384xf32>
    %393 = vector.extract_strided_slice %392 {offsets = [0, 0], sizes = [8, 128], strides = [1, 1]} : vector<8x384xf32> to vector<8x128xf32>
    %394 = vector.extract_strided_slice %392 {offsets = [0, 128], sizes = [8, 128], strides = [1, 1]} : vector<8x384xf32> to vector<8x128xf32>
    %395 = vector.extract_strided_slice %392 {offsets = [0, 256], sizes = [8, 128], strides = [1, 1]} : vector<8x384xf32> to vector<8x128xf32>
    %396 = vector.extract_strided_slice %386 {offsets = [0, 384], sizes = [8, 128], strides = [1, 1]} : vector<8x512xf32> to vector<8x128xf32>
    %397 = math.tanh %396 : vector<8x128xf32>
    %398 = arith.mulf %394, %377 : vector<8x128xf32>
    %399 = arith.mulf %393, %397 : vector<8x128xf32>
    %400 = arith.addf %398, %399 : vector<8x128xf32>
    %401 = math.tanh %400 : vector<8x128xf32>
    %402 = arith.mulf %395, %401 : vector<8x128xf32>
    %403 = arith.truncf %402 : vector<8x128xf32> to vector<8x128xbf16>
    %c7_i32_111 = arith.constant 7 : i32
    %404 = arith.index_cast %c7_i32_111 : i32 to index
    %c0_112 = arith.constant 0 : index
    %c0_113 = arith.constant 0 : index
    %405 = vector.load %arg11[%404, %c0_112, %c0_113] : memref<8x8x512xbf16, #tpu.memory_space<vmem>>, vector<1x8x512xbf16>
    %406 = vector.shape_cast %405 : vector<1x8x512xbf16> to vector<8x512xbf16>
    %cst_114 = arith.constant dense<0.000000e+00> : vector<8x512xf32>
    %407 = tpu.matmul %403, %240, %cst_114 {dimension_numbers = #tpu.dot_dimension_numbers<[1], [0], [0], [1], [0, 0, 1, 1], [], []>} : vector<8x128xbf16>, vector<128x512xbf16>, vector<8x512xf32> -> vector<8x512xf32>
    %408 = arith.extf %406 : vector<8x512xbf16> to vector<8x512xf32>
    %409 = arith.addf %408, %407 : vector<8x512xf32>
    %410 = vector.extract_strided_slice %409 {offsets = [0, 0], sizes = [8, 384], strides = [1, 1]} : vector<8x512xf32> to vector<8x384xf32>
    %411 = arith.negf %410 : vector<8x384xf32>
    %412 = math.exp %411 : vector<8x384xf32>
    %cst_115 = arith.constant 1.000000e+00 : f32
    %413 = vector.broadcast %cst_115 : f32 to vector<8x384xf32>
    %414 = arith.addf %413, %412 : vector<8x384xf32>
    %415 = arith.divf %413, %414 : vector<8x384xf32>
    %416 = vector.extract_strided_slice %415 {offsets = [0, 0], sizes = [8, 128], strides = [1, 1]} : vector<8x384xf32> to vector<8x128xf32>
    %417 = vector.extract_strided_slice %415 {offsets = [0, 128], sizes = [8, 128], strides = [1, 1]} : vector<8x384xf32> to vector<8x128xf32>
    %418 = vector.extract_strided_slice %415 {offsets = [0, 256], sizes = [8, 128], strides = [1, 1]} : vector<8x384xf32> to vector<8x128xf32>
    %419 = vector.extract_strided_slice %409 {offsets = [0, 384], sizes = [8, 128], strides = [1, 1]} : vector<8x512xf32> to vector<8x128xf32>
    %420 = math.tanh %419 : vector<8x128xf32>
    %421 = arith.mulf %417, %400 : vector<8x128xf32>
    %422 = arith.mulf %416, %420 : vector<8x128xf32>
    %423 = arith.addf %421, %422 : vector<8x128xf32>
    %424 = math.tanh %423 : vector<8x128xf32>
    %425 = arith.mulf %418, %424 : vector<8x128xf32>
    %426 = arith.truncf %425 : vector<8x128xf32> to vector<8x128xbf16>
    %c8_i32_116 = arith.constant 8 : i32
    %427 = arith.extf %426 : vector<8x128xbf16> to vector<8x128xf32>
    %428 = tpu.concatenate %229, %221, %427, %423 in 1 : vector<8x128xf32>, vector<8x128xf32>, vector<8x128xf32>, vector<8x128xf32> -> vector<8x512xf32>
    %429 = math.tanh %428 : vector<8x512xf32>
    %430 = arith.truncf %429 : vector<8x512xf32> to vector<8x512xbf16>
    %c0_117 = arith.constant 0 : index
    %c0_118 = arith.constant 0 : index
    %431 = vector.load %arg8[%c0_117, %c0_118] : memref<512x128xbf16, #tpu.memory_space<vmem>>, vector<512x128xbf16>
    %cst_119 = arith.constant dense<0.000000e+00> : vector<8x128xf32>
    %432 = tpu.matmul %430, %431, %cst_119 {dimension_numbers = #tpu.dot_dimension_numbers<[1], [0], [0], [1], [0, 0, 1, 1], [], []>} : vector<8x512xbf16>, vector<512x128xbf16>, vector<8x128xf32> -> vector<8x128xf32>
    %c0_120 = arith.constant 0 : index
    %c0_121 = arith.constant 0 : index
    %433 = vector.load %arg9[%c0_120, %c0_121] : memref<1x128xf32, #tpu.memory_space<vmem>>, vector<1x128xf32>
    %434 = vector.broadcast %433 : vector<1x128xf32> to vector<8x128xf32>
    %435 = arith.addf %432, %434 : vector<8x128xf32>
    %c0_122 = arith.constant 0 : index
    %c0_123 = arith.constant 0 : index
    %436 = vector.load %arg10[%c0_122, %c0_123] : memref<8x128xf32, #tpu.memory_space<vmem>>, vector<8x128xf32>
    tpu.vector_store %arg10[%c0_122, %c0_123], %435 {strides = array<i32>} : memref<8x128xf32, #tpu.memory_space<vmem>>, vector<8x128xf32>,
    return
  }
  func.func @transform_0(%arg0: i32) -> (i32, i32, i32) {
    %c0_i32 = arith.constant 0 : i32
    %c0_i32_0 = arith.constant 0 : i32
    %c0_i32_1 = arith.constant 0 : i32
    return %c0_i32, %arg0, %c0_i32_0 : i32, i32, i32
  }
  func.func @transform_1(%arg0: i32) -> (i32, i32) {
    %c0_i32 = arith.constant 0 : i32
    %c0_i32_0 = arith.constant 0 : i32
    %c0_i32_1 = arith.constant 0 : i32
    return %c0_i32, %c0_i32_0 : i32, i32
  }
  func.func @transform_2(%arg0: i32) -> (i32, i32) {
    %c0_i32 = arith.constant 0 : i32
    %c0_i32_0 = arith.constant 0 : i32
    %c0_i32_1 = arith.constant 0 : i32
    return %c0_i32, %c0_i32_0 : i32, i32
  }
  func.func @transform_3(%arg0: i32) -> (i32, i32) {
    %c0_i32 = arith.constant 0 : i32
    %c0_i32_0 = arith.constant 0 : i32
    %c0_i32_1 = arith.constant 0 : i32
    return %c0_i32, %c0_i32_0 : i32, i32
  }
  func.func @transform_4(%arg0: i32) -> (i32, i32) {
    %c0_i32 = arith.constant 0 : i32
    %c0_i32_0 = arith.constant 0 : i32
    %c0_i32_1 = arith.constant 0 : i32
    return %c0_i32, %c0_i32_0 : i32, i32
  }
  func.func @transform_5(%arg0: i32) -> (i32, i32) {
    %c0_i32 = arith.constant 0 : i32
    %c0_i32_0 = arith.constant 0 : i32
    %c0_i32_1 = arith.constant 0 : i32
    return %c0_i32, %c0_i32_0 : i32, i32
  }
  func.func @transform_6(%arg0: i32) -> (i32, i32) {
    %c0_i32 = arith.constant 0 : i32
    %c0_i32_0 = arith.constant 0 : i32
    %c0_i32_1 = arith.constant 0 : i32
    return %c0_i32, %c0_i32_0 : i32, i32
  }
  func.func @transform_7(%arg0: i32) -> (i32, i32) {
    %c0_i32 = arith.constant 0 : i32
    %c0_i32_0 = arith.constant 0 : i32
    %c0_i32_1 = arith.constant 0 : i32
    return %c0_i32, %c0_i32_0 : i32, i32
  }
  func.func @transform_8(%arg0: i32) -> (i32, i32) {
    %c0_i32 = arith.constant 0 : i32
    %c0_i32_0 = arith.constant 0 : i32
    %c0_i32_1 = arith.constant 0 : i32
    return %c0_i32, %c0_i32_0 : i32, i32
  }
  func.func @transform_9(%arg0: i32) -> (i32, i32) {
    %c0_i32 = arith.constant 0 : i32
    %c0_i32_0 = arith.constant 0 : i32
    return %arg0, %c0_i32 : i32, i32
  }
}

</mosaic_0001>

<llo_original>
// kernel: tpu_custom_call.1
$region0: #{tpu_custom_call.1}
  #allocation0 [shape = 'u32[]', space=smem, size = 0x4, offset = 0x4, fixed_abs, tag = 'smem constant byte address 0x4 - core index']
  #allocation1 [shape = 'u32[144,128]{1,0:T(1,128)}', space=vmem, size = 0x12000, scoped, tag = 'internal scratch']
  #allocation2 [shape = 'bf16[8,8,512]{2,1,0:T(8,128)(2,1)}', space=vmem, size = 0x10000, scoped, tag = 'scratch operand']
  #allocation3 [shape = 'bf16[8,8,128]{2,1,0:T(8,128)(2,1)}', space=vmem, size = 0x4000, scoped, tag = 'scratch operand']
  %s0 = inlined_call_operand.hbm [shape: bf16[8,8,128], index: 0, kind: input, shape index: {}]
  %s1 = inlined_call_operand.hbm [shape: bf16[128,512], index: 1, kind: input, shape index: {}]
  %s2 = inlined_call_operand.hbm [shape: bf16[128,512], index: 2, kind: input, shape index: {}]
  %s3 = inlined_call_operand.vmem [shape: f32[1,512], index: 3, kind: input, shape index: {}]
  %s4 = inlined_call_operand.hbm [shape: bf16[128,512], index: 4, kind: input, shape index: {}]
  %s5 = inlined_call_operand.hbm [shape: bf16[128,512], index: 5, kind: input, shape index: {}]
  %s6 = inlined_call_operand.vmem [shape: f32[1,512], index: 6, kind: input, shape index: {}]
  %s7 = inlined_call_operand.hbm [shape: bf16[512,128], index: 7, kind: input, shape index: {}]
  %s8 = inlined_call_operand.vmem [shape: f32[1,128], index: 8, kind: input, shape index: {}]
  %s9 = inlined_call_operand.hbm [shape: f32[8,128], index: 9, kind: output, shape index: {}]
  %s10 = sld [smem:[#allocation0]]
  $region70: #{tpu_custom_call.1} parent=0
    _
  %s12 = ssub.s32 1, %s10
  %s13 = scalar_select 0, %s12, %s10
  $region1: #{tpu_custom_call.1} parent=0
    #allocation4 [shape = 'u8[16384]{0}', space=vmem, size = 0x4000, scoped, tag = 'input window, operand 0, single buffered']
    #allocation5 [shape = 's32[1]{0}', space=sflag, size = 0x4, scoped, tag = 'scoped memory for tpu_custom_call.1']
    #allocation6 [shape = 's32[1]{0}', space=sflag, size = 0x4, scoped, tag = 'scoped memory for tpu_custom_call.1']
    #allocation7 [shape = 'u8[131072]{0}', space=vmem, size = 0x20000, scoped, tag = 'input window, operand 1, single buffered']
    #allocation8 [shape = 's32[1]{0}', space=sflag, size = 0x4, scoped, tag = 'scoped memory for tpu_custom_call.1']
    #allocation9 [shape = 'u8[131072]{0}', space=vmem, size = 0x20000, scoped, tag = 'input window, operand 2, single buffered']
    #allocation10 [shape = 'u8[131072]{0}', space=vmem, size = 0x20000, scoped, tag = 'input window, operand 4, single buffered']
    #allocation11 [shape = 's32[1]{0}', space=sflag, size = 0x4, scoped, tag = 'scoped memory for tpu_custom_call.1']
    #allocation12 [shape = 'u8[131072]{0}', space=vmem, size = 0x20000, scoped, tag = 'input window, operand 5, single buffered']
    #allocation13 [shape = 'u8[131072]{0}', space=vmem, size = 0x20000, scoped, tag = 'input window, operand 7, single buffered']
    #allocation14 [shape = 's32[1]{0}', space=sflag, size = 0x4, scoped, tag = 'scoped memory for tpu_custom_call.1']
    #allocation15 [shape = 'u8[4096]{0}', space=vmem, size = 0x1000, scoped, tag = 'output window, operand 0, single buffered']
    %14 = vsyncpa [#allocation5], 0
    %15 = vsyncpa [#allocation8], 0
    %16 = vsyncpa [#allocation11], 0
    %17 = vsyncpa [#allocation14], 0
    %18 = vsyncpa [#allocation6], 0
    // Predicated region
    $region2: #{tpu_custom_call.1} parent=1 // pred_check
      _
    $region3: #{tpu_custom_call.1} parent=1 // pred_check_branch
      %20 = sbr.rel (0) target = $region5
    $region4: #{tpu_custom_call.1} parent=1 // pred_region
      %s22 = ssub.s32 512, 512
      %23 = vsyncadd [#allocation5], %s22
      %s24 = sshll.u32 [#allocation4], 4
      %s25 = int_to_ptr.vmem [resolvable:$true] %s24
      %30 = dma.hbm_to_vmem [thread:$0]  %s0, 512, %s25, [#allocation5], 64, 64, 4
    $region5: #{tpu_custom_call.1} parent=1 // pred_fallthru
      _
    // Predicated region
    $region6: #{tpu_custom_call.1} parent=1 // pred_check
      _
    $region7: #{tpu_custom_call.1} parent=1 // pred_check_branch
      %32 = sbr.rel (0) target = $region9
    $region8: #{tpu_custom_call.1} parent=1 // pred_region
      %s34 = ssub.s32 4096, 4096
      %35 = vsyncadd [#allocation8], %s34
      %s36 = sshll.u32 [#allocation7], 4
      %s37 = int_to_ptr.vmem [resolvable:$true] %s36
      %42 = dma.hbm_to_vmem [thread:$0]  %s1, 4096, %s37, [#allocation8], 256, 256, 16
    $region9: #{tpu_custom_call.1} parent=1 // pred_fallthru
      _
    // Predicated region
    $region10: #{tpu_custom_call.1} parent=1 // pred_check
      _
    $region11: #{tpu_custom_call.1} parent=1 // pred_check_branch
      %44 = sbr.rel (0) target = $region13
    $region12: #{tpu_custom_call.1} parent=1 // pred_region
      %s46 = ssub.s32 4096, 4096
      %47 = vsyncadd [#allocation8], %s46
      %s48 = sshll.u32 [#allocation9], 4
      %s49 = int_to_ptr.vmem [resolvable:$true] %s48
      %54 = dma.hbm_to_vmem [thread:$0]  %s2, 4096, %s49, [#allocation8], 256, 256, 16
    $region13: #{tpu_custom_call.1} parent=1 // pred_fallthru
      _
    // Predicated region
    $region14: #{tpu_custom_call.1} parent=1 // pred_check
      _
    $region15: #{tpu_custom_call.1} parent=1 // pred_check_branch
      %56 = sbr.rel (0) target = $region17
    $region16: #{tpu_custom_call.1} parent=1 // pred_region
      _
    $region17: #{tpu_custom_call.1} parent=1 // pred_fallthru
      _
    // Predicated region
    $region18: #{tpu_custom_call.1} parent=1 // pred_check
      _
    $region19: #{tpu_custom_call.1} parent=1 // pred_check_branch
      %58 = sbr.rel (0) target = $region21
    $region20: #{tpu_custom_call.1} parent=1 // pred_region
      %s60 = ssub.s32 4096, 4096
      %61 = vsyncadd [#allocation11], %s60
      %s62 = sshll.u32 [#allocation10], 4
      %s63 = int_to_ptr.vmem [resolvable:$true] %s62
      %68 = dma.hbm_to_vmem [thread:$0]  %s4, 4096, %s63, [#allocation11], 256, 256, 16
    $region21: #{tpu_custom_call.1} parent=1 // pred_fallthru
      _
    // Predicated region
    $region22: #{tpu_custom_call.1} parent=1 // pred_check
      _
    $region23: #{tpu_custom_call.1} parent=1 // pred_check_branch
      %70 = sbr.rel (0) target = $region25
    $region24: #{tpu_custom_call.1} parent=1 // pred_region
      %s72 = ssub.s32 4096, 4096
      %73 = vsyncadd [#allocation11], %s72
      %s74 = sshll.u32 [#allocation12], 4
      %s75 = int_to_ptr.vmem [resolvable:$true] %s74
      %80 = dma.hbm_to_vmem [thread:$0]  %s5, 4096, %s75, [#allocation11], 256, 256, 16
    $region25: #{tpu_custom_call.1} parent=1 // pred_fallthru
      _
    // Predicated region
    $region26: #{tpu_custom_call.1} parent=1 // pred_check
      _
    $region27: #{tpu_custom_call.1} parent=1 // pred_check_branch
      %82 = sbr.rel (0) target = $region29
    $region28: #{tpu_custom_call.1} parent=1 // pred_region
      _
    $region29: #{tpu_custom_call.1} parent=1 // pred_fallthru
      _
    // Predicated region
    $region30: #{tpu_custom_call.1} parent=1 // pred_check
      _
    $region31: #{tpu_custom_call.1} parent=1 // pred_check_branch
      %84 = sbr.rel (0) target = $region33
    $region32: #{tpu_custom_call.1} parent=1 // pred_region
      %s86 = ssub.s32 4096, 4096
      %87 = vsyncadd [#allocation14], %s86
      %s88 = sshll.u32 [#allocation13], 4
      %s89 = int_to_ptr.vmem [resolvable:$true] %s88
      %94 = dma.hbm_to_vmem [thread:$0]  %s7, 4096, %s89, [#allocation14], 64, 64, 4
    $region33: #{tpu_custom_call.1} parent=1 // pred_fallthru
      _
    // Predicated region
    $region34: #{tpu_custom_call.1} parent=1 // pred_check
      _
    $region35: #{tpu_custom_call.1} parent=1 // pred_check_branch
      %96 = sbr.rel (0) target = $region37
    $region36: #{tpu_custom_call.1} parent=1 // pred_region
      _
    $region37: #{tpu_custom_call.1} parent=1 // pred_fallthru
      _
    // Predicated region
    $region38: #{tpu_custom_call.1} parent=1 // pred_check
      _
    $region39: #{tpu_custom_call.1} parent=1 // pred_check_branch
      %98 = sbr.rel (0) target = $region41
    $region40: #{tpu_custom_call.1} parent=1 // pred_region
      %99 = dma.done [#allocation5], 512
    $region41: #{tpu_custom_call.1} parent=1 // pred_fallthru
      _
    // Predicated region
    $region42: #{tpu_custom_call.1} parent=1 // pred_check
      _
    $region43: #{tpu_custom_call.1} parent=1 // pred_check_branch
      %101 = sbr.rel (0) target = $region45
    $region44: #{tpu_custom_call.1} parent=1 // pred_region
      %102 = dma.done [#allocation8], 4096
    $region45: #{tpu_custom_call.1} parent=1 // pred_fallthru
      _
    // Predicated region
    $region46: #{tpu_custom_call.1} parent=1 // pred_check
      _
    $region47: #{tpu_custom_call.1} parent=1 // pred_check_branch
      %104 = sbr.rel (0) target = $region49
    $region48: #{tpu_custom_call.1} parent=1 // pred_region
      %105 = dma.done [#allocation8], 4096
    $region49: #{tpu_custom_call.1} parent=1 // pred_fallthru
      _
    // Predicated region
    $region50: #{tpu_custom_call.1} parent=1 // pred_check
      _
    $region51: #{tpu_custom_call.1} parent=1 // pred_check_branch
      %107 = sbr.rel (0) target = $region53
    $region52: #{tpu_custom_call.1} parent=1 // pred_region
      %108 = dma.done [#allocation11], 4096
    $region53: #{tpu_custom_call.1} parent=1 // pred_fallthru
      _
    // Predicated region
    $region54: #{tpu_custom_call.1} parent=1 // pred_check
      _
    $region55: #{tpu_custom_call.1} parent=1 // pred_check_branch
      %110 = sbr.rel (0) target = $region57
    $region56: #{tpu_custom_call.1} parent=1 // pred_region
      %111 = dma.done [#allocation11], 4096
    $region57: #{tpu_custom_call.1} parent=1 // pred_fallthru
      _
    // Predicated region
    $region58: #{tpu_custom_call.1} parent=1 // pred_check
      _
    $region59: #{tpu_custom_call.1} parent=1 // pred_check_branch
      %113 = sbr.rel (0) target = $region61
    $region60: #{tpu_custom_call.1} parent=1 // pred_region
      %114 = dma.done [#allocation14], 4096
    $region61: #{tpu_custom_call.1} parent=1 // pred_fallthru
      _
    %v116 = vld [vmem:[#allocation4] sm:$0xf]
    %v117 = vld [vmem:[#allocation4 + $0x4] sm:$0xf]
    %v118 = vld [vmem:[#allocation4 + $0x8] sm:$0xf]
    %v119 = vld [vmem:[#allocation4 + $0xc] sm:$0xf]
    %v120 = vld [vmem:[#allocation4 + $0x10] sm:$0xf]
    %v121 = vld [vmem:[#allocation4 + $0x14] sm:$0xf]
    %v122 = vld [vmem:[#allocation4 + $0x18] sm:$0xf]
    %v123 = vld [vmem:[#allocation4 + $0x1c] sm:$0xf]
    %v124 = vld [vmem:[#allocation7] sm:$0xff]
    %v125 = vld [vmem:[#allocation7 + $0x8] sm:$0xff]
    %v126 = vld [vmem:[#allocation7 + $0x10] sm:$0xff]
    %v127 = vld [vmem:[#allocation7 + $0x18] sm:$0xff]
    %v128 = vld [vmem:[#allocation7 + $0x20] sm:$0xff]
    %v129 = vld [vmem:[#allocation7 + $0x28] sm:$0xff]
    %v130 = vld [vmem:[#allocation7 + $0x30] sm:$0xff]
    %v131 = vld [vmem:[#allocation7 + $0x38] sm:$0xff]
    %v132 = vld [vmem:[#allocation7 + $0x40] sm:$0xff]
    %v133 = vld [vmem:[#allocation7 + $0x48] sm:$0xff]
    %v134 = vld [vmem:[#allocation7 + $0x50] sm:$0xff]
    %v135 = vld [vmem:[#allocation7 + $0x58] sm:$0xff]
    %v136 = vld [vmem:[#allocation7 + $0x60] sm:$0xff]
    %v137 = vld [vmem:[#allocation7 + $0x68] sm:$0xff]
    %v138 = vld [vmem:[#allocation7 + $0x70] sm:$0xff]
    %v139 = vld [vmem:[#allocation7 + $0x78] sm:$0xff]
    %v140 = vld [vmem:[#allocation7 + $0x80] sm:$0xff]
    %v141 = vld [vmem:[#allocation7 + $0x88] sm:$0xff]
    %v142 = vld [vmem:[#allocation7 + $0x90] sm:$0xff]
    %v143 = vld [vmem:[#allocation7 + $0x98] sm:$0xff]
    %v144 = vld [vmem:[#allocation7 + $0xa0] sm:$0xff]
    %v145 = vld [vmem:[#allocation7 + $0xa8] sm:$0xff]
    %v146 = vld [vmem:[#allocation7 + $0xb0] sm:$0xff]
    %v147 = vld [vmem:[#allocation7 + $0xb8] sm:$0xff]
    %v148 = vld [vmem:[#allocation7 + $0xc0] sm:$0xff]
    %v149 = vld [vmem:[#allocation7 + $0xc8] sm:$0xff]
    %v150 = vld [vmem:[#allocation7 + $0xd0] sm:$0xff]
    %v151 = vld [vmem:[#allocation7 + $0xd8] sm:$0xff]
    %v152 = vld [vmem:[#allocation7 + $0xe0] sm:$0xff]
    %v153 = vld [vmem:[#allocation7 + $0xe8] sm:$0xff]
    %v154 = vld [vmem:[#allocation7 + $0xf0] sm:$0xff]
    %v155 = vld [vmem:[#allocation7 + $0xf8] sm:$0xff]
    %v156 = vld [vmem:[%s3] sm:$0xf]
    %v158 = vlaneseq
    %v159 = vshrl.u32 %v158, 7
    %v160 = vsub.s32 0, %v159
    %v161 = vrot.slane %v156, %v160
    %v162 = vlaneseq
    %v163 = vshrl.u32 %v162, 7
    %v164 = vsub.s32 1, %v163
    %v165 = vrot.slane %v156, %v164
    %v166 = vlaneseq
    %v167 = vshrl.u32 %v166, 7
    %v168 = vsub.s32 2, %v167
    %v169 = vrot.slane %v156, %v168
    %v170 = vlaneseq
    %v171 = vshrl.u32 %v170, 7
    %v172 = vsub.s32 3, %v171
    %v173 = vrot.slane %v156, %v172
    %v186 = vunpack.c.l.b16 %v116
    %v187 = vunpack.c.l.b16 %v117
    %v188 = vunpack.c.l.b16 %v118
    %v189 = vunpack.c.l.b16 %v119
    %v190 = vunpack.c.l.b16 %v120
    %v191 = vunpack.c.l.b16 %v121
    %v192 = vunpack.c.l.b16 %v122
    %v193 = vunpack.c.l.b16 %v123
    %v194 = vpack.c.b16 %v187, %v186
    %v195 = vpack.c.b16 %v189, %v188
    %v196 = vpack.c.b16 %v191, %v190
    %v197 = vpack.c.b16 %v193, %v192
    %v234 = vunpack.c.l.b16 %v124
    %v235 = vunpack.c.h.b16 %v124
    %v236 = vunpack.c.l.b16 %v125
    %v237 = vunpack.c.h.b16 %v125
    %v238 = vunpack.c.l.b16 %v126
    %v239 = vunpack.c.h.b16 %v126
    %v240 = vunpack.c.l.b16 %v127
    %v241 = vunpack.c.h.b16 %v127
    %v242 = vunpack.c.l.b16 %v128
    %v243 = vunpack.c.h.b16 %v128
    %v244 = vunpack.c.l.b16 %v129
    %v245 = vunpack.c.h.b16 %v129
    %v246 = vunpack.c.l.b16 %v130
    %v247 = vunpack.c.h.b16 %v130
    %v248 = vunpack.c.l.b16 %v131
    %v249 = vunpack.c.h.b16 %v131
    %v250 = vunpack.c.l.b16 %v132
    %v251 = vunpack.c.h.b16 %v132
    %v252 = vunpack.c.l.b16 %v133
    %v253 = vunpack.c.h.b16 %v133
    %v254 = vunpack.c.l.b16 %v134
    %v255 = vunpack.c.h.b16 %v134
    %v256 = vunpack.c.l.b16 %v135
    %v257 = vunpack.c.h.b16 %v135
    %v258 = vunpack.c.l.b16 %v136
    %v259 = vunpack.c.h.b16 %v136
    %v260 = vunpack.c.l.b16 %v137
    %v261 = vunpack.c.h.b16 %v137
    %v262 = vunpack.c.l.b16 %v138
    %v263 = vunpack.c.h.b16 %v138
    %v264 = vunpack.c.l.b16 %v139
    %v265 = vunpack.c.h.b16 %v139
    %v266 = vunpack.c.l.b16 %v140
    %v267 = vunpack.c.h.b16 %v140
    %v268 = vunpack.c.l.b16 %v141
    %v269 = vunpack.c.h.b16 %v141
    %v270 = vunpack.c.l.b16 %v142
    %v271 = vunpack.c.h.b16 %v142
    %v272 = vunpack.c.l.b16 %v143
    %v273 = vunpack.c.h.b16 %v143
    %v274 = vunpack.c.l.b16 %v144
    %v275 = vunpack.c.h.b16 %v144
    %v276 = vunpack.c.l.b16 %v145
    %v277 = vunpack.c.h.b16 %v145
    %v278 = vunpack.c.l.b16 %v146
    %v279 = vunpack.c.h.b16 %v146
    %v280 = vunpack.c.l.b16 %v147
    %v281 = vunpack.c.h.b16 %v147
    %v282 = vunpack.c.l.b16 %v148
    %v283 = vunpack.c.h.b16 %v148
    %v284 = vunpack.c.l.b16 %v149
    %v285 = vunpack.c.h.b16 %v149
    %v286 = vunpack.c.l.b16 %v150
    %v287 = vunpack.c.h.b16 %v150
    %v288 = vunpack.c.l.b16 %v151
    %v289 = vunpack.c.h.b16 %v151
    %v290 = vunpack.c.l.b16 %v152
    %v291 = vunpack.c.h.b16 %v152
    %v292 = vunpack.c.l.b16 %v153
    %v293 = vunpack.c.h.b16 %v153
    %v294 = vunpack.c.l.b16 %v154
    %v295 = vunpack.c.h.b16 %v154
    %v296 = vunpack.c.l.b16 %v155
    %v297 = vunpack.c.h.b16 %v155
    %v298 = vpack.c.b16 %v238, %v234
    %v299 = vpack.c.b16 %v239, %v235
    %v300 = vpack.c.b16 %v240, %v236
    %v301 = vpack.c.b16 %v241, %v237
    %v302 = vpack.c.b16 %v246, %v242
    %v303 = vpack.c.b16 %v247, %v243
    %v304 = vpack.c.b16 %v248, %v244
    %v305 = vpack.c.b16 %v249, %v245
    %v306 = vpack.c.b16 %v254, %v250
    %v307 = vpack.c.b16 %v255, %v251
    %v308 = vpack.c.b16 %v256, %v252
    %v309 = vpack.c.b16 %v257, %v253
    %v310 = vpack.c.b16 %v262, %v258
    %v311 = vpack.c.b16 %v263, %v259
    %v312 = vpack.c.b16 %v264, %v260
    %v313 = vpack.c.b16 %v265, %v261
    %v314 = vpack.c.b16 %v270, %v266
    %v315 = vpack.c.b16 %v271, %v267
    %v316 = vpack.c.b16 %v272, %v268
    %v317 = vpack.c.b16 %v273, %v269
    %v318 = vpack.c.b16 %v278, %v274
    %v319 = vpack.c.b16 %v279, %v275
    %v320 = vpack.c.b16 %v280, %v276
    %v321 = vpack.c.b16 %v281, %v277
    %v322 = vpack.c.b16 %v286, %v282
    %v323 = vpack.c.b16 %v287, %v283
    %v324 = vpack.c.b16 %v288, %v284
    %v325 = vpack.c.b16 %v289, %v285
    %v326 = vpack.c.b16 %v294, %v290
    %v327 = vpack.c.b16 %v295, %v291
    %v328 = vpack.c.b16 %v296, %v292
    %v329 = vpack.c.b16 %v297, %v293
    %362 = vmatprep.subr.bf16.mxu0 %v327
    %363 = vmatpush1.bf16.msra.mxu0 %v326
    %364 = vmatprep.subr.bf16.mxu0 %v323
    %365 = vmatpush1.bf16.msra.mxu0 %v322
    %366 = vmatprep.subr.bf16.mxu0 %v319
    %367 = vmatpush1.bf16.msra.mxu0 %v318
    %368 = vmatprep.subr.bf16.mxu0 %v315
    %369 = vmatpush1.bf16.msra.mxu0 %v314
    %370 = vmatprep.subr.bf16.mxu0 %v311
    %371 = vmatpush1.bf16.msra.mxu0 %v310
    %372 = vmatprep.subr.bf16.mxu0 %v307
    %373 = vmatpush1.bf16.msra.mxu0 %v306
    %374 = vmatprep.subr.bf16.mxu0 %v303
    %375 = vmatpush1.bf16.msra.mxu0 %v302
    %376 = vmatprep.subr.bf16.mxu0 %v299
    %377 = vmatpush1.bf16.msra.mxu0 %v298
    %378 = vmatprep.subr.bf16.mxu0 0
    %379 = vmatpush2.bf16.msra.mxu0 0
    %380 = vmatprep.subr.bf16.mxu0 0
    %381 = vmatpush2.bf16.msra.mxu0 0
    %382 = vmatprep.subr.bf16.mxu0 0
    %383 = vmatpush2.bf16.msra.mxu0 0
    %384 = vmatprep.subr.bf16.mxu0 0
    %385 = vmatpush2.bf16.msra.mxu0 0
    %386 = vmatprep.subr.bf16.mxu0 0
    %387 = vmatpush2.bf16.msra.mxu0 0
    %388 = vmatprep.subr.bf16.mxu0 0
    %389 = vmatpush2.bf16.msra.mxu0 0
    %390 = vmatprep.subr.bf16.mxu0 0
    %391 = vmatpush2.bf16.msra.mxu0 0
    %392 = vmatprep.subr.bf16.mxu0 0
    %393 = vmatpush2.bf16.msra.mxu0 0
    %394 = vmatprep.mubr.bf16.mxu0 0
    %395 = vmatmul.mubr.bf16.gmra.mxu0 %v194
    %v396 = vpop.f32.mrf.mxu0
    %v397 = vadd.f32 %v161, %v396
    %v398 = vpop.f32.mrf.mxu0
    %v399 = vadd.f32 %v165, %v398
    %v400 = vpop.f32.mrf.mxu0
    %v401 = vadd.f32 %v161, %v400
    %v402 = vpop.f32.mrf.mxu0
    %v403 = vadd.f32 %v165, %v402
    %404 = vmatprep.mubr.bf16.mxu0 0
    %405 = vmatmul.mubr.bf16.gmra.mxu0 %v195
    %v406 = vpop.f32.mrf.mxu0
    %v407 = vadd.f32 %v161, %v406
    %v408 = vpop.f32.mrf.mxu0
    %v409 = vadd.f32 %v165, %v408
    %v410 = vpop.f32.mrf.mxu0
    %v411 = vadd.f32 %v161, %v410
    %v412 = vpop.f32.mrf.mxu0
    %v413 = vadd.f32 %v165, %v412
    %414 = vmatprep.mubr.bf16.mxu0 0
    %415 = vmatmul.mubr.bf16.gmra.mxu0 %v196
    %v416 = vpop.f32.mrf.mxu0
    %v417 = vadd.f32 %v161, %v416
    %v418 = vpop.f32.mrf.mxu0
    %v419 = vadd.f32 %v165, %v418
    %v420 = vpop.f32.mrf.mxu0
    %v421 = vadd.f32 %v161, %v420
    %v422 = vpop.f32.mrf.mxu0
    %v423 = vadd.f32 %v165, %v422
    %424 = vmatprep.mubr.bf16.mxu0 0
    %425 = vmatmul.mubr.bf16.gmra.mxu0 %v197
    %v426 = vpop.f32.mrf.mxu0
    %v427 = vadd.f32 %v161, %v426
    %v428 = vpop.f32.mrf.mxu0
    %v429 = vadd.f32 %v165, %v428
    %v430 = vpop.f32.mrf.mxu0
    %v431 = vadd.f32 %v161, %v430
    %v432 = vpop.f32.mrf.mxu0
    %v433 = vadd.f32 %v165, %v432
    %434 = vdwg.mxu0
    %435 = vmatprep.subr.bf16.mxu0 %v329
    %436 = vmatpush1.bf16.msra.mxu0 %v328
    %437 = vmatprep.subr.bf16.mxu0 %v325
    %438 = vmatpush1.bf16.msra.mxu0 %v324
    %439 = vmatprep.subr.bf16.mxu0 %v321
    %440 = vmatpush1.bf16.msra.mxu0 %v320
    %441 = vmatprep.subr.bf16.mxu0 %v317
    %442 = vmatpush1.bf16.msra.mxu0 %v316
    %443 = vmatprep.subr.bf16.mxu0 %v313
    %444 = vmatpush1.bf16.msra.mxu0 %v312
    %445 = vmatprep.subr.bf16.mxu0 %v309
    %446 = vmatpush1.bf16.msra.mxu0 %v308
    %447 = vmatprep.subr.bf16.mxu0 %v305
    %448 = vmatpush1.bf16.msra.mxu0 %v304
    %449 = vmatprep.subr.bf16.mxu0 %v301
    %450 = vmatpush1.bf16.msra.mxu0 %v300
    %451 = vmatprep.subr.bf16.mxu0 0
    %452 = vmatpush2.bf16.msra.mxu0 0
    %453 = vmatprep.subr.bf16.mxu0 0
    %454 = vmatpush2.bf16.msra.mxu0 0
    %455 = vmatprep.subr.bf16.mxu0 0
    %456 = vmatpush2.bf16.msra.mxu0 0
    %457 = vmatprep.subr.bf16.mxu0 0
    %458 = vmatpush2.bf16.msra.mxu0 0
    %459 = vmatprep.subr.bf16.mxu0 0
    %460 = vmatpush2.bf16.msra.mxu0 0
    %461 = vmatprep.subr.bf16.mxu0 0
    %462 = vmatpush2.bf16.msra.mxu0 0
    %463 = vmatprep.subr.bf16.mxu0 0
    %464 = vmatpush2.bf16.msra.mxu0 0
    %465 = vmatprep.subr.bf16.mxu0 0
    %466 = vmatpush2.bf16.msra.mxu0 0
    %467 = vmatprep.mubr.bf16.mxu0 0
    %468 = vmatmul.mubr.bf16.gmra.mxu0 %v194
    %v469 = vpop.f32.mrf.mxu0
    %v470 = vadd.f32 %v169, %v469
    %v471 = vpop.f32.mrf.mxu0
    %v472 = vadd.f32 %v173, %v471
    %v473 = vpop.f32.mrf.mxu0
    %v474 = vadd.f32 %v169, %v473
    %v475 = vpop.f32.mrf.mxu0
    %v476 = vadd.f32 %v173, %v475
    %477 = vmatprep.mubr.bf16.mxu0 0
    %478 = vmatmul.mubr.bf16.gmra.mxu0 %v195
    %v479 = vpop.f32.mrf.mxu0
    %v480 = vadd.f32 %v169, %v479
    %v481 = vpop.f32.mrf.mxu0
    %v482 = vadd.f32 %v173, %v481
    %v483 = vpop.f32.mrf.mxu0
    %v484 = vadd.f32 %v169, %v483
    %v485 = vpop.f32.mrf.mxu0
    %v486 = vadd.f32 %v173, %v485
    %487 = vmatprep.mubr.bf16.mxu0 0
    %488 = vmatmul.mubr.bf16.gmra.mxu0 %v196
    %v489 = vpop.f32.mrf.mxu0
    %v490 = vadd.f32 %v169, %v489
    %v491 = vpop.f32.mrf.mxu0
    %v492 = vadd.f32 %v173, %v491
    %v493 = vpop.f32.mrf.mxu0
    %v494 = vadd.f32 %v169, %v493
    %v495 = vpop.f32.mrf.mxu0
    %v496 = vadd.f32 %v173, %v495
    %497 = vmatprep.mubr.bf16.mxu0 0
    %498 = vmatmul.mubr.bf16.gmra.mxu0 %v197
    %v499 = vpop.f32.mrf.mxu0
    %v500 = vadd.f32 %v169, %v499
    %v501 = vpop.f32.mrf.mxu0
    %v502 = vadd.f32 %v173, %v501
    %v503 = vpop.f32.mrf.mxu0
    %v504 = vadd.f32 %v169, %v503
    %v505 = vpop.f32.mrf.mxu0
    %v506 = vadd.f32 %v173, %v505
    %507 = vdwg.mxu0
    %v508 = vpack.c.bf16 %v397, %v397
    %v509 = vpack.c.bf16 %v399, %v399
    %v510 = vpack.c.bf16 %v470, %v470
    %v511 = vpack.c.bf16 %v472, %v472
    %v512 = vpack.c.bf16 %v401, %v401
    %v513 = vpack.c.bf16 %v403, %v403
    %v514 = vpack.c.bf16 %v474, %v474
    %v515 = vpack.c.bf16 %v476, %v476
    %v516 = vpack.c.bf16 %v407, %v407
    %v517 = vpack.c.bf16 %v409, %v409
    %v518 = vpack.c.bf16 %v480, %v480
    %v519 = vpack.c.bf16 %v482, %v482
    %v520 = vpack.c.bf16 %v411, %v411
    %v521 = vpack.c.bf16 %v413, %v413
    %v522 = vpack.c.bf16 %v484, %v484
    %v523 = vpack.c.bf16 %v486, %v486
    %v524 = vpack.c.bf16 %v417, %v417
    %v525 = vpack.c.bf16 %v419, %v419
    %v526 = vpack.c.bf16 %v490, %v490
    %v527 = vpack.c.bf16 %v492, %v492
    %v528 = vpack.c.bf16 %v421, %v421
    %v529 = vpack.c.bf16 %v423, %v423
    %v530 = vpack.c.bf16 %v494, %v494
    %v531 = vpack.c.bf16 %v496, %v496
    %v532 = vpack.c.bf16 %v427, %v427
    %v533 = vpack.c.bf16 %v429, %v429
    %v534 = vpack.c.bf16 %v500, %v500
    %v535 = vpack.c.bf16 %v502, %v502
    %v536 = vpack.c.bf16 %v431, %v431
    %v537 = vpack.c.bf16 %v433, %v433
    %v538 = vpack.c.bf16 %v504, %v504
    %v539 = vpack.c.bf16 %v506, %v506
    %v572 = vunpack.c.l.b16 %v508
    %v573 = vunpack.c.l.b16 %v509
    %v574 = vunpack.c.l.b16 %v510
    %v575 = vunpack.c.l.b16 %v511
    %v576 = vunpack.c.l.b16 %v512
    %v577 = vunpack.c.l.b16 %v513
    %v578 = vunpack.c.l.b16 %v514
    %v579 = vunpack.c.l.b16 %v515
    %v580 = vunpack.c.l.b16 %v516
    %v581 = vunpack.c.l.b16 %v517
    %v582 = vunpack.c.l.b16 %v518
    %v583 = vunpack.c.l.b16 %v519
    %v584 = vunpack.c.l.b16 %v520
    %v585 = vunpack.c.l.b16 %v521
    %v586 = vunpack.c.l.b16 %v522
    %v587 = vunpack.c.l.b16 %v523
    %v588 = vunpack.c.l.b16 %v524
    %v589 = vunpack.c.l.b16 %v525
    %v590 = vunpack.c.l.b16 %v526
    %v591 = vunpack.c.l.b16 %v527
    %v592 = vunpack.c.l.b16 %v528
    %v593 = vunpack.c.l.b16 %v529
    %v594 = vunpack.c.l.b16 %v530
    %v595 = vunpack.c.l.b16 %v531
    %v596 = vunpack.c.l.b16 %v532
    %v597 = vunpack.c.l.b16 %v533
    %v598 = vunpack.c.l.b16 %v534
    %v599 = vunpack.c.l.b16 %v535
    %v600 = vunpack.c.l.b16 %v536
    %v601 = vunpack.c.l.b16 %v537
    %v602 = vunpack.c.l.b16 %v538
    %v603 = vunpack.c.l.b16 %v539
    %v604 = vpack.c.b16 %v573, %v572
    %v605 = vpack.c.b16 %v575, %v574
    %v606 = vpack.c.b16 %v577, %v576
    %v607 = vpack.c.b16 %v579, %v578
    %v608 = vpack.c.b16 %v581, %v580
    %v609 = vpack.c.b16 %v583, %v582
    %v610 = vpack.c.b16 %v585, %v584
    %v611 = vpack.c.b16 %v587, %v586
    %v612 = vpack.c.b16 %v589, %v588
    %v613 = vpack.c.b16 %v591, %v590
    %v614 = vpack.c.b16 %v593, %v592
    %v615 = vpack.c.b16 %v595, %v594
    %v616 = vpack.c.b16 %v597, %v596
    %v617 = vpack.c.b16 %v599, %v598
    %v618 = vpack.c.b16 %v601, %v600
    %v619 = vpack.c.b16 %v603, %v602
    %636 = vst [vmem:[#allocation2] sm:$0xff] %v604
    %637 = vst [vmem:[#allocation2 + $0x8] sm:$0xff] %v605
    %638 = vst [vmem:[#allocation2 + $0x10] sm:$0xff] %v606
    %639 = vst [vmem:[#allocation2 + $0x18] sm:$0xff] %v607
    %640 = vst [vmem:[#allocation2 + $0x20] sm:$0xff] %v608
    %641 = vst [vmem:[#allocation2 + $0x28] sm:$0xff] %v609
    %642 = vst [vmem:[#allocation2 + $0x30] sm:$0xff] %v610
    %643 = vst [vmem:[#allocation2 + $0x38] sm:$0xff] %v611
    %644 = vst [vmem:[#allocation2 + $0x40] sm:$0xff] %v612
    %645 = vst [vmem:[#allocation2 + $0x48] sm:$0xff] %v613
    %646 = vst [vmem:[#allocation2 + $0x50] sm:$0xff] %v614
    %647 = vst [vmem:[#allocation2 + $0x58] sm:$0xff] %v615
    %648 = vst [vmem:[#allocation2 + $0x60] sm:$0xff] %v616
    %649 = vst [vmem:[#allocation2 + $0x68] sm:$0xff] %v617
    %650 = vst [vmem:[#allocation2 + $0x70] sm:$0xff] %v618
    %651 = vst [vmem:[#allocation2 + $0x78] sm:$0xff] %v619
    %v652 = vld [vmem:[#allocation9] sm:$0xff]
    %v653 = vld [vmem:[#allocation9 + $0x8] sm:$0xff]
    %v654 = vld [vmem:[#allocation9 + $0x10] sm:$0xff]
    %v655 = vld [vmem:[#allocation9 + $0x18] sm:$0xff]
    %v656 = vld [vmem:[#allocation9 + $0x20] sm:$0xff]
    %v657 = vld [vmem:[#allocation9 + $0x28] sm:$0xff]
    %v658 = vld [vmem:[#allocation9 + $0x30] sm:$0xff]
    %v659 = vld [vmem:[#allocation9 + $0x38] sm:$0xff]
    %v660 = vld [vmem:[#allocation9 + $0x40] sm:$0xff]
    %v661 = vld [vmem:[#allocation9 + $0x48] sm:$0xff]
    %v662 = vld [vmem:[#allocation9 + $0x50] sm:$0xff]
    %v663 = vld [vmem:[#allocation9 + $0x58] sm:$0xff]
    %v664 = vld [vmem:[#allocation9 + $0x60] sm:$0xff]
    %v665 = vld [vmem:[#allocation9 + $0x68] sm:$0xff]
    %v666 = vld [vmem:[#allocation9 + $0x70] sm:$0xff]
    %v667 = vld [vmem:[#allocation9 + $0x78] sm:$0xff]
    %v668 = vld [vmem:[#allocation9 + $0x80] sm:$0xff]
    %v669 = vld [vmem:[#allocation9 + $0x88] sm:$0xff]
    %v670 = vld [vmem:[#allocation9 + $0x90] sm:$0xff]
    %v671 = vld [vmem:[#allocation9 + $0x98] sm:$0xff]
    %v672 = vld [vmem:[#allocation9 + $0xa0] sm:$0xff]
    %v673 = vld [vmem:[#allocation9 + $0xa8] sm:$0xff]
    %v674 = vld [vmem:[#allocation9 + $0xb0] sm:$0xff]
    %v675 = vld [vmem:[#allocation9 + $0xb8] sm:$0xff]
    %v676 = vld [vmem:[#allocation9 + $0xc0] sm:$0xff]
    %v677 = vld [vmem:[#allocation9 + $0xc8] sm:$0xff]
    %v678 = vld [vmem:[#allocation9 + $0xd0] sm:$0xff]
    %v679 = vld [vmem:[#allocation9 + $0xd8] sm:$0xff]
    %v680 = vld [vmem:[#allocation9 + $0xe0] sm:$0xff]
    %v681 = vld [vmem:[#allocation9 + $0xe8] sm:$0xff]
    %v682 = vld [vmem:[#allocation9 + $0xf0] sm:$0xff]
    %v683 = vld [vmem:[#allocation9 + $0xf8] sm:$0xff]
    %v684 = vld [vmem:[#allocation2] sm:$0xff]
    %v685 = vld [vmem:[#allocation2 + $0x8] sm:$0xff]
    %v718 = vunpack.c.l.b16 %v652
    %v719 = vunpack.c.h.b16 %v652
    %v720 = vunpack.c.l.b16 %v653
    %v721 = vunpack.c.h.b16 %v653
    %v722 = vunpack.c.l.b16 %v654
    %v723 = vunpack.c.h.b16 %v654
    %v724 = vunpack.c.l.b16 %v655
    %v725 = vunpack.c.h.b16 %v655
    %v726 = vunpack.c.l.b16 %v656
    %v727 = vunpack.c.h.b16 %v656
    %v728 = vunpack.c.l.b16 %v657
    %v729 = vunpack.c.h.b16 %v657
    %v730 = vunpack.c.l.b16 %v658
    %v731 = vunpack.c.h.b16 %v658
    %v732 = vunpack.c.l.b16 %v659
    %v733 = vunpack.c.h.b16 %v659
    %v734 = vunpack.c.l.b16 %v660
    %v735 = vunpack.c.h.b16 %v660
    %v736 = vunpack.c.l.b16 %v661
    %v737 = vunpack.c.h.b16 %v661
    %v738 = vunpack.c.l.b16 %v662
    %v739 = vunpack.c.h.b16 %v662
    %v740 = vunpack.c.l.b16 %v663
    %v741 = vunpack.c.h.b16 %v663
    %v742 = vunpack.c.l.b16 %v664
    %v743 = vunpack.c.h.b16 %v664
    %v744 = vunpack.c.l.b16 %v665
    %v745 = vunpack.c.h.b16 %v665
    %v746 = vunpack.c.l.b16 %v666
    %v747 = vunpack.c.h.b16 %v666
    %v748 = vunpack.c.l.b16 %v667
    %v749 = vunpack.c.h.b16 %v667
    %v750 = vunpack.c.l.b16 %v668
    %v751 = vunpack.c.h.b16 %v668
    %v752 = vunpack.c.l.b16 %v669
    %v753 = vunpack.c.h.b16 %v669
    %v754 = vunpack.c.l.b16 %v670
    %v755 = vunpack.c.h.b16 %v670
    %v756 = vunpack.c.l.b16 %v671
    %v757 = vunpack.c.h.b16 %v671
    %v758 = vunpack.c.l.b16 %v672
    %v759 = vunpack.c.h.b16 %v672
    %v760 = vunpack.c.l.b16 %v673
    %v761 = vunpack.c.h.b16 %v673
    %v762 = vunpack.c.l.b16 %v674
    %v763 = vunpack.c.h.b16 %v674
    %v764 = vunpack.c.l.b16 %v675
    %v765 = vunpack.c.h.b16 %v675
    %v766 = vunpack.c.l.b16 %v676
    %v767 = vunpack.c.h.b16 %v676
    %v768 = vunpack.c.l.b16 %v677
    %v769 = vunpack.c.h.b16 %v677
    %v770 = vunpack.c.l.b16 %v678
    %v771 = vunpack.c.h.b16 %v678
    %v772 = vunpack.c.l.b16 %v679
    %v773 = vunpack.c.h.b16 %v679
    %v774 = vunpack.c.l.b16 %v680
    %v775 = vunpack.c.h.b16 %v680
    %v776 = vunpack.c.l.b16 %v681
    %v777 = vunpack.c.h.b16 %v681
    %v778 = vunpack.c.l.b16 %v682
    %v779 = vunpack.c.h.b16 %v682
    %v780 = vunpack.c.l.b16 %v683
    %v781 = vunpack.c.h.b16 %v683
    %v782 = vpack.c.b16 %v722, %v718
    %v783 = vpack.c.b16 %v723, %v719
    %v784 = vpack.c.b16 %v724, %v720
    %v785 = vpack.c.b16 %v725, %v721
    %v786 = vpack.c.b16 %v730, %v726
    %v787 = vpack.c.b16 %v731, %v727
    %v788 = vpack.c.b16 %v732, %v728
    %v789 = vpack.c.b16 %v733, %v729
    %v790 = vpack.c.b16 %v738, %v734
    %v791 = vpack.c.b16 %v739, %v735
    %v792 = vpack.c.b16 %v740, %v736
    %v793 = vpack.c.b16 %v741, %v737
    %v794 = vpack.c.b16 %v746, %v742
    %v795 = vpack.c.b16 %v747, %v743
    %v796 = vpack.c.b16 %v748, %v744
    %v797 = vpack.c.b16 %v749, %v745
    %v798 = vpack.c.b16 %v754, %v750
    %v799 = vpack.c.b16 %v755, %v751
    %v800 = vpack.c.b16 %v756, %v752
    %v801 = vpack.c.b16 %v757, %v753
    %v802 = vpack.c.b16 %v762, %v758
    %v803 = vpack.c.b16 %v763, %v759
    %v804 = vpack.c.b16 %v764, %v760
    %v805 = vpack.c.b16 %v765, %v761
    %v806 = vpack.c.b16 %v770, %v766
    %v807 = vpack.c.b16 %v771, %v767
    %v808 = vpack.c.b16 %v772, %v768
    %v809 = vpack.c.b16 %v773, %v769
    %v810 = vpack.c.b16 %v778, %v774
    %v811 = vpack.c.b16 %v779, %v775
    %v812 = vpack.c.b16 %v780, %v776
    %v813 = vpack.c.b16 %v781, %v777
    %846 = vmatprep.subr.bf16.mxu0 %v811
    %847 = vmatpush1.bf16.msra.mxu0 %v810
    %848 = vmatprep.subr.bf16.mxu0 %v807
    %849 = vmatpush1.bf16.msra.mxu0 %v806
    %850 = vmatprep.subr.bf16.mxu0 %v803
    %851 = vmatpush1.bf16.msra.mxu0 %v802
    %852 = vmatprep.subr.bf16.mxu0 %v799
    %853 = vmatpush1.bf16.msra.mxu0 %v798
    %854 = vmatprep.subr.bf16.mxu0 %v795
    %855 = vmatpush1.bf16.msra.mxu0 %v794
    %856 = vmatprep.subr.bf16.mxu0 %v791
    %857 = vmatpush1.bf16.msra.mxu0 %v790
    %858 = vmatprep.subr.bf16.mxu0 %v787
    %859 = vmatpush1.bf16.msra.mxu0 %v786
    %860 = vmatprep.subr.bf16.mxu0 %v783
    %861 = vmatpush1.bf16.msra.mxu0 %v782
    %862 = vmatprep.subr.bf16.mxu0 0
    %863 = vmatpush2.bf16.msra.mxu0 0
    %864 = vmatprep.subr.bf16.mxu0 0
    %865 = vmatpush2.bf16.msra.mxu0 0
    %866 = vmatprep.subr.bf16.mxu0 0
    %867 = vmatpush2.bf16.msra.mxu0 0
    %868 = vmatprep.subr.bf16.mxu0 0
    %869 = vmatpush2.bf16.msra.mxu0 0
    %870 = vmatprep.subr.bf16.mxu0 0
    %871 = vmatpush2.bf16.msra.mxu0 0
    %872 = vmatprep.subr.bf16.mxu0 0
    %873 = vmatpush2.bf16.msra.mxu0 0
    %874 = vmatprep.subr.bf16.mxu0 0
    %875 = vmatpush2.bf16.msra.mxu0 0
    %876 = vmatprep.subr.bf16.mxu0 0
    %877 = vmatpush2.bf16.msra.mxu0 0
    %878 = vmatprep.mubr.bf16.mxu0 0
    %879 = vmatmul.mubr.bf16.gmra.mxu0 0
    %v880 = vpop.f32.mrf.mxu0
    %v881 = vadd.f32 0.0, %v880
    %v882 = vpop.f32.mrf.mxu0
    %v883 = vadd.f32 0.0, %v882
    %v884 = vpop.f32.mrf.mxu0
    %v885 = vpop.f32.mrf.mxu0
    %886 = vdwg.mxu0
    %887 = vmatprep.subr.bf16.mxu0 %v813
    %888 = vmatpush1.bf16.msra.mxu0 %v812
    %889 = vmatprep.subr.bf16.mxu0 %v809
    %890 = vmatpush1.bf16.msra.mxu0 %v808
    %891 = vmatprep.subr.bf16.mxu0 %v805
    %892 = vmatpush1.bf16.msra.mxu0 %v804
    %893 = vmatprep.subr.bf16.mxu0 %v801
    %894 = vmatpush1.bf16.msra.mxu0 %v800
    %895 = vmatprep.subr.bf16.mxu0 %v797
    %896 = vmatpush1.bf16.msra.mxu0 %v796
    %897 = vmatprep.subr.bf16.mxu0 %v793
    %898 = vmatpush1.bf16.msra.mxu0 %v792
    %899 = vmatprep.subr.bf16.mxu0 %v789
    %900 = vmatpush1.bf16.msra.mxu0 %v788
    %901 = vmatprep.subr.bf16.mxu0 %v785
    %902 = vmatpush1.bf16.msra.mxu0 %v784
    %903 = vmatprep.subr.bf16.mxu0 0
    %904 = vmatpush2.bf16.msra.mxu0 0
    %905 = vmatprep.subr.bf16.mxu0 0
    %906 = vmatpush2.bf16.msra.mxu0 0
    %907 = vmatprep.subr.bf16.mxu0 0
    %908 = vmatpush2.bf16.msra.mxu0 0
    %909 = vmatprep.subr.bf16.mxu0 0
    %910 = vmatpush2.bf16.msra.mxu0 0
    %911 = vmatprep.subr.bf16.mxu0 0
    %912 = vmatpush2.bf16.msra.mxu0 0
    %913 = vmatprep.subr.bf16.mxu0 0
    %914 = vmatpush2.bf16.msra.mxu0 0
    %915 = vmatprep.subr.bf16.mxu0 0
    %916 = vmatpush2.bf16.msra.mxu0 0
    %917 = vmatprep.subr.bf16.mxu0 0
    %918 = vmatpush2.bf16.msra.mxu0 0
    %919 = vmatprep.mubr.bf16.mxu0 0
    %920 = vmatmul.mubr.bf16.gmra.mxu0 0
    %v921 = vpop.f32.mrf.mxu0
    %v922 = vadd.f32 0.0, %v921
    %v923 = vpop.f32.mrf.mxu0
    %v924 = vadd.f32 0.0, %v923
    %v925 = vpop.f32.mrf.mxu0
    %v926 = vpop.f32.mrf.mxu0
    %927 = vdwg.mxu0
    %v928 = vunpack.c.l.bf16 %v684
    %v929 = vunpack.c.h.bf16 %v684
    %v930 = vunpack.c.l.bf16 %v685
    %v931 = vunpack.c.h.bf16 %v685
    %v932 = vadd.f32 %v928, %v881
    %v933 = vadd.f32 %v929, %v883
    %v934 = vadd.f32 %v930, %v922
    %v935 = vadd.f32 %v931, %v924
    %v936 = vxor.u32 %v932, 2147483648
    %v937 = vxor.u32 %v933, 2147483648
    %v938 = vxor.u32 %v934, 2147483648
    %v939 = vmul.f32 %v936, 1.442695
    %v940 = vpow.pop %v939
    %v941 = vmul.f32 %v937, 1.442695
    %v942 = vpow.pop %v941
    %v943 = vmul.f32 %v938, 1.442695
    %v944 = vpow.pop %v943
    %v945 = vadd.f32 %v940, 1.0
    %v946 = vadd.f32 %v942, 1.0
    %v947 = vadd.f32 %v944, 1.0
    %v948 = vrcp.pop %v945
    %v949 = vmul.f32 1.0, %v948
    %v950 = vrcp.pop %v946
    %v951 = vmul.f32 1.0, %v950
    %v952 = vrcp.pop %v947
    %v953 = vmul.f32 1.0, %v952
    %v954 = vtanh.pop %v935
    %v955 = vmul.f32 %v951, 0.0
    %v956 = vmul.f32 %v949, %v954
    %v957 = vadd.f32 %v955, %v956
    %v958 = vtanh.pop %v957
    %v959 = vmul.f32 %v953, %v958
    %v960 = vpack.c.bf16 %v959, %v959
    %961 = vst [vmem:[#allocation3] sm:$0xf] %v960
    %s962 = scalar_lea.vmem [#allocation2], 16
    %v963 = vld [vmem:[%s962] sm:$0xff]
    %v964 = vld [vmem:[%s962 + $0x8] sm:$0xff]
    %965 = vmatprep.subr.bf16.mxu0 %v811
    %966 = vmatpush1.bf16.msra.mxu0 %v810
    %967 = vmatprep.subr.bf16.mxu0 %v807
    %968 = vmatpush1.bf16.msra.mxu0 %v806
    %969 = vmatprep.subr.bf16.mxu0 %v803
    %970 = vmatpush1.bf16.msra.mxu0 %v802
    %971 = vmatprep.subr.bf16.mxu0 %v799
    %972 = vmatpush1.bf16.msra.mxu0 %v798
    %973 = vmatprep.subr.bf16.mxu0 %v795
    %974 = vmatpush1.bf16.msra.mxu0 %v794
    %975 = vmatprep.subr.bf16.mxu0 %v791
    %976 = vmatpush1.bf16.msra.mxu0 %v790
    %977 = vmatprep.subr.bf16.mxu0 %v787
    %978 = vmatpush1.bf16.msra.mxu0 %v786
    %979 = vmatprep.subr.bf16.mxu0 %v783
    %980 = vmatpush1.bf16.msra.mxu0 %v782
    %981 = vmatprep.subr.bf16.mxu0 0
    %982 = vmatpush2.bf16.msra.mxu0 0
    %983 = vmatprep.subr.bf16.mxu0 0
    %984 = vmatpush2.bf16.msra.mxu0 0
    %985 = vmatprep.subr.bf16.mxu0 0
    %986 = vmatpush2.bf16.msra.mxu0 0
    %987 = vmatprep.subr.bf16.mxu0 0
    %988 = vmatpush2.bf16.msra.mxu0 0
    %989 = vmatprep.subr.bf16.mxu0 0
    %990 = vmatpush2.bf16.msra.mxu0 0
    %991 = vmatprep.subr.bf16.mxu0 0
    %992 = vmatpush2.bf16.msra.mxu0 0
    %993 = vmatprep.subr.bf16.mxu0 0
    %994 = vmatpush2.bf16.msra.mxu0 0
    %995 = vmatprep.subr.bf16.mxu0 0
    %996 = vmatpush2.bf16.msra.mxu0 0
    %997 = vmatprep.mubr.bf16.mxu0 0
    %998 = vmatmul.mubr.bf16.gmra.mxu0 %v960
    %v999 = vpop.f32.mrf.mxu0
    %v1000 = vadd.f32 0.0, %v999
    %v1001 = vpop.f32.mrf.mxu0
    %v1002 = vadd.f32 0.0, %v1001
    %v1003 = vpop.f32.mrf.mxu0
    %v1004 = vpop.f32.mrf.mxu0
    %1005 = vdwg.mxu0
    %1006 = vmatprep.subr.bf16.mxu0 %v813
    %1007 = vmatpush1.bf16.msra.mxu0 %v812
    %1008 = vmatprep.subr.bf16.mxu0 %v809
    %1009 = vmatpush1.bf16.msra.mxu0 %v808
    %1010 = vmatprep.subr.bf16.mxu0 %v805
    %1011 = vmatpush1.bf16.msra.mxu0 %v804
    %1012 = vmatprep.subr.bf16.mxu0 %v801
    %1013 = vmatpush1.bf16.msra.mxu0 %v800
    %1014 = vmatprep.subr.bf16.mxu0 %v797
    %1015 = vmatpush1.bf16.msra.mxu0 %v796
    %1016 = vmatprep.subr.bf16.mxu0 %v793
    %1017 = vmatpush1.bf16.msra.mxu0 %v792
    %1018 = vmatprep.subr.bf16.mxu0 %v789
    %1019 = vmatpush1.bf16.msra.mxu0 %v788
    %1020 = vmatprep.subr.bf16.mxu0 %v785
    %1021 = vmatpush1.bf16.msra.mxu0 %v784
    %1022 = vmatprep.subr.bf16.mxu0 0
    %1023 = vmatpush2.bf16.msra.mxu0 0
    %1024 = vmatprep.subr.bf16.mxu0 0
    %1025 = vmatpush2.bf16.msra.mxu0 0
    %1026 = vmatprep.subr.bf16.mxu0 0
    %1027 = vmatpush2.bf16.msra.mxu0 0
    %1028 = vmatprep.subr.bf16.mxu0 0
    %1029 = vmatpush2.bf16.msra.mxu0 0
    %1030 = vmatprep.subr.bf16.mxu0 0
    %1031 = vmatpush2.bf16.msra.mxu0 0
    %1032 = vmatprep.subr.bf16.mxu0 0
    %1033 = vmatpush2.bf16.msra.mxu0 0
    %1034 = vmatprep.subr.bf16.mxu0 0
    %1035 = vmatpush2.bf16.msra.mxu0 0
    %1036 = vmatprep.subr.bf16.mxu0 0
    %1037 = vmatpush2.bf16.msra.mxu0 0
    %1038 = vmatprep.mubr.bf16.mxu0 0
    %1039 = vmatmul.mubr.bf16.gmra.mxu0 %v960
    %v1040 = vpop.f32.mrf.mxu0
    %v1041 = vadd.f32 0.0, %v1040
    %v1042 = vpop.f32.mrf.mxu0
    %v1043 = vadd.f32 0.0, %v1042
    %v1044 = vpop.f32.mrf.mxu0
    %v1045 = vpop.f32.mrf.mxu0
    %1046 = vdwg.mxu0
    %v1047 = vunpack.c.l.bf16 %v963
    %v1048 = vunpack.c.h.bf16 %v963
    %v1049 = vunpack.c.l.bf16 %v964
    %v1050 = vunpack.c.h.bf16 %v964
    %v1051 = vadd.f32 %v1047, %v1000
    %v1052 = vadd.f32 %v1048, %v1002
    %v1053 = vadd.f32 %v1049, %v1041
    %v1054 = vadd.f32 %v1050, %v1043
    %v1055 = vxor.u32 %v1051, 2147483648
    %v1056 = vxor.u32 %v1052, 2147483648
    %v1057 = vxor.u32 %v1053, 2147483648
    %v1058 = vmul.f32 %v1055, 1.442695
    %v1059 = vpow.pop %v1058
    %v1060 = vmul.f32 %v1056, 1.442695
    %v1061 = vpow.pop %v1060
    %v1062 = vmul.f32 %v1057, 1.442695
    %v1063 = vpow.pop %v1062
    %v1064 = vadd.f32 %v1059, 1.0
    %v1065 = vadd.f32 %v1061, 1.0
    %v1066 = vadd.f32 %v1063, 1.0
    %v1067 = vrcp.pop %v1064
    %v1068 = vmul.f32 1.0, %v1067
    %v1069 = vrcp.pop %v1065
    %v1070 = vmul.f32 1.0, %v1069
    %v1071 = vrcp.pop %v1066
    %v1072 = vmul.f32 1.0, %v1071
    %v1073 = vtanh.pop %v1054
    %v1074 = vmul.f32 %v1070, %v957
    %v1075 = vmul.f32 %v1068, %v1073
    %v1076 = vadd.f32 %v1074, %v1075
    %v1077 = vtanh.pop %v1076
    %v1078 = vmul.f32 %v1072, %v1077
    %v1079 = vpack.c.bf16 %v1078, %v1078
    %s1080 = scalar_lea.vmem [#allocation3], 4
    %1081 = vst [vmem:[%s1080] sm:$0xf] %v1079
    %s1082 = scalar_lea.vmem [#allocation2], 32
    %v1083 = vld [vmem:[%s1082] sm:$0xff]
    %v1084 = vld [vmem:[%s1082 + $0x8] sm:$0xff]
    %1085 = vmatprep.subr.bf16.mxu0 %v811
    %1086 = vmatpush1.bf16.msra.mxu0 %v810
    %1087 = vmatprep.subr.bf16.mxu0 %v807
    %1088 = vmatpush1.bf16.msra.mxu0 %v806
    %1089 = vmatprep.subr.bf16.mxu0 %v803
    %1090 = vmatpush1.bf16.msra.mxu0 %v802
    %1091 = vmatprep.subr.bf16.mxu0 %v799
    %1092 = vmatpush1.bf16.msra.mxu0 %v798
    %1093 = vmatprep.subr.bf16.mxu0 %v795
    %1094 = vmatpush1.bf16.msra.mxu0 %v794
    %1095 = vmatprep.subr.bf16.mxu0 %v791
    %1096 = vmatpush1.bf16.msra.mxu0 %v790
    %1097 = vmatprep.subr.bf16.mxu0 %v787
    %1098 = vmatpush1.bf16.msra.mxu0 %v786
    %1099 = vmatprep.subr.bf16.mxu0 %v783
    %1100 = vmatpush1.bf16.msra.mxu0 %v782
    %1101 = vmatprep.subr.bf16.mxu0 0
    %1102 = vmatpush2.bf16.msra.mxu0 0
    %1103 = vmatprep.subr.bf16.mxu0 0
    %1104 = vmatpush2.bf16.msra.mxu0 0
    %1105 = vmatprep.subr.bf16.mxu0 0
    %1106 = vmatpush2.bf16.msra.mxu0 0
    %1107 = vmatprep.subr.bf16.mxu0 0
    %1108 = vmatpush2.bf16.msra.mxu0 0
    %1109 = vmatprep.subr.bf16.mxu0 0
    %1110 = vmatpush2.bf16.msra.mxu0 0
    %1111 = vmatprep.subr.bf16.mxu0 0
    %1112 = vmatpush2.bf16.msra.mxu0 0
    %1113 = vmatprep.subr.bf16.mxu0 0
    %1114 = vmatpush2.bf16.msra.mxu0 0
    %1115 = vmatprep.subr.bf16.mxu0 0
    %1116 = vmatpush2.bf16.msra.mxu0 0
    %1117 = vmatprep.mubr.bf16.mxu0 0
    %1118 = vmatmul.mubr.bf16.gmra.mxu0 %v1079
    %v1119 = vpop.f32.mrf.mxu0
    %v1120 = vadd.f32 0.0, %v1119
    %v1121 = vpop.f32.mrf.mxu0
    %v1122 = vadd.f32 0.0, %v1121
    %v1123 = vpop.f32.mrf.mxu0
    %v1124 = vpop.f32.mrf.mxu0
    %1125 = vdwg.mxu0
    %1126 = vmatprep.subr.bf16.mxu0 %v813
    %1127 = vmatpush1.bf16.msra.mxu0 %v812
    %1128 = vmatprep.subr.bf16.mxu0 %v809
    %1129 = vmatpush1.bf16.msra.mxu0 %v808
    %1130 = vmatprep.subr.bf16.mxu0 %v805
    %1131 = vmatpush1.bf16.msra.mxu0 %v804
    %1132 = vmatprep.subr.bf16.mxu0 %v801
    %1133 = vmatpush1.bf16.msra.mxu0 %v800
    %1134 = vmatprep.subr.bf16.mxu0 %v797
    %1135 = vmatpush1.bf16.msra.mxu0 %v796
    %1136 = vmatprep.subr.bf16.mxu0 %v793
    %1137 = vmatpush1.bf16.msra.mxu0 %v792
    %1138 = vmatprep.subr.bf16.mxu0 %v789
    %1139 = vmatpush1.bf16.msra.mxu0 %v788
    %1140 = vmatprep.subr.bf16.mxu0 %v785
    %1141 = vmatpush1.bf16.msra.mxu0 %v784
    %1142 = vmatprep.subr.bf16.mxu0 0
    %1143 = vmatpush2.bf16.msra.mxu0 0
    %1144 = vmatprep.subr.bf16.mxu0 0
    %1145 = vmatpush2.bf16.msra.mxu0 0
    %1146 = vmatprep.subr.bf16.mxu0 0
    %1147 = vmatpush2.bf16.msra.mxu0 0
    %1148 = vmatprep.subr.bf16.mxu0 0
    %1149 = vmatpush2.bf16.msra.mxu0 0
    %1150 = vmatprep.subr.bf16.mxu0 0
    %1151 = vmatpush2.bf16.msra.mxu0 0
    %1152 = vmatprep.subr.bf16.mxu0 0
    %1153 = vmatpush2.bf16.msra.mxu0 0
    %1154 = vmatprep.subr.bf16.mxu0 0
    %1155 = vmatpush2.bf16.msra.mxu0 0
    %1156 = vmatprep.subr.bf16.mxu0 0
    %1157 = vmatpush2.bf16.msra.mxu0 0
    %1158 = vmatprep.mubr.bf16.mxu0 0
    %1159 = vmatmul.mubr.bf16.gmra.mxu0 %v1079
    %v1160 = vpop.f32.mrf.mxu0
    %v1161 = vadd.f32 0.0, %v1160
    %v1162 = vpop.f32.mrf.mxu0
    %v1163 = vadd.f32 0.0, %v1162
    %v1164 = vpop.f32.mrf.mxu0
    %v1165 = vpop.f32.mrf.mxu0
    %1166 = vdwg.mxu0
    %v1167 = vunpack.c.l.bf16 %v1083
    %v1168 = vunpack.c.h.bf16 %v1083
    %v1169 = vunpack.c.l.bf16 %v1084
    %v1170 = vunpack.c.h.bf16 %v1084
    %v1171 = vadd.f32 %v1167, %v1120
    %v1172 = vadd.f32 %v1168, %v1122
    %v1173 = vadd.f32 %v1169, %v1161
    %v1174 = vadd.f32 %v1170, %v1163
    %v1175 = vxor.u32 %v1171, 2147483648
    %v1176 = vxor.u32 %v1172, 2147483648
    %v1177 = vxor.u32 %v1173, 2147483648
    %v1178 = vmul.f32 %v1175, 1.442695
    %v1179 = vpow.pop %v1178
    %v1180 = vmul.f32 %v1176, 1.442695
    %v1181 = vpow.pop %v1180
    %v1182 = vmul.f32 %v1177, 1.442695
    %v1183 = vpow.pop %v1182
    %v1184 = vadd.f32 %v1179, 1.0
    %v1185 = vadd.f32 %v1181, 1.0
    %v1186 = vadd.f32 %v1183, 1.0
    %v1187 = vrcp.pop %v1184
    %v1188 = vmul.f32 1.0, %v1187
    %v1189 = vrcp.pop %v1185
    %v1190 = vmul.f32 1.0, %v1189
    %v1191 = vrcp.pop %v1186
    %v1192 = vmul.f32 1.0, %v1191
    %v1193 = vtanh.pop %v1174
    %v1194 = vmul.f32 %v1190, %v1076
    %v1195 = vmul.f32 %v1188, %v1193
    %v1196 = vadd.f32 %v1194, %v1195
    %v1197 = vtanh.pop %v1196
    %v1198 = vmul.f32 %v1192, %v1197
    %v1199 = vpack.c.bf16 %v1198, %v1198
    %s1200 = scalar_lea.vmem [#allocation3], 8
    %1201 = vst [vmem:[%s1200] sm:$0xf] %v1199
    %s1202 = scalar_lea.vmem [#allocation2], 48
    %v1203 = vld [vmem:[%s1202] sm:$0xff]
    %v1204 = vld [vmem:[%s1202 + $0x8] sm:$0xff]
    %1205 = vmatprep.subr.bf16.mxu0 %v811
    %1206 = vmatpush1.bf16.msra.mxu0 %v810
    %1207 = vmatprep.subr.bf16.mxu0 %v807
    %1208 = vmatpush1.bf16.msra.mxu0 %v806
    %1209 = vmatprep.subr.bf16.mxu0 %v803
    %1210 = vmatpush1.bf16.msra.mxu0 %v802
    %1211 = vmatprep.subr.bf16.mxu0 %v799
    %1212 = vmatpush1.bf16.msra.mxu0 %v798
    %1213 = vmatprep.subr.bf16.mxu0 %v795
    %1214 = vmatpush1.bf16.msra.mxu0 %v794
    %1215 = vmatprep.subr.bf16.mxu0 %v791
    %1216 = vmatpush1.bf16.msra.mxu0 %v790
    %1217 = vmatprep.subr.bf16.mxu0 %v787
    %1218 = vmatpush1.bf16.msra.mxu0 %v786
    %1219 = vmatprep.subr.bf16.mxu0 %v783
    %1220 = vmatpush1.bf16.msra.mxu0 %v782
    %1221 = vmatprep.subr.bf16.mxu0 0
    %1222 = vmatpush2.bf16.msra.mxu0 0
    %1223 = vmatprep.subr.bf16.mxu0 0
    %1224 = vmatpush2.bf16.msra.mxu0 0
    %1225 = vmatprep.subr.bf16.mxu0 0
    %1226 = vmatpush2.bf16.msra.mxu0 0
    %1227 = vmatprep.subr.bf16.mxu0 0
    %1228 = vmatpush2.bf16.msra.mxu0 0
    %1229 = vmatprep.subr.bf16.mxu0 0
    %1230 = vmatpush2.bf16.msra.mxu0 0
    %1231 = vmatprep.subr.bf16.mxu0 0
    %1232 = vmatpush2.bf16.msra.mxu0 0
    %1233 = vmatprep.subr.bf16.mxu0 0
    %1234 = vmatpush2.bf16.msra.mxu0 0
    %1235 = vmatprep.subr.bf16.mxu0 0
    %1236 = vmatpush2.bf16.msra.mxu0 0
    %1237 = vmatprep.mubr.bf16.mxu0 0
    %1238 = vmatmul.mubr.bf16.gmra.mxu0 %v1199
    %v1239 = vpop.f32.mrf.mxu0
    %v1240 = vadd.f32 0.0, %v1239
    %v1241 = vpop.f32.mrf.mxu0
    %v1242 = vadd.f32 0.0, %v1241
    %v1243 = vpop.f32.mrf.mxu0
    %v1244 = vpop.f32.mrf.mxu0
    %1245 = vdwg.mxu0
    %1246 = vmatprep.subr.bf16.mxu0 %v813
    %1247 = vmatpush1.bf16.msra.mxu0 %v812
    %1248 = vmatprep.subr.bf16.mxu0 %v809
    %1249 = vmatpush1.bf16.msra.mxu0 %v808
    %1250 = vmatprep.subr.bf16.mxu0 %v805
    %1251 = vmatpush1.bf16.msra.mxu0 %v804
    %1252 = vmatprep.subr.bf16.mxu0 %v801
    %1253 = vmatpush1.bf16.msra.mxu0 %v800
    %1254 = vmatprep.subr.bf16.mxu0 %v797
    %1255 = vmatpush1.bf16.msra.mxu0 %v796
    %1256 = vmatprep.subr.bf16.mxu0 %v793
    %1257 = vmatpush1.bf16.msra.mxu0 %v792
    %1258 = vmatprep.subr.bf16.mxu0 %v789
    %1259 = vmatpush1.bf16.msra.mxu0 %v788
    %1260 = vmatprep.subr.bf16.mxu0 %v785
    %1261 = vmatpush1.bf16.msra.mxu0 %v784
    %1262 = vmatprep.subr.bf16.mxu0 0
    %1263 = vmatpush2.bf16.msra.mxu0 0
    %1264 = vmatprep.subr.bf16.mxu0 0
    %1265 = vmatpush2.bf16.msra.mxu0 0
    %1266 = vmatprep.subr.bf16.mxu0 0
    %1267 = vmatpush2.bf16.msra.mxu0 0
    %1268 = vmatprep.subr.bf16.mxu0 0
    %1269 = vmatpush2.bf16.msra.mxu0 0
    %1270 = vmatprep.subr.bf16.mxu0 0
    %1271 = vmatpush2.bf16.msra.mxu0 0
    %1272 = vmatprep.subr.bf16.mxu0 0
    %1273 = vmatpush2.bf16.msra.mxu0 0
    %1274 = vmatprep.subr.bf16.mxu0 0
    %1275 = vmatpush2.bf16.msra.mxu0 0
    %1276 = vmatprep.subr.bf16.mxu0 0
    %1277 = vmatpush2.bf16.msra.mxu0 0
    %1278 = vmatprep.mubr.bf16.mxu0 0
    %1279 = vmatmul.mubr.bf16.gmra.mxu0 %v1199
    %v1280 = vpop.f32.mrf.mxu0
    %v1281 = vadd.f32 0.0, %v1280
    %v1282 = vpop.f32.mrf.mxu0
    %v1283 = vadd.f32 0.0, %v1282
    %v1284 = vpop.f32.mrf.mxu0
    %v1285 = vpop.f32.mrf.mxu0
    %1286 = vdwg.mxu0
    %v1287 = vunpack.c.l.bf16 %v1203
    %v1288 = vunpack.c.h.bf16 %v1203
    %v1289 = vunpack.c.l.bf16 %v1204
    %v1290 = vunpack.c.h.bf16 %v1204
    %v1291 = vadd.f32 %v1287, %v1240
    %v1292 = vadd.f32 %v1288, %v1242
    %v1293 = vadd.f32 %v1289, %v1281
    %v1294 = vadd.f32 %v1290, %v1283
    %v1295 = vxor.u32 %v1291, 2147483648
    %v1296 = vxor.u32 %v1292, 2147483648
    %v1297 = vxor.u32 %v1293, 2147483648
    %v1298 = vmul.f32 %v1295, 1.442695
    %v1299 = vpow.pop %v1298
    %v1300 = vmul.f32 %v1296, 1.442695
    %v1301 = vpow.pop %v1300
    %v1302 = vmul.f32 %v1297, 1.442695
    %v1303 = vpow.pop %v1302
    %v1304 = vadd.f32 %v1299, 1.0
    %v1305 = vadd.f32 %v1301, 1.0
    %v1306 = vadd.f32 %v1303, 1.0
    %v1307 = vrcp.pop %v1304
    %v1308 = vmul.f32 1.0, %v1307
    %v1309 = vrcp.pop %v1305
    %v1310 = vmul.f32 1.0, %v1309
    %v1311 = vrcp.pop %v1306
    %v1312 = vmul.f32 1.0, %v1311
    %v1313 = vtanh.pop %v1294
    %v1314 = vmul.f32 %v1310, %v1196
    %v1315 = vmul.f32 %v1308, %v1313
    %v1316 = vadd.f32 %v1314, %v1315
    %v1317 = vtanh.pop %v1316
    %v1318 = vmul.f32 %v1312, %v1317
    %v1319 = vpack.c.bf16 %v1318, %v1318
    %s1320 = scalar_lea.vmem [#allocation3], 12
    %1321 = vst [vmem:[%s1320] sm:$0xf] %v1319
    %s1322 = scalar_lea.vmem [#allocation2], 64
    %v1323 = vld [vmem:[%s1322] sm:$0xff]
    %v1324 = vld [vmem:[%s1322 + $0x8] sm:$0xff]
    %1325 = vmatprep.subr.bf16.mxu0 %v811
    %1326 = vmatpush1.bf16.msra.mxu0 %v810
    %1327 = vmatprep.subr.bf16.mxu0 %v807
    %1328 = vmatpush1.bf16.msra.mxu0 %v806
    %1329 = vmatprep.subr.bf16.mxu0 %v803
    %1330 = vmatpush1.bf16.msra.mxu0 %v802
    %1331 = vmatprep.subr.bf16.mxu0 %v799
    %1332 = vmatpush1.bf16.msra.mxu0 %v798
    %1333 = vmatprep.subr.bf16.mxu0 %v795
    %1334 = vmatpush1.bf16.msra.mxu0 %v794
    %1335 = vmatprep.subr.bf16.mxu0 %v791
    %1336 = vmatpush1.bf16.msra.mxu0 %v790
    %1337 = vmatprep.subr.bf16.mxu0 %v787
    %1338 = vmatpush1.bf16.msra.mxu0 %v786
    %1339 = vmatprep.subr.bf16.mxu0 %v783
    %1340 = vmatpush1.bf16.msra.mxu0 %v782
    %1341 = vmatprep.subr.bf16.mxu0 0
    %1342 = vmatpush2.bf16.msra.mxu0 0
    %1343 = vmatprep.subr.bf16.mxu0 0
    %1344 = vmatpush2.bf16.msra.mxu0 0
    %1345 = vmatprep.subr.bf16.mxu0 0
    %1346 = vmatpush2.bf16.msra.mxu0 0
    %1347 = vmatprep.subr.bf16.mxu0 0
    %1348 = vmatpush2.bf16.msra.mxu0 0
    %1349 = vmatprep.subr.bf16.mxu0 0
    %1350 = vmatpush2.bf16.msra.mxu0 0
    %1351 = vmatprep.subr.bf16.mxu0 0
    %1352 = vmatpush2.bf16.msra.mxu0 0
    %1353 = vmatprep.subr.bf16.mxu0 0
    %1354 = vmatpush2.bf16.msra.mxu0 0
    %1355 = vmatprep.subr.bf16.mxu0 0
    %1356 = vmatpush2.bf16.msra.mxu0 0
    %1357 = vmatprep.mubr.bf16.mxu0 0
    %1358 = vmatmul.mubr.bf16.gmra.mxu0 %v1319
    %v1359 = vpop.f32.mrf.mxu0
    %v1360 = vadd.f32 0.0, %v1359
    %v1361 = vpop.f32.mrf.mxu0
    %v1362 = vadd.f32 0.0, %v1361
    %v1363 = vpop.f32.mrf.mxu0
    %v1364 = vpop.f32.mrf.mxu0
    %1365 = vdwg.mxu0
    %1366 = vmatprep.subr.bf16.mxu0 %v813
    %1367 = vmatpush1.bf16.msra.mxu0 %v812
    %1368 = vmatprep.subr.bf16.mxu0 %v809
    %1369 = vmatpush1.bf16.msra.mxu0 %v808
    %1370 = vmatprep.subr.bf16.mxu0 %v805
    %1371 = vmatpush1.bf16.msra.mxu0 %v804
    %1372 = vmatprep.subr.bf16.mxu0 %v801
    %1373 = vmatpush1.bf16.msra.mxu0 %v800
    %1374 = vmatprep.subr.bf16.mxu0 %v797
    %1375 = vmatpush1.bf16.msra.mxu0 %v796
    %1376 = vmatprep.subr.bf16.mxu0 %v793
    %1377 = vmatpush1.bf16.msra.mxu0 %v792
    %1378 = vmatprep.subr.bf16.mxu0 %v789
    %1379 = vmatpush1.bf16.msra.mxu0 %v788
    %1380 = vmatprep.subr.bf16.mxu0 %v785
    %1381 = vmatpush1.bf16.msra.mxu0 %v784
    %1382 = vmatprep.subr.bf16.mxu0 0
    %1383 = vmatpush2.bf16.msra.mxu0 0
    %1384 = vmatprep.subr.bf16.mxu0 0
    %1385 = vmatpush2.bf16.msra.mxu0 0
    %1386 = vmatprep.subr.bf16.mxu0 0
    %1387 = vmatpush2.bf16.msra.mxu0 0
    %1388 = vmatprep.subr.bf16.mxu0 0
    %1389 = vmatpush2.bf16.msra.mxu0 0
    %1390 = vmatprep.subr.bf16.mxu0 0
    %1391 = vmatpush2.bf16.msra.mxu0 0
    %1392 = vmatprep.subr.bf16.mxu0 0
    %1393 = vmatpush2.bf16.msra.mxu0 0
    %1394 = vmatprep.subr.bf16.mxu0 0
    %1395 = vmatpush2.bf16.msra.mxu0 0
    %1396 = vmatprep.subr.bf16.mxu0 0
    %1397 = vmatpush2.bf16.msra.mxu0 0
    %1398 = vmatprep.mubr.bf16.mxu0 0
    %1399 = vmatmul.mubr.bf16.gmra.mxu0 %v1319
    %v1400 = vpop.f32.mrf.mxu0
    %v1401 = vadd.f32 0.0, %v1400
    %v1402 = vpop.f32.mrf.mxu0
    %v1403 = vadd.f32 0.0, %v1402
    %v1404 = vpop.f32.mrf.mxu0
    %v1405 = vpop.f32.mrf.mxu0
    %1406 = vdwg.mxu0
    %v1407 = vunpack.c.l.bf16 %v1323
    %v1408 = vunpack.c.h.bf16 %v1323
    %v1409 = vunpack.c.l.bf16 %v1324
    %v1410 = vunpack.c.h.bf16 %v1324
    %v1411 = vadd.f32 %v1407, %v1360
    %v1412 = vadd.f32 %v1408, %v1362
    %v1413 = vadd.f32 %v1409, %v1401
    %v1414 = vadd.f32 %v1410, %v1403
    %v1415 = vxor.u32 %v1411, 2147483648
    %v1416 = vxor.u32 %v1412, 2147483648
    %v1417 = vxor.u32 %v1413, 2147483648
    %v1418 = vmul.f32 %v1415, 1.442695
    %v1419 = vpow.pop %v1418
    %v1420 = vmul.f32 %v1416, 1.442695
    %v1421 = vpow.pop %v1420
    %v1422 = vmul.f32 %v1417, 1.442695
    %v1423 = vpow.pop %v1422
    %v1424 = vadd.f32 %v1419, 1.0
    %v1425 = vadd.f32 %v1421, 1.0
    %v1426 = vadd.f32 %v1423, 1.0
    %v1427 = vrcp.pop %v1424
    %v1428 = vmul.f32 1.0, %v1427
    %v1429 = vrcp.pop %v1425
    %v1430 = vmul.f32 1.0, %v1429
    %v1431 = vrcp.pop %v1426
    %v1432 = vmul.f32 1.0, %v1431
    %v1433 = vtanh.pop %v1414
    %v1434 = vmul.f32 %v1430, %v1316
    %v1435 = vmul.f32 %v1428, %v1433
    %v1436 = vadd.f32 %v1434, %v1435
    %v1437 = vtanh.pop %v1436
    %v1438 = vmul.f32 %v1432, %v1437
    %v1439 = vpack.c.bf16 %v1438, %v1438
    %s1440 = scalar_lea.vmem [#allocation3], 16
    %1441 = vst [vmem:[%s1440] sm:$0xf] %v1439
    %s1442 = scalar_lea.vmem [#allocation2], 80
    %v1443 = vld [vmem:[%s1442] sm:$0xff]
    %v1444 = vld [vmem:[%s1442 + $0x8] sm:$0xff]
    %1445 = vmatprep.subr.bf16.mxu0 %v811
    %1446 = vmatpush1.bf16.msra.mxu0 %v810
    %1447 = vmatprep.subr.bf16.mxu0 %v807
    %1448 = vmatpush1.bf16.msra.mxu0 %v806
    %1449 = vmatprep.subr.bf16.mxu0 %v803
    %1450 = vmatpush1.bf16.msra.mxu0 %v802
    %1451 = vmatprep.subr.bf16.mxu0 %v799
    %1452 = vmatpush1.bf16.msra.mxu0 %v798
    %1453 = vmatprep.subr.bf16.mxu0 %v795
    %1454 = vmatpush1.bf16.msra.mxu0 %v794
    %1455 = vmatprep.subr.bf16.mxu0 %v791
    %1456 = vmatpush1.bf16.msra.mxu0 %v790
    %1457 = vmatprep.subr.bf16.mxu0 %v787
    %1458 = vmatpush1.bf16.msra.mxu0 %v786
    %1459 = vmatprep.subr.bf16.mxu0 %v783
    %1460 = vmatpush1.bf16.msra.mxu0 %v782
    %1461 = vmatprep.subr.bf16.mxu0 0
    %1462 = vmatpush2.bf16.msra.mxu0 0
    %1463 = vmatprep.subr.bf16.mxu0 0
    %1464 = vmatpush2.bf16.msra.mxu0 0
    %1465 = vmatprep.subr.bf16.mxu0 0
    %1466 = vmatpush2.bf16.msra.mxu0 0
    %1467 = vmatprep.subr.bf16.mxu0 0
    %1468 = vmatpush2.bf16.msra.mxu0 0
    %1469 = vmatprep.subr.bf16.mxu0 0
    %1470 = vmatpush2.bf16.msra.mxu0 0
    %1471 = vmatprep.subr.bf16.mxu0 0
    %1472 = vmatpush2.bf16.msra.mxu0 0
    %1473 = vmatprep.subr.bf16.mxu0 0
    %1474 = vmatpush2.bf16.msra.mxu0 0
    %1475 = vmatprep.subr.bf16.mxu0 0
    %1476 = vmatpush2.bf16.msra.mxu0 0
    %1477 = vmatprep.mubr.bf16.mxu0 0
    %1478 = vmatmul.mubr.bf16.gmra.mxu0 %v1439
    %v1479 = vpop.f32.mrf.mxu0
    %v1480 = vadd.f32 0.0, %v1479
    %v1481 = vpop.f32.mrf.mxu0
    %v1482 = vadd.f32 0.0, %v1481
    %v1483 = vpop.f32.mrf.mxu0
    %v1484 = vpop.f32.mrf.mxu0
    %1485 = vdwg.mxu0
    %1486 = vmatprep.subr.bf16.mxu0 %v813
    %1487 = vmatpush1.bf16.msra.mxu0 %v812
    %1488 = vmatprep.subr.bf16.mxu0 %v809
    %1489 = vmatpush1.bf16.msra.mxu0 %v808
    %1490 = vmatprep.subr.bf16.mxu0 %v805
    %1491 = vmatpush1.bf16.msra.mxu0 %v804
    %1492 = vmatprep.subr.bf16.mxu0 %v801
    %1493 = vmatpush1.bf16.msra.mxu0 %v800
    %1494 = vmatprep.subr.bf16.mxu0 %v797
    %1495 = vmatpush1.bf16.msra.mxu0 %v796
    %1496 = vmatprep.subr.bf16.mxu0 %v793
    %1497 = vmatpush1.bf16.msra.mxu0 %v792
    %1498 = vmatprep.subr.bf16.mxu0 %v789
    %1499 = vmatpush1.bf16.msra.mxu0 %v788
    %1500 = vmatprep.subr.bf16.mxu0 %v785
    %1501 = vmatpush1.bf16.msra.mxu0 %v784
    %1502 = vmatprep.subr.bf16.mxu0 0
    %1503 = vmatpush2.bf16.msra.mxu0 0
    %1504 = vmatprep.subr.bf16.mxu0 0
    %1505 = vmatpush2.bf16.msra.mxu0 0
    %1506 = vmatprep.subr.bf16.mxu0 0
    %1507 = vmatpush2.bf16.msra.mxu0 0
    %1508 = vmatprep.subr.bf16.mxu0 0
    %1509 = vmatpush2.bf16.msra.mxu0 0
    %1510 = vmatprep.subr.bf16.mxu0 0
    %1511 = vmatpush2.bf16.msra.mxu0 0
    %1512 = vmatprep.subr.bf16.mxu0 0
    %1513 = vmatpush2.bf16.msra.mxu0 0
    %1514 = vmatprep.subr.bf16.mxu0 0
    %1515 = vmatpush2.bf16.msra.mxu0 0
    %1516 = vmatprep.subr.bf16.mxu0 0
    %1517 = vmatpush2.bf16.msra.mxu0 0
    %1518 = vmatprep.mubr.bf16.mxu0 0
    %1519 = vmatmul.mubr.bf16.gmra.mxu0 %v1439
    %v1520 = vpop.f32.mrf.mxu0
    %v1521 = vadd.f32 0.0, %v1520
    %v1522 = vpop.f32.mrf.mxu0
    %v1523 = vadd.f32 0.0, %v1522
    %v1524 = vpop.f32.mrf.mxu0
    %v1525 = vpop.f32.mrf.mxu0
    %1526 = vdwg.mxu0
    %v1527 = vunpack.c.l.bf16 %v1443
    %v1528 = vunpack.c.h.bf16 %v1443
    %v1529 = vunpack.c.l.bf16 %v1444
    %v1530 = vunpack.c.h.bf16 %v1444
    %v1531 = vadd.f32 %v1527, %v1480
    %v1532 = vadd.f32 %v1528, %v1482
    %v1533 = vadd.f32 %v1529, %v1521
    %v1534 = vadd.f32 %v1530, %v1523
    %v1535 = vxor.u32 %v1531, 2147483648
    %v1536 = vxor.u32 %v1532, 2147483648
    %v1537 = vxor.u32 %v1533, 2147483648
    %v1538 = vmul.f32 %v1535, 1.442695
    %v1539 = vpow.pop %v1538
    %v1540 = vmul.f32 %v1536, 1.442695
    %v1541 = vpow.pop %v1540
    %v1542 = vmul.f32 %v1537, 1.442695
    %v1543 = vpow.pop %v1542
    %v1544 = vadd.f32 %v1539, 1.0
    %v1545 = vadd.f32 %v1541, 1.0
    %v1546 = vadd.f32 %v1543, 1.0
    %v1547 = vrcp.pop %v1544
    %v1548 = vmul.f32 1.0, %v1547
    %v1549 = vrcp.pop %v1545
    %v1550 = vmul.f32 1.0, %v1549
    %v1551 = vrcp.pop %v1546
    %v1552 = vmul.f32 1.0, %v1551
    %v1553 = vtanh.pop %v1534
    %v1554 = vmul.f32 %v1550, %v1436
    %v1555 = vmul.f32 %v1548, %v1553
    %v1556 = vadd.f32 %v1554, %v1555
    %v1557 = vtanh.pop %v1556
    %v1558 = vmul.f32 %v1552, %v1557
    %v1559 = vpack.c.bf16 %v1558, %v1558
    %s1560 = scalar_lea.vmem [#allocation3], 20
    %1561 = vst [vmem:[%s1560] sm:$0xf] %v1559
    %s1562 = scalar_lea.vmem [#allocation2], 96
    %v1563 = vld [vmem:[%s1562] sm:$0xff]
    %v1564 = vld [vmem:[%s1562 + $0x8] sm:$0xff]
    %1565 = vmatprep.subr.bf16.mxu0 %v811
    %1566 = vmatpush1.bf16.msra.mxu0 %v810
    %1567 = vmatprep.subr.bf16.mxu0 %v807
    %1568 = vmatpush1.bf16.msra.mxu0 %v806
    %1569 = vmatprep.subr.bf16.mxu0 %v803
    %1570 = vmatpush1.bf16.msra.mxu0 %v802
    %1571 = vmatprep.subr.bf16.mxu0 %v799
    %1572 = vmatpush1.bf16.msra.mxu0 %v798
    %1573 = vmatprep.subr.bf16.mxu0 %v795
    %1574 = vmatpush1.bf16.msra.mxu0 %v794
    %1575 = vmatprep.subr.bf16.mxu0 %v791
    %1576 = vmatpush1.bf16.msra.mxu0 %v790
    %1577 = vmatprep.subr.bf16.mxu0 %v787
    %1578 = vmatpush1.bf16.msra.mxu0 %v786
    %1579 = vmatprep.subr.bf16.mxu0 %v783
    %1580 = vmatpush1.bf16.msra.mxu0 %v782
    %1581 = vmatprep.subr.bf16.mxu0 0
    %1582 = vmatpush2.bf16.msra.mxu0 0
    %1583 = vmatprep.subr.bf16.mxu0 0
    %1584 = vmatpush2.bf16.msra.mxu0 0
    %1585 = vmatprep.subr.bf16.mxu0 0
    %1586 = vmatpush2.bf16.msra.mxu0 0
    %1587 = vmatprep.subr.bf16.mxu0 0
    %1588 = vmatpush2.bf16.msra.mxu0 0
    %1589 = vmatprep.subr.bf16.mxu0 0
    %1590 = vmatpush2.bf16.msra.mxu0 0
    %1591 = vmatprep.subr.bf16.mxu0 0
    %1592 = vmatpush2.bf16.msra.mxu0 0
    %1593 = vmatprep.subr.bf16.mxu0 0
    %1594 = vmatpush2.bf16.msra.mxu0 0
    %1595 = vmatprep.subr.bf16.mxu0 0
    %1596 = vmatpush2.bf16.msra.mxu0 0
    %1597 = vmatprep.mubr.bf16.mxu0 0
    %1598 = vmatmul.mubr.bf16.gmra.mxu0 %v1559
    %v1599 = vpop.f32.mrf.mxu0
    %v1600 = vadd.f32 0.0, %v1599
    %v1601 = vpop.f32.mrf.mxu0
    %v1602 = vadd.f32 0.0, %v1601
    %v1603 = vpop.f32.mrf.mxu0
    %v1604 = vpop.f32.mrf.mxu0
    %1605 = vdwg.mxu0
    %1606 = vmatprep.subr.bf16.mxu0 %v813
    %1607 = vmatpush1.bf16.msra.mxu0 %v812
    %1608 = vmatprep.subr.bf16.mxu0 %v809
    %1609 = vmatpush1.bf16.msra.mxu0 %v808
    %1610 = vmatprep.subr.bf16.mxu0 %v805
    %1611 = vmatpush1.bf16.msra.mxu0 %v804
    %1612 = vmatprep.subr.bf16.mxu0 %v801
    %1613 = vmatpush1.bf16.msra.mxu0 %v800
    %1614 = vmatprep.subr.bf16.mxu0 %v797
    %1615 = vmatpush1.bf16.msra.mxu0 %v796
    %1616 = vmatprep.subr.bf16.mxu0 %v793
    %1617 = vmatpush1.bf16.msra.mxu0 %v792
    %1618 = vmatprep.subr.bf16.mxu0 %v789
    %1619 = vmatpush1.bf16.msra.mxu0 %v788
    %1620 = vmatprep.subr.bf16.mxu0 %v785
    %1621 = vmatpush1.bf16.msra.mxu0 %v784
    %1622 = vmatprep.subr.bf16.mxu0 0
    %1623 = vmatpush2.bf16.msra.mxu0 0
    %1624 = vmatprep.subr.bf16.mxu0 0
    %1625 = vmatpush2.bf16.msra.mxu0 0
    %1626 = vmatprep.subr.bf16.mxu0 0
    %1627 = vmatpush2.bf16.msra.mxu0 0
    %1628 = vmatprep.subr.bf16.mxu0 0
    %1629 = vmatpush2.bf16.msra.mxu0 0
    %1630 = vmatprep.subr.bf16.mxu0 0
    %1631 = vmatpush2.bf16.msra.mxu0 0
    %1632 = vmatprep.subr.bf16.mxu0 0
    %1633 = vmatpush2.bf16.msra.mxu0 0
    %1634 = vmatprep.subr.bf16.mxu0 0
    %1635 = vmatpush2.bf16.msra.mxu0 0
    %1636 = vmatprep.subr.bf16.mxu0 0
    %1637 = vmatpush2.bf16.msra.mxu0 0
    %1638 = vmatprep.mubr.bf16.mxu0 0
    %1639 = vmatmul.mubr.bf16.gmra.mxu0 %v1559
    %v1640 = vpop.f32.mrf.mxu0
    %v1641 = vadd.f32 0.0, %v1640
    %v1642 = vpop.f32.mrf.mxu0
    %v1643 = vadd.f32 0.0, %v1642
    %v1644 = vpop.f32.mrf.mxu0
    %v1645 = vpop.f32.mrf.mxu0
    %1646 = vdwg.mxu0
    %v1647 = vunpack.c.l.bf16 %v1563
    %v1648 = vunpack.c.h.bf16 %v1563
    %v1649 = vunpack.c.l.bf16 %v1564
    %v1650 = vunpack.c.h.bf16 %v1564
    %v1651 = vadd.f32 %v1647, %v1600
    %v1652 = vadd.f32 %v1648, %v1602
    %v1653 = vadd.f32 %v1649, %v1641
    %v1654 = vadd.f32 %v1650, %v1643
    %v1655 = vxor.u32 %v1651, 2147483648
    %v1656 = vxor.u32 %v1652, 2147483648
    %v1657 = vxor.u32 %v1653, 2147483648
    %v1658 = vmul.f32 %v1655, 1.442695
    %v1659 = vpow.pop %v1658
    %v1660 = vmul.f32 %v1656, 1.442695
    %v1661 = vpow.pop %v1660
    %v1662 = vmul.f32 %v1657, 1.442695
    %v1663 = vpow.pop %v1662
    %v1664 = vadd.f32 %v1659, 1.0
    %v1665 = vadd.f32 %v1661, 1.0
    %v1666 = vadd.f32 %v1663, 1.0
    %v1667 = vrcp.pop %v1664
    %v1668 = vmul.f32 1.0, %v1667
    %v1669 = vrcp.pop %v1665
    %v1670 = vmul.f32 1.0, %v1669
    %v1671 = vrcp.pop %v1666
    %v1672 = vmul.f32 1.0, %v1671
    %v1673 = vtanh.pop %v1654
    %v1674 = vmul.f32 %v1670, %v1556
    %v1675 = vmul.f32 %v1668, %v1673
    %v1676 = vadd.f32 %v1674, %v1675
    %v1677 = vtanh.pop %v1676
    %v1678 = vmul.f32 %v1672, %v1677
    %v1679 = vpack.c.bf16 %v1678, %v1678
    %s1680 = scalar_lea.vmem [#allocation3], 24
    %1681 = vst [vmem:[%s1680] sm:$0xf] %v1679
    %s1682 = scalar_lea.vmem [#allocation2], 112
    %v1683 = vld [vmem:[%s1682] sm:$0xff]
    %v1684 = vld [vmem:[%s1682 + $0x8] sm:$0xff]
    %1685 = vmatprep.subr.bf16.mxu0 %v811
    %1686 = vmatpush1.bf16.msra.mxu0 %v810
    %1687 = vmatprep.subr.bf16.mxu0 %v807
    %1688 = vmatpush1.bf16.msra.mxu0 %v806
    %1689 = vmatprep.subr.bf16.mxu0 %v803
    %1690 = vmatpush1.bf16.msra.mxu0 %v802
    %1691 = vmatprep.subr.bf16.mxu0 %v799
    %1692 = vmatpush1.bf16.msra.mxu0 %v798
    %1693 = vmatprep.subr.bf16.mxu0 %v795
    %1694 = vmatpush1.bf16.msra.mxu0 %v794
    %1695 = vmatprep.subr.bf16.mxu0 %v791
    %1696 = vmatpush1.bf16.msra.mxu0 %v790
    %1697 = vmatprep.subr.bf16.mxu0 %v787
    %1698 = vmatpush1.bf16.msra.mxu0 %v786
    %1699 = vmatprep.subr.bf16.mxu0 %v783
    %1700 = vmatpush1.bf16.msra.mxu0 %v782
    %1701 = vmatprep.subr.bf16.mxu0 0
    %1702 = vmatpush2.bf16.msra.mxu0 0
    %1703 = vmatprep.subr.bf16.mxu0 0
    %1704 = vmatpush2.bf16.msra.mxu0 0
    %1705 = vmatprep.subr.bf16.mxu0 0
    %1706 = vmatpush2.bf16.msra.mxu0 0
    %1707 = vmatprep.subr.bf16.mxu0 0
    %1708 = vmatpush2.bf16.msra.mxu0 0
    %1709 = vmatprep.subr.bf16.mxu0 0
    %1710 = vmatpush2.bf16.msra.mxu0 0
    %1711 = vmatprep.subr.bf16.mxu0 0
    %1712 = vmatpush2.bf16.msra.mxu0 0
    %1713 = vmatprep.subr.bf16.mxu0 0
    %1714 = vmatpush2.bf16.msra.mxu0 0
    %1715 = vmatprep.subr.bf16.mxu0 0
    %1716 = vmatpush2.bf16.msra.mxu0 0
    %1717 = vmatprep.mubr.bf16.mxu0 0
    %1718 = vmatmul.mubr.bf16.gmra.mxu0 %v1679
    %v1719 = vpop.f32.mrf.mxu0
    %v1720 = vadd.f32 0.0, %v1719
    %v1721 = vpop.f32.mrf.mxu0
    %v1722 = vadd.f32 0.0, %v1721
    %v1723 = vpop.f32.mrf.mxu0
    %v1724 = vpop.f32.mrf.mxu0
    %1725 = vdwg.mxu0
    %1726 = vmatprep.subr.bf16.mxu0 %v813
    %1727 = vmatpush1.bf16.msra.mxu0 %v812
    %1728 = vmatprep.subr.bf16.mxu0 %v809
    %1729 = vmatpush1.bf16.msra.mxu0 %v808
    %1730 = vmatprep.subr.bf16.mxu0 %v805
    %1731 = vmatpush1.bf16.msra.mxu0 %v804
    %1732 = vmatprep.subr.bf16.mxu0 %v801
    %1733 = vmatpush1.bf16.msra.mxu0 %v800
    %1734 = vmatprep.subr.bf16.mxu0 %v797
    %1735 = vmatpush1.bf16.msra.mxu0 %v796
    %1736 = vmatprep.subr.bf16.mxu0 %v793
    %1737 = vmatpush1.bf16.msra.mxu0 %v792
    %1738 = vmatprep.subr.bf16.mxu0 %v789
    %1739 = vmatpush1.bf16.msra.mxu0 %v788
    %1740 = vmatprep.subr.bf16.mxu0 %v785
    %1741 = vmatpush1.bf16.msra.mxu0 %v784
    %1742 = vmatprep.subr.bf16.mxu0 0
    %1743 = vmatpush2.bf16.msra.mxu0 0
    %1744 = vmatprep.subr.bf16.mxu0 0
    %1745 = vmatpush2.bf16.msra.mxu0 0
    %1746 = vmatprep.subr.bf16.mxu0 0
    %1747 = vmatpush2.bf16.msra.mxu0 0
    %1748 = vmatprep.subr.bf16.mxu0 0
    %1749 = vmatpush2.bf16.msra.mxu0 0
    %1750 = vmatprep.subr.bf16.mxu0 0
    %1751 = vmatpush2.bf16.msra.mxu0 0
    %1752 = vmatprep.subr.bf16.mxu0 0
    %1753 = vmatpush2.bf16.msra.mxu0 0
    %1754 = vmatprep.subr.bf16.mxu0 0
    %1755 = vmatpush2.bf16.msra.mxu0 0
    %1756 = vmatprep.subr.bf16.mxu0 0
    %1757 = vmatpush2.bf16.msra.mxu0 0
    %1758 = vmatprep.mubr.bf16.mxu0 0
    %1759 = vmatmul.mubr.bf16.gmra.mxu0 %v1679
    %v1760 = vpop.f32.mrf.mxu0
    %v1761 = vadd.f32 0.0, %v1760
    %v1762 = vpop.f32.mrf.mxu0
    %v1763 = vadd.f32 0.0, %v1762
    %v1764 = vpop.f32.mrf.mxu0
    %v1765 = vpop.f32.mrf.mxu0
    %1766 = vdwg.mxu0
    %v1767 = vunpack.c.l.bf16 %v1683
    %v1768 = vunpack.c.h.bf16 %v1683
    %v1769 = vunpack.c.l.bf16 %v1684
    %v1770 = vunpack.c.h.bf16 %v1684
    %v1771 = vadd.f32 %v1767, %v1720
    %v1772 = vadd.f32 %v1768, %v1722
    %v1773 = vadd.f32 %v1769, %v1761
    %v1774 = vadd.f32 %v1770, %v1763
    %v1775 = vxor.u32 %v1771, 2147483648
    %v1776 = vxor.u32 %v1772, 2147483648
    %v1777 = vxor.u32 %v1773, 2147483648
    %v1778 = vmul.f32 %v1775, 1.442695
    %v1779 = vpow.pop %v1778
    %v1780 = vmul.f32 %v1776, 1.442695
    %v1781 = vpow.pop %v1780
    %v1782 = vmul.f32 %v1777, 1.442695
    %v1783 = vpow.pop %v1782
    %v1784 = vadd.f32 %v1779, 1.0
    %v1785 = vadd.f32 %v1781, 1.0
    %v1786 = vadd.f32 %v1783, 1.0
    %v1787 = vrcp.pop %v1784
    %v1788 = vmul.f32 1.0, %v1787
    %v1789 = vrcp.pop %v1785
    %v1790 = vmul.f32 1.0, %v1789
    %v1791 = vrcp.pop %v1786
    %v1792 = vmul.f32 1.0, %v1791
    %v1793 = vtanh.pop %v1774
    %v1794 = vmul.f32 %v1790, %v1676
    %v1795 = vmul.f32 %v1788, %v1793
    %v1796 = vadd.f32 %v1794, %v1795
    %v1797 = vtanh.pop %v1796
    %v1798 = vmul.f32 %v1792, %v1797
    %v1799 = vpack.c.bf16 %v1798, %v1798
    %s1800 = scalar_lea.vmem [#allocation3], 28
    %1801 = vst [vmem:[%s1800] sm:$0xf] %v1799
    %v1802 = vunpack.c.l.bf16 %v1799
    %v1803 = vld [vmem:[#allocation3] sm:$0xf]
    %v1804 = vld [vmem:[#allocation3 + $0x4] sm:$0xf]
    %v1805 = vld [vmem:[#allocation3 + $0x8] sm:$0xf]
    %v1806 = vld [vmem:[#allocation3 + $0xc] sm:$0xf]
    %v1807 = vld [vmem:[#allocation3 + $0x10] sm:$0xf]
    %v1808 = vld [vmem:[#allocation3 + $0x14] sm:$0xf]
    %v1809 = vld [vmem:[#allocation3 + $0x18] sm:$0xf]
    %v1810 = vld [vmem:[#allocation3 + $0x1c] sm:$0xf]
    %v1811 = vld [vmem:[#allocation10] sm:$0xff]
    %v1812 = vld [vmem:[#allocation10 + $0x8] sm:$0xff]
    %v1813 = vld [vmem:[#allocation10 + $0x10] sm:$0xff]
    %v1814 = vld [vmem:[#allocation10 + $0x18] sm:$0xff]
    %v1815 = vld [vmem:[#allocation10 + $0x20] sm:$0xff]
    %v1816 = vld [vmem:[#allocation10 + $0x28] sm:$0xff]
    %v1817 = vld [vmem:[#allocation10 + $0x30] sm:$0xff]
    %v1818 = vld [vmem:[#allocation10 + $0x38] sm:$0xff]
    %v1819 = vld [vmem:[#allocation10 + $0x40] sm:$0xff]
    %v1820 = vld [vmem:[#allocation10 + $0x48] sm:$0xff]
    %v1821 = vld [vmem:[#allocation10 + $0x50] sm:$0xff]
    %v1822 = vld [vmem:[#allocation10 + $0x58] sm:$0xff]
    %v1823 = vld [vmem:[#allocation10 + $0x60] sm:$0xff]
    %v1824 = vld [vmem:[#allocation10 + $0x68] sm:$0xff]
    %v1825 = vld [vmem:[#allocation10 + $0x70] sm:$0xff]
    %v1826 = vld [vmem:[#allocation10 + $0x78] sm:$0xff]
    %v1827 = vld [vmem:[#allocation10 + $0x80] sm:$0xff]
    %v1828 = vld [vmem:[#allocation10 + $0x88] sm:$0xff]
    %v1829 = vld [vmem:[#allocation10 + $0x90] sm:$0xff]
    %v1830 = vld [vmem:[#allocation10 + $0x98] sm:$0xff]
    %v1831 = vld [vmem:[#allocation10 + $0xa0] sm:$0xff]
    %v1832 = vld [vmem:[#allocation10 + $0xa8] sm:$0xff]
    %v1833 = vld [vmem:[#allocation10 + $0xb0] sm:$0xff]
    %v1834 = vld [vmem:[#allocation10 + $0xb8] sm:$0xff]
    %v1835 = vld [vmem:[#allocation10 + $0xc0] sm:$0xff]
    %v1836 = vld [vmem:[#allocation10 + $0xc8] sm:$0xff]
    %v1837 = vld [vmem:[#allocation10 + $0xd0] sm:$0xff]
    %v1838 = vld [vmem:[#allocation10 + $0xd8] sm:$0xff]
    %v1839 = vld [vmem:[#allocation10 + $0xe0] sm:$0xff]
    %v1840 = vld [vmem:[#allocation10 + $0xe8] sm:$0xff]
    %v1841 = vld [vmem:[#allocation10 + $0xf0] sm:$0xff]
    %v1842 = vld [vmem:[#allocation10 + $0xf8] sm:$0xff]
    %v1843 = vld [vmem:[%s6] sm:$0xf]
    %v1845 = vlaneseq
    %v1846 = vshrl.u32 %v1845, 7
    %v1847 = vsub.s32 0, %v1846
    %v1848 = vrot.slane %v1843, %v1847
    %v1849 = vlaneseq
    %v1850 = vshrl.u32 %v1849, 7
    %v1851 = vsub.s32 1, %v1850
    %v1852 = vrot.slane %v1843, %v1851
    %v1853 = vlaneseq
    %v1854 = vshrl.u32 %v1853, 7
    %v1855 = vsub.s32 2, %v1854
    %v1856 = vrot.slane %v1843, %v1855
    %v1857 = vlaneseq
    %v1858 = vshrl.u32 %v1857, 7
    %v1859 = vsub.s32 3, %v1858
    %v1860 = vrot.slane %v1843, %v1859
    %v1873 = vunpack.c.l.b16 %v1803
    %v1874 = vunpack.c.l.b16 %v1804
    %v1875 = vunpack.c.l.b16 %v1805
    %v1876 = vunpack.c.l.b16 %v1806
    %v1877 = vunpack.c.l.b16 %v1807
    %v1878 = vunpack.c.l.b16 %v1808
    %v1879 = vunpack.c.l.b16 %v1809
    %v1880 = vunpack.c.l.b16 %v1810
    %v1881 = vpack.c.b16 %v1874, %v1873
    %v1882 = vpack.c.b16 %v1876, %v1875
    %v1883 = vpack.c.b16 %v1878, %v1877
    %v1884 = vpack.c.b16 %v1880, %v1879
    %v1921 = vunpack.c.l.b16 %v1811
    %v1922 = vunpack.c.h.b16 %v1811
    %v1923 = vunpack.c.l.b16 %v1812
    %v1924 = vunpack.c.h.b16 %v1812
    %v1925 = vunpack.c.l.b16 %v1813
    %v1926 = vunpack.c.h.b16 %v1813
    %v1927 = vunpack.c.l.b16 %v1814
    %v1928 = vunpack.c.h.b16 %v1814
    %v1929 = vunpack.c.l.b16 %v1815
    %v1930 = vunpack.c.h.b16 %v1815
    %v1931 = vunpack.c.l.b16 %v1816
    %v1932 = vunpack.c.h.b16 %v1816
    %v1933 = vunpack.c.l.b16 %v1817
    %v1934 = vunpack.c.h.b16 %v1817
    %v1935 = vunpack.c.l.b16 %v1818
    %v1936 = vunpack.c.h.b16 %v1818
    %v1937 = vunpack.c.l.b16 %v1819
    %v1938 = vunpack.c.h.b16 %v1819
    %v1939 = vunpack.c.l.b16 %v1820
    %v1940 = vunpack.c.h.b16 %v1820
    %v1941 = vunpack.c.l.b16 %v1821
    %v1942 = vunpack.c.h.b16 %v1821
    %v1943 = vunpack.c.l.b16 %v1822
    %v1944 = vunpack.c.h.b16 %v1822
    %v1945 = vunpack.c.l.b16 %v1823
    %v1946 = vunpack.c.h.b16 %v1823
    %v1947 = vunpack.c.l.b16 %v1824
    %v1948 = vunpack.c.h.b16 %v1824
    %v1949 = vunpack.c.l.b16 %v1825
    %v1950 = vunpack.c.h.b16 %v1825
    %v1951 = vunpack.c.l.b16 %v1826
    %v1952 = vunpack.c.h.b16 %v1826
    %v1953 = vunpack.c.l.b16 %v1827
    %v1954 = vunpack.c.h.b16 %v1827
    %v1955 = vunpack.c.l.b16 %v1828
    %v1956 = vunpack.c.h.b16 %v1828
    %v1957 = vunpack.c.l.b16 %v1829
    %v1958 = vunpack.c.h.b16 %v1829
    %v1959 = vunpack.c.l.b16 %v1830
    %v1960 = vunpack.c.h.b16 %v1830
    %v1961 = vunpack.c.l.b16 %v1831
    %v1962 = vunpack.c.h.b16 %v1831
    %v1963 = vunpack.c.l.b16 %v1832
    %v1964 = vunpack.c.h.b16 %v1832
    %v1965 = vunpack.c.l.b16 %v1833
    %v1966 = vunpack.c.h.b16 %v1833
    %v1967 = vunpack.c.l.b16 %v1834
    %v1968 = vunpack.c.h.b16 %v1834
    %v1969 = vunpack.c.l.b16 %v1835
    %v1970 = vunpack.c.h.b16 %v1835
    %v1971 = vunpack.c.l.b16 %v1836
    %v1972 = vunpack.c.h.b16 %v1836
    %v1973 = vunpack.c.l.b16 %v1837
    %v1974 = vunpack.c.h.b16 %v1837
    %v1975 = vunpack.c.l.b16 %v1838
    %v1976 = vunpack.c.h.b16 %v1838
    %v1977 = vunpack.c.l.b16 %v1839
    %v1978 = vunpack.c.h.b16 %v1839
    %v1979 = vunpack.c.l.b16 %v1840
    %v1980 = vunpack.c.h.b16 %v1840
    %v1981 = vunpack.c.l.b16 %v1841
    %v1982 = vunpack.c.h.b16 %v1841
    %v1983 = vunpack.c.l.b16 %v1842
    %v1984 = vunpack.c.h.b16 %v1842
    %v1985 = vpack.c.b16 %v1925, %v1921
    %v1986 = vpack.c.b16 %v1926, %v1922
    %v1987 = vpack.c.b16 %v1927, %v1923
    %v1988 = vpack.c.b16 %v1928, %v1924
    %v1989 = vpack.c.b16 %v1933, %v1929
    %v1990 = vpack.c.b16 %v1934, %v1930
    %v1991 = vpack.c.b16 %v1935, %v1931
    %v1992 = vpack.c.b16 %v1936, %v1932
    %v1993 = vpack.c.b16 %v1941, %v1937
    %v1994 = vpack.c.b16 %v1942, %v1938
    %v1995 = vpack.c.b16 %v1943, %v1939
    %v1996 = vpack.c.b16 %v1944, %v1940
    %v1997 = vpack.c.b16 %v1949, %v1945
    %v1998 = vpack.c.b16 %v1950, %v1946
    %v1999 = vpack.c.b16 %v1951, %v1947
    %v2000 = vpack.c.b16 %v1952, %v1948
    %v2001 = vpack.c.b16 %v1957, %v1953
    %v2002 = vpack.c.b16 %v1958, %v1954
    %v2003 = vpack.c.b16 %v1959, %v1955
    %v2004 = vpack.c.b16 %v1960, %v1956
    %v2005 = vpack.c.b16 %v1965, %v1961
    %v2006 = vpack.c.b16 %v1966, %v1962
    %v2007 = vpack.c.b16 %v1967, %v1963
    %v2008 = vpack.c.b16 %v1968, %v1964
    %v2009 = vpack.c.b16 %v1973, %v1969
    %v2010 = vpack.c.b16 %v1974, %v1970
    %v2011 = vpack.c.b16 %v1975, %v1971
    %v2012 = vpack.c.b16 %v1976, %v1972
    %v2013 = vpack.c.b16 %v1981, %v1977
    %v2014 = vpack.c.b16 %v1982, %v1978
    %v2015 = vpack.c.b16 %v1983, %v1979
    %v2016 = vpack.c.b16 %v1984, %v1980
    %2049 = vmatprep.subr.bf16.mxu0 %v2014
    %2050 = vmatpush1.bf16.msra.mxu0 %v2013
    %2051 = vmatprep.subr.bf16.mxu0 %v2010
    %2052 = vmatpush1.bf16.msra.mxu0 %v2009
    %2053 = vmatprep.subr.bf16.mxu0 %v2006
    %2054 = vmatpush1.bf16.msra.mxu0 %v2005
    %2055 = vmatprep.subr.bf16.mxu0 %v2002
    %2056 = vmatpush1.bf16.msra.mxu0 %v2001
    %2057 = vmatprep.subr.bf16.mxu0 %v1998
    %2058 = vmatpush1.bf16.msra.mxu0 %v1997
    %2059 = vmatprep.subr.bf16.mxu0 %v1994
    %2060 = vmatpush1.bf16.msra.mxu0 %v1993
    %2061 = vmatprep.subr.bf16.mxu0 %v1990
    %2062 = vmatpush1.bf16.msra.mxu0 %v1989
    %2063 = vmatprep.subr.bf16.mxu0 %v1986
    %2064 = vmatpush1.bf16.msra.mxu0 %v1985
    %2065 = vmatprep.subr.bf16.mxu0 0
    %2066 = vmatpush2.bf16.msra.mxu0 0
    %2067 = vmatprep.subr.bf16.mxu0 0
    %2068 = vmatpush2.bf16.msra.mxu0 0
    %2069 = vmatprep.subr.bf16.mxu0 0
    %2070 = vmatpush2.bf16.msra.mxu0 0
    %2071 = vmatprep.subr.bf16.mxu0 0
    %2072 = vmatpush2.bf16.msra.mxu0 0
    %2073 = vmatprep.subr.bf16.mxu0 0
    %2074 = vmatpush2.bf16.msra.mxu0 0
    %2075 = vmatprep.subr.bf16.mxu0 0
    %2076 = vmatpush2.bf16.msra.mxu0 0
    %2077 = vmatprep.subr.bf16.mxu0 0
    %2078 = vmatpush2.bf16.msra.mxu0 0
    %2079 = vmatprep.subr.bf16.mxu0 0
    %2080 = vmatpush2.bf16.msra.mxu0 0
    %2081 = vmatprep.mubr.bf16.mxu0 0
    %2082 = vmatmul.mubr.bf16.gmra.mxu0 %v1881
    %v2083 = vpop.f32.mrf.mxu0
    %v2084 = vadd.f32 %v1848, %v2083
    %v2085 = vpop.f32.mrf.mxu0
    %v2086 = vadd.f32 %v1852, %v2085
    %v2087 = vpop.f32.mrf.mxu0
    %v2088 = vadd.f32 %v1848, %v2087
    %v2089 = vpop.f32.mrf.mxu0
    %v2090 = vadd.f32 %v1852, %v2089
    %2091 = vmatprep.mubr.bf16.mxu0 0
    %2092 = vmatmul.mubr.bf16.gmra.mxu0 %v1882
    %v2093 = vpop.f32.mrf.mxu0
    %v2094 = vadd.f32 %v1848, %v2093
    %v2095 = vpop.f32.mrf.mxu0
    %v2096 = vadd.f32 %v1852, %v2095
    %v2097 = vpop.f32.mrf.mxu0
    %v2098 = vadd.f32 %v1848, %v2097
    %v2099 = vpop.f32.mrf.mxu0
    %v2100 = vadd.f32 %v1852, %v2099
    %2101 = vmatprep.mubr.bf16.mxu0 0
    %2102 = vmatmul.mubr.bf16.gmra.mxu0 %v1883
    %v2103 = vpop.f32.mrf.mxu0
    %v2104 = vadd.f32 %v1848, %v2103
    %v2105 = vpop.f32.mrf.mxu0
    %v2106 = vadd.f32 %v1852, %v2105
    %v2107 = vpop.f32.mrf.mxu0
    %v2108 = vadd.f32 %v1848, %v2107
    %v2109 = vpop.f32.mrf.mxu0
    %v2110 = vadd.f32 %v1852, %v2109
    %2111 = vmatprep.mubr.bf16.mxu0 0
    %2112 = vmatmul.mubr.bf16.gmra.mxu0 %v1884
    %v2113 = vpop.f32.mrf.mxu0
    %v2114 = vadd.f32 %v1848, %v2113
    %v2115 = vpop.f32.mrf.mxu0
    %v2116 = vadd.f32 %v1852, %v2115
    %v2117 = vpop.f32.mrf.mxu0
    %v2118 = vadd.f32 %v1848, %v2117
    %v2119 = vpop.f32.mrf.mxu0
    %v2120 = vadd.f32 %v1852, %v2119
    %2121 = vdwg.mxu0
    %2122 = vmatprep.subr.bf16.mxu0 %v2016
    %2123 = vmatpush1.bf16.msra.mxu0 %v2015
    %2124 = vmatprep.subr.bf16.mxu0 %v2012
    %2125 = vmatpush1.bf16.msra.mxu0 %v2011
    %2126 = vmatprep.subr.bf16.mxu0 %v2008
    %2127 = vmatpush1.bf16.msra.mxu0 %v2007
    %2128 = vmatprep.subr.bf16.mxu0 %v2004
    %2129 = vmatpush1.bf16.msra.mxu0 %v2003
    %2130 = vmatprep.subr.bf16.mxu0 %v2000
    %2131 = vmatpush1.bf16.msra.mxu0 %v1999
    %2132 = vmatprep.subr.bf16.mxu0 %v1996
    %2133 = vmatpush1.bf16.msra.mxu0 %v1995
    %2134 = vmatprep.subr.bf16.mxu0 %v1992
    %2135 = vmatpush1.bf16.msra.mxu0 %v1991
    %2136 = vmatprep.subr.bf16.mxu0 %v1988
    %2137 = vmatpush1.bf16.msra.mxu0 %v1987
    %2138 = vmatprep.subr.bf16.mxu0 0
    %2139 = vmatpush2.bf16.msra.mxu0 0
    %2140 = vmatprep.subr.bf16.mxu0 0
    %2141 = vmatpush2.bf16.msra.mxu0 0
    %2142 = vmatprep.subr.bf16.mxu0 0
    %2143 = vmatpush2.bf16.msra.mxu0 0
    %2144 = vmatprep.subr.bf16.mxu0 0
    %2145 = vmatpush2.bf16.msra.mxu0 0
    %2146 = vmatprep.subr.bf16.mxu0 0
    %2147 = vmatpush2.bf16.msra.mxu0 0
    %2148 = vmatprep.subr.bf16.mxu0 0
    %2149 = vmatpush2.bf16.msra.mxu0 0
    %2150 = vmatprep.subr.bf16.mxu0 0
    %2151 = vmatpush2.bf16.msra.mxu0 0
    %2152 = vmatprep.subr.bf16.mxu0 0
    %2153 = vmatpush2.bf16.msra.mxu0 0
    %2154 = vmatprep.mubr.bf16.mxu0 0
    %2155 = vmatmul.mubr.bf16.gmra.mxu0 %v1881
    %v2156 = vpop.f32.mrf.mxu0
    %v2157 = vadd.f32 %v1856, %v2156
    %v2158 = vpop.f32.mrf.mxu0
    %v2159 = vadd.f32 %v1860, %v2158
    %v2160 = vpop.f32.mrf.mxu0
    %v2161 = vadd.f32 %v1856, %v2160
    %v2162 = vpop.f32.mrf.mxu0
    %v2163 = vadd.f32 %v1860, %v2162
    %2164 = vmatprep.mubr.bf16.mxu0 0
    %2165 = vmatmul.mubr.bf16.gmra.mxu0 %v1882
    %v2166 = vpop.f32.mrf.mxu0
    %v2167 = vadd.f32 %v1856, %v2166
    %v2168 = vpop.f32.mrf.mxu0
    %v2169 = vadd.f32 %v1860, %v2168
    %v2170 = vpop.f32.mrf.mxu0
    %v2171 = vadd.f32 %v1856, %v2170
    %v2172 = vpop.f32.mrf.mxu0
    %v2173 = vadd.f32 %v1860, %v2172
    %2174 = vmatprep.mubr.bf16.mxu0 0
    %2175 = vmatmul.mubr.bf16.gmra.mxu0 %v1883
    %v2176 = vpop.f32.mrf.mxu0
    %v2177 = vadd.f32 %v1856, %v2176
    %v2178 = vpop.f32.mrf.mxu0
    %v2179 = vadd.f32 %v1860, %v2178
    %v2180 = vpop.f32.mrf.mxu0
    %v2181 = vadd.f32 %v1856, %v2180
    %v2182 = vpop.f32.mrf.mxu0
    %v2183 = vadd.f32 %v1860, %v2182
    %2184 = vmatprep.mubr.bf16.mxu0 0
    %2185 = vmatmul.mubr.bf16.gmra.mxu0 %v1884
    %v2186 = vpop.f32.mrf.mxu0
    %v2187 = vadd.f32 %v1856, %v2186
    %v2188 = vpop.f32.mrf.mxu0
    %v2189 = vadd.f32 %v1860, %v2188
    %v2190 = vpop.f32.mrf.mxu0
    %v2191 = vadd.f32 %v1856, %v2190
    %v2192 = vpop.f32.mrf.mxu0
    %v2193 = vadd.f32 %v1860, %v2192
    %2194 = vdwg.mxu0
    %v2195 = vpack.c.bf16 %v2084, %v2084
    %v2196 = vpack.c.bf16 %v2086, %v2086
    %v2197 = vpack.c.bf16 %v2157, %v2157
    %v2198 = vpack.c.bf16 %v2159, %v2159
    %v2199 = vpack.c.bf16 %v2088, %v2088
    %v2200 = vpack.c.bf16 %v2090, %v2090
    %v2201 = vpack.c.bf16 %v2161, %v2161
    %v2202 = vpack.c.bf16 %v2163, %v2163
    %v2203 = vpack.c.bf16 %v2094, %v2094
    %v2204 = vpack.c.bf16 %v2096, %v2096
    %v2205 = vpack.c.bf16 %v2167, %v2167
    %v2206 = vpack.c.bf16 %v2169, %v2169
    %v2207 = vpack.c.bf16 %v2098, %v2098
    %v2208 = vpack.c.bf16 %v2100, %v2100
    %v2209 = vpack.c.bf16 %v2171, %v2171
    %v2210 = vpack.c.bf16 %v2173, %v2173
    %v2211 = vpack.c.bf16 %v2104, %v2104
    %v2212 = vpack.c.bf16 %v2106, %v2106
    %v2213 = vpack.c.bf16 %v2177, %v2177
    %v2214 = vpack.c.bf16 %v2179, %v2179
    %v2215 = vpack.c.bf16 %v2108, %v2108
    %v2216 = vpack.c.bf16 %v2110, %v2110
    %v2217 = vpack.c.bf16 %v2181, %v2181
    %v2218 = vpack.c.bf16 %v2183, %v2183
    %v2219 = vpack.c.bf16 %v2114, %v2114
    %v2220 = vpack.c.bf16 %v2116, %v2116
    %v2221 = vpack.c.bf16 %v2187, %v2187
    %v2222 = vpack.c.bf16 %v2189, %v2189
    %v2223 = vpack.c.bf16 %v2118, %v2118
    %v2224 = vpack.c.bf16 %v2120, %v2120
    %v2225 = vpack.c.bf16 %v2191, %v2191
    %v2226 = vpack.c.bf16 %v2193, %v2193
    %v2259 = vunpack.c.l.b16 %v2195
    %v2260 = vunpack.c.l.b16 %v2196
    %v2261 = vunpack.c.l.b16 %v2197
    %v2262 = vunpack.c.l.b16 %v2198
    %v2263 = vunpack.c.l.b16 %v2199
    %v2264 = vunpack.c.l.b16 %v2200
    %v2265 = vunpack.c.l.b16 %v2201
    %v2266 = vunpack.c.l.b16 %v2202
    %v2267 = vunpack.c.l.b16 %v2203
    %v2268 = vunpack.c.l.b16 %v2204
    %v2269 = vunpack.c.l.b16 %v2205
    %v2270 = vunpack.c.l.b16 %v2206
    %v2271 = vunpack.c.l.b16 %v2207
    %v2272 = vunpack.c.l.b16 %v2208
    %v2273 = vunpack.c.l.b16 %v2209
    %v2274 = vunpack.c.l.b16 %v2210
    %v2275 = vunpack.c.l.b16 %v2211
    %v2276 = vunpack.c.l.b16 %v2212
    %v2277 = vunpack.c.l.b16 %v2213
    %v2278 = vunpack.c.l.b16 %v2214
    %v2279 = vunpack.c.l.b16 %v2215
    %v2280 = vunpack.c.l.b16 %v2216
    %v2281 = vunpack.c.l.b16 %v2217
    %v2282 = vunpack.c.l.b16 %v2218
    %v2283 = vunpack.c.l.b16 %v2219
    %v2284 = vunpack.c.l.b16 %v2220
    %v2285 = vunpack.c.l.b16 %v2221
    %v2286 = vunpack.c.l.b16 %v2222
    %v2287 = vunpack.c.l.b16 %v2223
    %v2288 = vunpack.c.l.b16 %v2224
    %v2289 = vunpack.c.l.b16 %v2225
    %v2290 = vunpack.c.l.b16 %v2226
    %v2291 = vpack.c.b16 %v2260, %v2259
    %v2292 = vpack.c.b16 %v2262, %v2261
    %v2293 = vpack.c.b16 %v2264, %v2263
    %v2294 = vpack.c.b16 %v2266, %v2265
    %v2295 = vpack.c.b16 %v2268, %v2267
    %v2296 = vpack.c.b16 %v2270, %v2269
    %v2297 = vpack.c.b16 %v2272, %v2271
    %v2298 = vpack.c.b16 %v2274, %v2273
    %v2299 = vpack.c.b16 %v2276, %v2275
    %v2300 = vpack.c.b16 %v2278, %v2277
    %v2301 = vpack.c.b16 %v2280, %v2279
    %v2302 = vpack.c.b16 %v2282, %v2281
    %v2303 = vpack.c.b16 %v2284, %v2283
    %v2304 = vpack.c.b16 %v2286, %v2285
    %v2305 = vpack.c.b16 %v2288, %v2287
    %v2306 = vpack.c.b16 %v2290, %v2289
    %2323 = vst [vmem:[#allocation2] sm:$0xff] %v2291
    %2324 = vst [vmem:[#allocation2 + $0x8] sm:$0xff] %v2292
    %2325 = vst [vmem:[#allocation2 + $0x10] sm:$0xff] %v2293
    %2326 = vst [vmem:[#allocation2 + $0x18] sm:$0xff] %v2294
    %2327 = vst [vmem:[#allocation2 + $0x20] sm:$0xff] %v2295
    %2328 = vst [vmem:[#allocation2 + $0x28] sm:$0xff] %v2296
    %2329 = vst [vmem:[#allocation2 + $0x30] sm:$0xff] %v2297
    %2330 = vst [vmem:[#allocation2 + $0x38] sm:$0xff] %v2298
    %2331 = vst [vmem:[#allocation2 + $0x40] sm:$0xff] %v2299
    %2332 = vst [vmem:[#allocation2 + $0x48] sm:$0xff] %v2300
    %2333 = vst [vmem:[#allocation2 + $0x50] sm:$0xff] %v2301
    %2334 = vst [vmem:[#allocation2 + $0x58] sm:$0xff] %v2302
    %2335 = vst [vmem:[#allocation2 + $0x60] sm:$0xff] %v2303
    %2336 = vst [vmem:[#allocation2 + $0x68] sm:$0xff] %v2304
    %2337 = vst [vmem:[#allocation2 + $0x70] sm:$0xff] %v2305
    %2338 = vst [vmem:[#allocation2 + $0x78] sm:$0xff] %v2306
    %v2339 = vld [vmem:[#allocation12] sm:$0xff]
    %v2340 = vld [vmem:[#allocation12 + $0x8] sm:$0xff]
    %v2341 = vld [vmem:[#allocation12 + $0x10] sm:$0xff]
    %v2342 = vld [vmem:[#allocation12 + $0x18] sm:$0xff]
    %v2343 = vld [vmem:[#allocation12 + $0x20] sm:$0xff]
    %v2344 = vld [vmem:[#allocation12 + $0x28] sm:$0xff]
    %v2345 = vld [vmem:[#allocation12 + $0x30] sm:$0xff]
    %v2346 = vld [vmem:[#allocation12 + $0x38] sm:$0xff]
    %v2347 = vld [vmem:[#allocation12 + $0x40] sm:$0xff]
    %v2348 = vld [vmem:[#allocation12 + $0x48] sm:$0xff]
    %v2349 = vld [vmem:[#allocation12 + $0x50] sm:$0xff]
    %v2350 = vld [vmem:[#allocation12 + $0x58] sm:$0xff]
    %v2351 = vld [vmem:[#allocation12 + $0x60] sm:$0xff]
    %v2352 = vld [vmem:[#allocation12 + $0x68] sm:$0xff]
    %v2353 = vld [vmem:[#allocation12 + $0x70] sm:$0xff]
    %v2354 = vld [vmem:[#allocation12 + $0x78] sm:$0xff]
    %v2355 = vld [vmem:[#allocation12 + $0x80] sm:$0xff]
    %v2356 = vld [vmem:[#allocation12 + $0x88] sm:$0xff]
    %v2357 = vld [vmem:[#allocation12 + $0x90] sm:$0xff]
    %v2358 = vld [vmem:[#allocation12 + $0x98] sm:$0xff]
    %v2359 = vld [vmem:[#allocation12 + $0xa0] sm:$0xff]
    %v2360 = vld [vmem:[#allocation12 + $0xa8] sm:$0xff]
    %v2361 = vld [vmem:[#allocation12 + $0xb0] sm:$0xff]
    %v2362 = vld [vmem:[#allocation12 + $0xb8] sm:$0xff]
    %v2363 = vld [vmem:[#allocation12 + $0xc0] sm:$0xff]
    %v2364 = vld [vmem:[#allocation12 + $0xc8] sm:$0xff]
    %v2365 = vld [vmem:[#allocation12 + $0xd0] sm:$0xff]
    %v2366 = vld [vmem:[#allocation12 + $0xd8] sm:$0xff]
    %v2367 = vld [vmem:[#allocation12 + $0xe0] sm:$0xff]
    %v2368 = vld [vmem:[#allocation12 + $0xe8] sm:$0xff]
    %v2369 = vld [vmem:[#allocation12 + $0xf0] sm:$0xff]
    %v2370 = vld [vmem:[#allocation12 + $0xf8] sm:$0xff]
    %v2371 = vld [vmem:[#allocation2] sm:$0xff]
    %v2372 = vld [vmem:[#allocation2 + $0x8] sm:$0xff]
    %v2405 = vunpack.c.l.b16 %v2339
    %v2406 = vunpack.c.h.b16 %v2339
    %v2407 = vunpack.c.l.b16 %v2340
    %v2408 = vunpack.c.h.b16 %v2340
    %v2409 = vunpack.c.l.b16 %v2341
    %v2410 = vunpack.c.h.b16 %v2341
    %v2411 = vunpack.c.l.b16 %v2342
    %v2412 = vunpack.c.h.b16 %v2342
    %v2413 = vunpack.c.l.b16 %v2343
    %v2414 = vunpack.c.h.b16 %v2343
    %v2415 = vunpack.c.l.b16 %v2344
    %v2416 = vunpack.c.h.b16 %v2344
    %v2417 = vunpack.c.l.b16 %v2345
    %v2418 = vunpack.c.h.b16 %v2345
    %v2419 = vunpack.c.l.b16 %v2346
    %v2420 = vunpack.c.h.b16 %v2346
    %v2421 = vunpack.c.l.b16 %v2347
    %v2422 = vunpack.c.h.b16 %v2347
    %v2423 = vunpack.c.l.b16 %v2348
    %v2424 = vunpack.c.h.b16 %v2348
    %v2425 = vunpack.c.l.b16 %v2349
    %v2426 = vunpack.c.h.b16 %v2349
    %v2427 = vunpack.c.l.b16 %v2350
    %v2428 = vunpack.c.h.b16 %v2350
    %v2429 = vunpack.c.l.b16 %v2351
    %v2430 = vunpack.c.h.b16 %v2351
    %v2431 = vunpack.c.l.b16 %v2352
    %v2432 = vunpack.c.h.b16 %v2352
    %v2433 = vunpack.c.l.b16 %v2353
    %v2434 = vunpack.c.h.b16 %v2353
    %v2435 = vunpack.c.l.b16 %v2354
    %v2436 = vunpack.c.h.b16 %v2354
    %v2437 = vunpack.c.l.b16 %v2355
    %v2438 = vunpack.c.h.b16 %v2355
    %v2439 = vunpack.c.l.b16 %v2356
    %v2440 = vunpack.c.h.b16 %v2356
    %v2441 = vunpack.c.l.b16 %v2357
    %v2442 = vunpack.c.h.b16 %v2357
    %v2443 = vunpack.c.l.b16 %v2358
    %v2444 = vunpack.c.h.b16 %v2358
    %v2445 = vunpack.c.l.b16 %v2359
    %v2446 = vunpack.c.h.b16 %v2359
    %v2447 = vunpack.c.l.b16 %v2360
    %v2448 = vunpack.c.h.b16 %v2360
    %v2449 = vunpack.c.l.b16 %v2361
    %v2450 = vunpack.c.h.b16 %v2361
    %v2451 = vunpack.c.l.b16 %v2362
    %v2452 = vunpack.c.h.b16 %v2362
    %v2453 = vunpack.c.l.b16 %v2363
    %v2454 = vunpack.c.h.b16 %v2363
    %v2455 = vunpack.c.l.b16 %v2364
    %v2456 = vunpack.c.h.b16 %v2364
    %v2457 = vunpack.c.l.b16 %v2365
    %v2458 = vunpack.c.h.b16 %v2365
    %v2459 = vunpack.c.l.b16 %v2366
    %v2460 = vunpack.c.h.b16 %v2366
    %v2461 = vunpack.c.l.b16 %v2367
    %v2462 = vunpack.c.h.b16 %v2367
    %v2463 = vunpack.c.l.b16 %v2368
    %v2464 = vunpack.c.h.b16 %v2368
    %v2465 = vunpack.c.l.b16 %v2369
    %v2466 = vunpack.c.h.b16 %v2369
    %v2467 = vunpack.c.l.b16 %v2370
    %v2468 = vunpack.c.h.b16 %v2370
    %v2469 = vpack.c.b16 %v2409, %v2405
    %v2470 = vpack.c.b16 %v2410, %v2406
    %v2471 = vpack.c.b16 %v2411, %v2407
    %v2472 = vpack.c.b16 %v2412, %v2408
    %v2473 = vpack.c.b16 %v2417, %v2413
    %v2474 = vpack.c.b16 %v2418, %v2414
    %v2475 = vpack.c.b16 %v2419, %v2415
    %v2476 = vpack.c.b16 %v2420, %v2416
    %v2477 = vpack.c.b16 %v2425, %v2421
    %v2478 = vpack.c.b16 %v2426, %v2422
    %v2479 = vpack.c.b16 %v2427, %v2423
    %v2480 = vpack.c.b16 %v2428, %v2424
    %v2481 = vpack.c.b16 %v2433, %v2429
    %v2482 = vpack.c.b16 %v2434, %v2430
    %v2483 = vpack.c.b16 %v2435, %v2431
    %v2484 = vpack.c.b16 %v2436, %v2432
    %v2485 = vpack.c.b16 %v2441, %v2437
    %v2486 = vpack.c.b16 %v2442, %v2438
    %v2487 = vpack.c.b16 %v2443, %v2439
    %v2488 = vpack.c.b16 %v2444, %v2440
    %v2489 = vpack.c.b16 %v2449, %v2445
    %v2490 = vpack.c.b16 %v2450, %v2446
    %v2491 = vpack.c.b16 %v2451, %v2447
    %v2492 = vpack.c.b16 %v2452, %v2448
    %v2493 = vpack.c.b16 %v2457, %v2453
    %v2494 = vpack.c.b16 %v2458, %v2454
    %v2495 = vpack.c.b16 %v2459, %v2455
    %v2496 = vpack.c.b16 %v2460, %v2456
    %v2497 = vpack.c.b16 %v2465, %v2461
    %v2498 = vpack.c.b16 %v2466, %v2462
    %v2499 = vpack.c.b16 %v2467, %v2463
    %v2500 = vpack.c.b16 %v2468, %v2464
    %2533 = vmatprep.subr.bf16.mxu0 %v2498
    %2534 = vmatpush1.bf16.msra.mxu0 %v2497
    %2535 = vmatprep.subr.bf16.mxu0 %v2494
    %2536 = vmatpush1.bf16.msra.mxu0 %v2493
    %2537 = vmatprep.subr.bf16.mxu0 %v2490
    %2538 = vmatpush1.bf16.msra.mxu0 %v2489
    %2539 = vmatprep.subr.bf16.mxu0 %v2486
    %2540 = vmatpush1.bf16.msra.mxu0 %v2485
    %2541 = vmatprep.subr.bf16.mxu0 %v2482
    %2542 = vmatpush1.bf16.msra.mxu0 %v2481
    %2543 = vmatprep.subr.bf16.mxu0 %v2478
    %2544 = vmatpush1.bf16.msra.mxu0 %v2477
    %2545 = vmatprep.subr.bf16.mxu0 %v2474
    %2546 = vmatpush1.bf16.msra.mxu0 %v2473
    %2547 = vmatprep.subr.bf16.mxu0 %v2470
    %2548 = vmatpush1.bf16.msra.mxu0 %v2469
    %2549 = vmatprep.subr.bf16.mxu0 0
    %2550 = vmatpush2.bf16.msra.mxu0 0
    %2551 = vmatprep.subr.bf16.mxu0 0
    %2552 = vmatpush2.bf16.msra.mxu0 0
    %2553 = vmatprep.subr.bf16.mxu0 0
    %2554 = vmatpush2.bf16.msra.mxu0 0
    %2555 = vmatprep.subr.bf16.mxu0 0
    %2556 = vmatpush2.bf16.msra.mxu0 0
    %2557 = vmatprep.subr.bf16.mxu0 0
    %2558 = vmatpush2.bf16.msra.mxu0 0
    %2559 = vmatprep.subr.bf16.mxu0 0
    %2560 = vmatpush2.bf16.msra.mxu0 0
    %2561 = vmatprep.subr.bf16.mxu0 0
    %2562 = vmatpush2.bf16.msra.mxu0 0
    %2563 = vmatprep.subr.bf16.mxu0 0
    %2564 = vmatpush2.bf16.msra.mxu0 0
    %2565 = vmatprep.mubr.bf16.mxu0 0
    %2566 = vmatmul.mubr.bf16.gmra.mxu0 0
    %v2567 = vpop.f32.mrf.mxu0
    %v2568 = vadd.f32 0.0, %v2567
    %v2569 = vpop.f32.mrf.mxu0
    %v2570 = vadd.f32 0.0, %v2569
    %v2571 = vpop.f32.mrf.mxu0
    %v2572 = vpop.f32.mrf.mxu0
    %2573 = vdwg.mxu0
    %2574 = vmatprep.subr.bf16.mxu0 %v2500
    %2575 = vmatpush1.bf16.msra.mxu0 %v2499
    %2576 = vmatprep.subr.bf16.mxu0 %v2496
    %2577 = vmatpush1.bf16.msra.mxu0 %v2495
    %2578 = vmatprep.subr.bf16.mxu0 %v2492
    %2579 = vmatpush1.bf16.msra.mxu0 %v2491
    %2580 = vmatprep.subr.bf16.mxu0 %v2488
    %2581 = vmatpush1.bf16.msra.mxu0 %v2487
    %2582 = vmatprep.subr.bf16.mxu0 %v2484
    %2583 = vmatpush1.bf16.msra.mxu0 %v2483
    %2584 = vmatprep.subr.bf16.mxu0 %v2480
    %2585 = vmatpush1.bf16.msra.mxu0 %v2479
    %2586 = vmatprep.subr.bf16.mxu0 %v2476
    %2587 = vmatpush1.bf16.msra.mxu0 %v2475
    %2588 = vmatprep.subr.bf16.mxu0 %v2472
    %2589 = vmatpush1.bf16.msra.mxu0 %v2471
    %2590 = vmatprep.subr.bf16.mxu0 0
    %2591 = vmatpush2.bf16.msra.mxu0 0
    %2592 = vmatprep.subr.bf16.mxu0 0
    %2593 = vmatpush2.bf16.msra.mxu0 0
    %2594 = vmatprep.subr.bf16.mxu0 0
    %2595 = vmatpush2.bf16.msra.mxu0 0
    %2596 = vmatprep.subr.bf16.mxu0 0
    %2597 = vmatpush2.bf16.msra.mxu0 0
    %2598 = vmatprep.subr.bf16.mxu0 0
    %2599 = vmatpush2.bf16.msra.mxu0 0
    %2600 = vmatprep.subr.bf16.mxu0 0
    %2601 = vmatpush2.bf16.msra.mxu0 0
    %2602 = vmatprep.subr.bf16.mxu0 0
    %2603 = vmatpush2.bf16.msra.mxu0 0
    %2604 = vmatprep.subr.bf16.mxu0 0
    %2605 = vmatpush2.bf16.msra.mxu0 0
    %2606 = vmatprep.mubr.bf16.mxu0 0
    %2607 = vmatmul.mubr.bf16.gmra.mxu0 0
    %v2608 = vpop.f32.mrf.mxu0
    %v2609 = vadd.f32 0.0, %v2608
    %v2610 = vpop.f32.mrf.mxu0
    %v2611 = vadd.f32 0.0, %v2610
    %v2612 = vpop.f32.mrf.mxu0
    %v2613 = vpop.f32.mrf.mxu0
    %2614 = vdwg.mxu0
    %v2615 = vunpack.c.l.bf16 %v2371
    %v2616 = vunpack.c.h.bf16 %v2371
    %v2617 = vunpack.c.l.bf16 %v2372
    %v2618 = vunpack.c.h.bf16 %v2372
    %v2619 = vadd.f32 %v2615, %v2568
    %v2620 = vadd.f32 %v2616, %v2570
    %v2621 = vadd.f32 %v2617, %v2609
    %v2622 = vadd.f32 %v2618, %v2611
    %v2623 = vxor.u32 %v2619, 2147483648
    %v2624 = vxor.u32 %v2620, 2147483648
    %v2625 = vxor.u32 %v2621, 2147483648
    %v2626 = vmul.f32 %v2623, 1.442695
    %v2627 = vpow.pop %v2626
    %v2628 = vmul.f32 %v2624, 1.442695
    %v2629 = vpow.pop %v2628
    %v2630 = vmul.f32 %v2625, 1.442695
    %v2631 = vpow.pop %v2630
    %v2632 = vadd.f32 %v2627, 1.0
    %v2633 = vadd.f32 %v2629, 1.0
    %v2634 = vadd.f32 %v2631, 1.0
    %v2635 = vrcp.pop %v2632
    %v2636 = vmul.f32 1.0, %v2635
    %v2637 = vrcp.pop %v2633
    %v2638 = vmul.f32 1.0, %v2637
    %v2639 = vrcp.pop %v2634
    %v2640 = vmul.f32 1.0, %v2639
    %v2641 = vtanh.pop %v2622
    %v2642 = vmul.f32 %v2638, 0.0
    %v2643 = vmul.f32 %v2636, %v2641
    %v2644 = vadd.f32 %v2642, %v2643
    %v2645 = vtanh.pop %v2644
    %v2646 = vmul.f32 %v2640, %v2645
    %v2647 = vpack.c.bf16 %v2646, %v2646
    %v2648 = vld [vmem:[%s962] sm:$0xff]
    %v2649 = vld [vmem:[%s962 + $0x8] sm:$0xff]
    %2650 = vmatprep.subr.bf16.mxu0 %v2498
    %2651 = vmatpush1.bf16.msra.mxu0 %v2497
    %2652 = vmatprep.subr.bf16.mxu0 %v2494
    %2653 = vmatpush1.bf16.msra.mxu0 %v2493
    %2654 = vmatprep.subr.bf16.mxu0 %v2490
    %2655 = vmatpush1.bf16.msra.mxu0 %v2489
    %2656 = vmatprep.subr.bf16.mxu0 %v2486
    %2657 = vmatpush1.bf16.msra.mxu0 %v2485
    %2658 = vmatprep.subr.bf16.mxu0 %v2482
    %2659 = vmatpush1.bf16.msra.mxu0 %v2481
    %2660 = vmatprep.subr.bf16.mxu0 %v2478
    %2661 = vmatpush1.bf16.msra.mxu0 %v2477
    %2662 = vmatprep.subr.bf16.mxu0 %v2474
    %2663 = vmatpush1.bf16.msra.mxu0 %v2473
    %2664 = vmatprep.subr.bf16.mxu0 %v2470
    %2665 = vmatpush1.bf16.msra.mxu0 %v2469
    %2666 = vmatprep.subr.bf16.mxu0 0
    %2667 = vmatpush2.bf16.msra.mxu0 0
    %2668 = vmatprep.subr.bf16.mxu0 0
    %2669 = vmatpush2.bf16.msra.mxu0 0
    %2670 = vmatprep.subr.bf16.mxu0 0
    %2671 = vmatpush2.bf16.msra.mxu0 0
    %2672 = vmatprep.subr.bf16.mxu0 0
    %2673 = vmatpush2.bf16.msra.mxu0 0
    %2674 = vmatprep.subr.bf16.mxu0 0
    %2675 = vmatpush2.bf16.msra.mxu0 0
    %2676 = vmatprep.subr.bf16.mxu0 0
    %2677 = vmatpush2.bf16.msra.mxu0 0
    %2678 = vmatprep.subr.bf16.mxu0 0
    %2679 = vmatpush2.bf16.msra.mxu0 0
    %2680 = vmatprep.subr.bf16.mxu0 0
    %2681 = vmatpush2.bf16.msra.mxu0 0
    %2682 = vmatprep.mubr.bf16.mxu0 0
    %2683 = vmatmul.mubr.bf16.gmra.mxu0 %v2647
    %v2684 = vpop.f32.mrf.mxu0
    %v2685 = vadd.f32 0.0, %v2684
    %v2686 = vpop.f32.mrf.mxu0
    %v2687 = vadd.f32 0.0, %v2686
    %v2688 = vpop.f32.mrf.mxu0
    %v2689 = vpop.f32.mrf.mxu0
    %2690 = vdwg.mxu0
    %2691 = vmatprep.subr.bf16.mxu0 %v2500
    %2692 = vmatpush1.bf16.msra.mxu0 %v2499
    %2693 = vmatprep.subr.bf16.mxu0 %v2496
    %2694 = vmatpush1.bf16.msra.mxu0 %v2495
    %2695 = vmatprep.subr.bf16.mxu0 %v2492
    %2696 = vmatpush1.bf16.msra.mxu0 %v2491
    %2697 = vmatprep.subr.bf16.mxu0 %v2488
    %2698 = vmatpush1.bf16.msra.mxu0 %v2487
    %2699 = vmatprep.subr.bf16.mxu0 %v2484
    %2700 = vmatpush1.bf16.msra.mxu0 %v2483
    %2701 = vmatprep.subr.bf16.mxu0 %v2480
    %2702 = vmatpush1.bf16.msra.mxu0 %v2479
    %2703 = vmatprep.subr.bf16.mxu0 %v2476
    %2704 = vmatpush1.bf16.msra.mxu0 %v2475
    %2705 = vmatprep.subr.bf16.mxu0 %v2472
    %2706 = vmatpush1.bf16.msra.mxu0 %v2471
    %2707 = vmatprep.subr.bf16.mxu0 0
    %2708 = vmatpush2.bf16.msra.mxu0 0
    %2709 = vmatprep.subr.bf16.mxu0 0
    %2710 = vmatpush2.bf16.msra.mxu0 0
    %2711 = vmatprep.subr.bf16.mxu0 0
    %2712 = vmatpush2.bf16.msra.mxu0 0
    %2713 = vmatprep.subr.bf16.mxu0 0
    %2714 = vmatpush2.bf16.msra.mxu0 0
    %2715 = vmatprep.subr.bf16.mxu0 0
    %2716 = vmatpush2.bf16.msra.mxu0 0
    %2717 = vmatprep.subr.bf16.mxu0 0
    %2718 = vmatpush2.bf16.msra.mxu0 0
    %2719 = vmatprep.subr.bf16.mxu0 0
    %2720 = vmatpush2.bf16.msra.mxu0 0
    %2721 = vmatprep.subr.bf16.mxu0 0
    %2722 = vmatpush2.bf16.msra.mxu0 0
    %2723 = vmatprep.mubr.bf16.mxu0 0
    %2724 = vmatmul.mubr.bf16.gmra.mxu0 %v2647
    %v2725 = vpop.f32.mrf.mxu0
    %v2726 = vadd.f32 0.0, %v2725
    %v2727 = vpop.f32.mrf.mxu0
    %v2728 = vadd.f32 0.0, %v2727
    %v2729 = vpop.f32.mrf.mxu0
    %v2730 = vpop.f32.mrf.mxu0
    %2731 = vdwg.mxu0
    %v2732 = vunpack.c.l.bf16 %v2648
    %v2733 = vunpack.c.h.bf16 %v2648
    %v2734 = vunpack.c.l.bf16 %v2649
    %v2735 = vunpack.c.h.bf16 %v2649
    %v2736 = vadd.f32 %v2732, %v2685
    %v2737 = vadd.f32 %v2733, %v2687
    %v2738 = vadd.f32 %v2734, %v2726
    %v2739 = vadd.f32 %v2735, %v2728
    %v2740 = vxor.u32 %v2736, 2147483648
    %v2741 = vxor.u32 %v2737, 2147483648
    %v2742 = vxor.u32 %v2738, 2147483648
    %v2743 = vmul.f32 %v2740, 1.442695
    %v2744 = vpow.pop %v2743
    %v2745 = vmul.f32 %v2741, 1.442695
    %v2746 = vpow.pop %v2745
    %v2747 = vmul.f32 %v2742, 1.442695
    %v2748 = vpow.pop %v2747
    %v2749 = vadd.f32 %v2744, 1.0
    %v2750 = vadd.f32 %v2746, 1.0
    %v2751 = vadd.f32 %v2748, 1.0
    %v2752 = vrcp.pop %v2749
    %v2753 = vmul.f32 1.0, %v2752
    %v2754 = vrcp.pop %v2750
    %v2755 = vmul.f32 1.0, %v2754
    %v2756 = vrcp.pop %v2751
    %v2757 = vmul.f32 1.0, %v2756
    %v2758 = vtanh.pop %v2739
    %v2759 = vmul.f32 %v2755, %v2644
    %v2760 = vmul.f32 %v2753, %v2758
    %v2761 = vadd.f32 %v2759, %v2760
    %v2762 = vtanh.pop %v2761
    %v2763 = vmul.f32 %v2757, %v2762
    %v2764 = vpack.c.bf16 %v2763, %v2763
    %v2765 = vld [vmem:[%s1082] sm:$0xff]
    %v2766 = vld [vmem:[%s1082 + $0x8] sm:$0xff]
    %2767 = vmatprep.subr.bf16.mxu0 %v2498
    %2768 = vmatpush1.bf16.msra.mxu0 %v2497
    %2769 = vmatprep.subr.bf16.mxu0 %v2494
    %2770 = vmatpush1.bf16.msra.mxu0 %v2493
    %2771 = vmatprep.subr.bf16.mxu0 %v2490
    %2772 = vmatpush1.bf16.msra.mxu0 %v2489
    %2773 = vmatprep.subr.bf16.mxu0 %v2486
    %2774 = vmatpush1.bf16.msra.mxu0 %v2485
    %2775 = vmatprep.subr.bf16.mxu0 %v2482
    %2776 = vmatpush1.bf16.msra.mxu0 %v2481
    %2777 = vmatprep.subr.bf16.mxu0 %v2478
    %2778 = vmatpush1.bf16.msra.mxu0 %v2477
    %2779 = vmatprep.subr.bf16.mxu0 %v2474
    %2780 = vmatpush1.bf16.msra.mxu0 %v2473
    %2781 = vmatprep.subr.bf16.mxu0 %v2470
    %2782 = vmatpush1.bf16.msra.mxu0 %v2469
    %2783 = vmatprep.subr.bf16.mxu0 0
    %2784 = vmatpush2.bf16.msra.mxu0 0
    %2785 = vmatprep.subr.bf16.mxu0 0
    %2786 = vmatpush2.bf16.msra.mxu0 0
    %2787 = vmatprep.subr.bf16.mxu0 0
    %2788 = vmatpush2.bf16.msra.mxu0 0
    %2789 = vmatprep.subr.bf16.mxu0 0
    %2790 = vmatpush2.bf16.msra.mxu0 0
    %2791 = vmatprep.subr.bf16.mxu0 0
    %2792 = vmatpush2.bf16.msra.mxu0 0
    %2793 = vmatprep.subr.bf16.mxu0 0
    %2794 = vmatpush2.bf16.msra.mxu0 0
    %2795 = vmatprep.subr.bf16.mxu0 0
    %2796 = vmatpush2.bf16.msra.mxu0 0
    %2797 = vmatprep.subr.bf16.mxu0 0
    %2798 = vmatpush2.bf16.msra.mxu0 0
    %2799 = vmatprep.mubr.bf16.mxu0 0
    %2800 = vmatmul.mubr.bf16.gmra.mxu0 %v2764
    %v2801 = vpop.f32.mrf.mxu0
    %v2802 = vadd.f32 0.0, %v2801
    %v2803 = vpop.f32.mrf.mxu0
    %v2804 = vadd.f32 0.0, %v2803
    %v2805 = vpop.f32.mrf.mxu0
    %v2806 = vpop.f32.mrf.mxu0
    %2807 = vdwg.mxu0
    %2808 = vmatprep.subr.bf16.mxu0 %v2500
    %2809 = vmatpush1.bf16.msra.mxu0 %v2499
    %2810 = vmatprep.subr.bf16.mxu0 %v2496
    %2811 = vmatpush1.bf16.msra.mxu0 %v2495
    %2812 = vmatprep.subr.bf16.mxu0 %v2492
    %2813 = vmatpush1.bf16.msra.mxu0 %v2491
    %2814 = vmatprep.subr.bf16.mxu0 %v2488
    %2815 = vmatpush1.bf16.msra.mxu0 %v2487
    %2816 = vmatprep.subr.bf16.mxu0 %v2484
    %2817 = vmatpush1.bf16.msra.mxu0 %v2483
    %2818 = vmatprep.subr.bf16.mxu0 %v2480
    %2819 = vmatpush1.bf16.msra.mxu0 %v2479
    %2820 = vmatprep.subr.bf16.mxu0 %v2476
    %2821 = vmatpush1.bf16.msra.mxu0 %v2475
    %2822 = vmatprep.subr.bf16.mxu0 %v2472
    %2823 = vmatpush1.bf16.msra.mxu0 %v2471
    %2824 = vmatprep.subr.bf16.mxu0 0
    %2825 = vmatpush2.bf16.msra.mxu0 0
    %2826 = vmatprep.subr.bf16.mxu0 0
    %2827 = vmatpush2.bf16.msra.mxu0 0
    %2828 = vmatprep.subr.bf16.mxu0 0
    %2829 = vmatpush2.bf16.msra.mxu0 0
    %2830 = vmatprep.subr.bf16.mxu0 0
    %2831 = vmatpush2.bf16.msra.mxu0 0
    %2832 = vmatprep.subr.bf16.mxu0 0
    %2833 = vmatpush2.bf16.msra.mxu0 0
    %2834 = vmatprep.subr.bf16.mxu0 0
    %2835 = vmatpush2.bf16.msra.mxu0 0
    %2836 = vmatprep.subr.bf16.mxu0 0
    %2837 = vmatpush2.bf16.msra.mxu0 0
    %2838 = vmatprep.subr.bf16.mxu0 0
    %2839 = vmatpush2.bf16.msra.mxu0 0
    %2840 = vmatprep.mubr.bf16.mxu0 0
    %2841 = vmatmul.mubr.bf16.gmra.mxu0 %v2764
    %v2842 = vpop.f32.mrf.mxu0
    %v2843 = vadd.f32 0.0, %v2842
    %v2844 = vpop.f32.mrf.mxu0
    %v2845 = vadd.f32 0.0, %v2844
    %v2846 = vpop.f32.mrf.mxu0
    %v2847 = vpop.f32.mrf.mxu0
    %2848 = vdwg.mxu0
    %v2849 = vunpack.c.l.bf16 %v2765
    %v2850 = vunpack.c.h.bf16 %v2765
    %v2851 = vunpack.c.l.bf16 %v2766
    %v2852 = vunpack.c.h.bf16 %v2766
    %v2853 = vadd.f32 %v2849, %v2802
    %v2854 = vadd.f32 %v2850, %v2804
    %v2855 = vadd.f32 %v2851, %v2843
    %v2856 = vadd.f32 %v2852, %v2845
    %v2857 = vxor.u32 %v2853, 2147483648
    %v2858 = vxor.u32 %v2854, 2147483648
    %v2859 = vxor.u32 %v2855, 2147483648
    %v2860 = vmul.f32 %v2857, 1.442695
    %v2861 = vpow.pop %v2860
    %v2862 = vmul.f32 %v2858, 1.442695
    %v2863 = vpow.pop %v2862
    %v2864 = vmul.f32 %v2859, 1.442695
    %v2865 = vpow.pop %v2864
    %v2866 = vadd.f32 %v2861, 1.0
    %v2867 = vadd.f32 %v2863, 1.0
    %v2868 = vadd.f32 %v2865, 1.0
    %v2869 = vrcp.pop %v2866
    %v2870 = vmul.f32 1.0, %v2869
    %v2871 = vrcp.pop %v2867
    %v2872 = vmul.f32 1.0, %v2871
    %v2873 = vrcp.pop %v2868
    %v2874 = vmul.f32 1.0, %v2873
    %v2875 = vtanh.pop %v2856
    %v2876 = vmul.f32 %v2872, %v2761
    %v2877 = vmul.f32 %v2870, %v2875
    %v2878 = vadd.f32 %v2876, %v2877
    %v2879 = vtanh.pop %v2878
    %v2880 = vmul.f32 %v2874, %v2879
    %v2881 = vpack.c.bf16 %v2880, %v2880
    %v2882 = vld [vmem:[%s1202] sm:$0xff]
    %v2883 = vld [vmem:[%s1202 + $0x8] sm:$0xff]
    %2884 = vmatprep.subr.bf16.mxu0 %v2498
    %2885 = vmatpush1.bf16.msra.mxu0 %v2497
    %2886 = vmatprep.subr.bf16.mxu0 %v2494
    %2887 = vmatpush1.bf16.msra.mxu0 %v2493
    %2888 = vmatprep.subr.bf16.mxu0 %v2490
    %2889 = vmatpush1.bf16.msra.mxu0 %v2489
    %2890 = vmatprep.subr.bf16.mxu0 %v2486
    %2891 = vmatpush1.bf16.msra.mxu0 %v2485
    %2892 = vmatprep.subr.bf16.mxu0 %v2482
    %2893 = vmatpush1.bf16.msra.mxu0 %v2481
    %2894 = vmatprep.subr.bf16.mxu0 %v2478
    %2895 = vmatpush1.bf16.msra.mxu0 %v2477
    %2896 = vmatprep.subr.bf16.mxu0 %v2474
    %2897 = vmatpush1.bf16.msra.mxu0 %v2473
    %2898 = vmatprep.subr.bf16.mxu0 %v2470
    %2899 = vmatpush1.bf16.msra.mxu0 %v2469
    %2900 = vmatprep.subr.bf16.mxu0 0
    %2901 = vmatpush2.bf16.msra.mxu0 0
    %2902 = vmatprep.subr.bf16.mxu0 0
    %2903 = vmatpush2.bf16.msra.mxu0 0
    %2904 = vmatprep.subr.bf16.mxu0 0
    %2905 = vmatpush2.bf16.msra.mxu0 0
    %2906 = vmatprep.subr.bf16.mxu0 0
    %2907 = vmatpush2.bf16.msra.mxu0 0
    %2908 = vmatprep.subr.bf16.mxu0 0
    %2909 = vmatpush2.bf16.msra.mxu0 0
    %2910 = vmatprep.subr.bf16.mxu0 0
    %2911 = vmatpush2.bf16.msra.mxu0 0
    %2912 = vmatprep.subr.bf16.mxu0 0
    %2913 = vmatpush2.bf16.msra.mxu0 0
    %2914 = vmatprep.subr.bf16.mxu0 0
    %2915 = vmatpush2.bf16.msra.mxu0 0
    %2916 = vmatprep.mubr.bf16.mxu0 0
    %2917 = vmatmul.mubr.bf16.gmra.mxu0 %v2881
    %v2918 = vpop.f32.mrf.mxu0
    %v2919 = vadd.f32 0.0, %v2918
    %v2920 = vpop.f32.mrf.mxu0
    %v2921 = vadd.f32 0.0, %v2920
    %v2922 = vpop.f32.mrf.mxu0
    %v2923 = vpop.f32.mrf.mxu0
    %2924 = vdwg.mxu0
    %2925 = vmatprep.subr.bf16.mxu0 %v2500
    %2926 = vmatpush1.bf16.msra.mxu0 %v2499
    %2927 = vmatprep.subr.bf16.mxu0 %v2496
    %2928 = vmatpush1.bf16.msra.mxu0 %v2495
    %2929 = vmatprep.subr.bf16.mxu0 %v2492
    %2930 = vmatpush1.bf16.msra.mxu0 %v2491
    %2931 = vmatprep.subr.bf16.mxu0 %v2488
    %2932 = vmatpush1.bf16.msra.mxu0 %v2487
    %2933 = vmatprep.subr.bf16.mxu0 %v2484
    %2934 = vmatpush1.bf16.msra.mxu0 %v2483
    %2935 = vmatprep.subr.bf16.mxu0 %v2480
    %2936 = vmatpush1.bf16.msra.mxu0 %v2479
    %2937 = vmatprep.subr.bf16.mxu0 %v2476
    %2938 = vmatpush1.bf16.msra.mxu0 %v2475
    %2939 = vmatprep.subr.bf16.mxu0 %v2472
    %2940 = vmatpush1.bf16.msra.mxu0 %v2471
    %2941 = vmatprep.subr.bf16.mxu0 0
    %2942 = vmatpush2.bf16.msra.mxu0 0
    %2943 = vmatprep.subr.bf16.mxu0 0
    %2944 = vmatpush2.bf16.msra.mxu0 0
    %2945 = vmatprep.subr.bf16.mxu0 0
    %2946 = vmatpush2.bf16.msra.mxu0 0
    %2947 = vmatprep.subr.bf16.mxu0 0
    %2948 = vmatpush2.bf16.msra.mxu0 0
    %2949 = vmatprep.subr.bf16.mxu0 0
    %2950 = vmatpush2.bf16.msra.mxu0 0
    %2951 = vmatprep.subr.bf16.mxu0 0
    %2952 = vmatpush2.bf16.msra.mxu0 0
    %2953 = vmatprep.subr.bf16.mxu0 0
    %2954 = vmatpush2.bf16.msra.mxu0 0
    %2955 = vmatprep.subr.bf16.mxu0 0
    %2956 = vmatpush2.bf16.msra.mxu0 0
    %2957 = vmatprep.mubr.bf16.mxu0 0
    %2958 = vmatmul.mubr.bf16.gmra.mxu0 %v2881
    %v2959 = vpop.f32.mrf.mxu0
    %v2960 = vadd.f32 0.0, %v2959
    %v2961 = vpop.f32.mrf.mxu0
    %v2962 = vadd.f32 0.0, %v2961
    %v2963 = vpop.f32.mrf.mxu0
    %v2964 = vpop.f32.mrf.mxu0
    %2965 = vdwg.mxu0
    %v2966 = vunpack.c.l.bf16 %v2882
    %v2967 = vunpack.c.h.bf16 %v2882
    %v2968 = vunpack.c.l.bf16 %v2883
    %v2969 = vunpack.c.h.bf16 %v2883
    %v2970 = vadd.f32 %v2966, %v2919
    %v2971 = vadd.f32 %v2967, %v2921
    %v2972 = vadd.f32 %v2968, %v2960
    %v2973 = vadd.f32 %v2969, %v2962
    %v2974 = vxor.u32 %v2970, 2147483648
    %v2975 = vxor.u32 %v2971, 2147483648
    %v2976 = vxor.u32 %v2972, 2147483648
    %v2977 = vmul.f32 %v2974, 1.442695
    %v2978 = vpow.pop %v2977
    %v2979 = vmul.f32 %v2975, 1.442695
    %v2980 = vpow.pop %v2979
    %v2981 = vmul.f32 %v2976, 1.442695
    %v2982 = vpow.pop %v2981
    %v2983 = vadd.f32 %v2978, 1.0
    %v2984 = vadd.f32 %v2980, 1.0
    %v2985 = vadd.f32 %v2982, 1.0
    %v2986 = vrcp.pop %v2983
    %v2987 = vmul.f32 1.0, %v2986
    %v2988 = vrcp.pop %v2984
    %v2989 = vmul.f32 1.0, %v2988
    %v2990 = vrcp.pop %v2985
    %v2991 = vmul.f32 1.0, %v2990
    %v2992 = vtanh.pop %v2973
    %v2993 = vmul.f32 %v2989, %v2878
    %v2994 = vmul.f32 %v2987, %v2992
    %v2995 = vadd.f32 %v2993, %v2994
    %v2996 = vtanh.pop %v2995
    %v2997 = vmul.f32 %v2991, %v2996
    %v2998 = vpack.c.bf16 %v2997, %v2997
    %v2999 = vld [vmem:[%s1322] sm:$0xff]
    %v3000 = vld [vmem:[%s1322 + $0x8] sm:$0xff]
    %3001 = vmatprep.subr.bf16.mxu0 %v2498
    %3002 = vmatpush1.bf16.msra.mxu0 %v2497
    %3003 = vmatprep.subr.bf16.mxu0 %v2494
    %3004 = vmatpush1.bf16.msra.mxu0 %v2493
    %3005 = vmatprep.subr.bf16.mxu0 %v2490
    %3006 = vmatpush1.bf16.msra.mxu0 %v2489
    %3007 = vmatprep.subr.bf16.mxu0 %v2486
    %3008 = vmatpush1.bf16.msra.mxu0 %v2485
    %3009 = vmatprep.subr.bf16.mxu0 %v2482
    %3010 = vmatpush1.bf16.msra.mxu0 %v2481
    %3011 = vmatprep.subr.bf16.mxu0 %v2478
    %3012 = vmatpush1.bf16.msra.mxu0 %v2477
    %3013 = vmatprep.subr.bf16.mxu0 %v2474
    %3014 = vmatpush1.bf16.msra.mxu0 %v2473
    %3015 = vmatprep.subr.bf16.mxu0 %v2470
    %3016 = vmatpush1.bf16.msra.mxu0 %v2469
    %3017 = vmatprep.subr.bf16.mxu0 0
    %3018 = vmatpush2.bf16.msra.mxu0 0
    %3019 = vmatprep.subr.bf16.mxu0 0
    %3020 = vmatpush2.bf16.msra.mxu0 0
    %3021 = vmatprep.subr.bf16.mxu0 0
    %3022 = vmatpush2.bf16.msra.mxu0 0
    %3023 = vmatprep.subr.bf16.mxu0 0
    %3024 = vmatpush2.bf16.msra.mxu0 0
    %3025 = vmatprep.subr.bf16.mxu0 0
    %3026 = vmatpush2.bf16.msra.mxu0 0
    %3027 = vmatprep.subr.bf16.mxu0 0
    %3028 = vmatpush2.bf16.msra.mxu0 0
    %3029 = vmatprep.subr.bf16.mxu0 0
    %3030 = vmatpush2.bf16.msra.mxu0 0
    %3031 = vmatprep.subr.bf16.mxu0 0
    %3032 = vmatpush2.bf16.msra.mxu0 0
    %3033 = vmatprep.mubr.bf16.mxu0 0
    %3034 = vmatmul.mubr.bf16.gmra.mxu0 %v2998
    %v3035 = vpop.f32.mrf.mxu0
    %v3036 = vadd.f32 0.0, %v3035
    %v3037 = vpop.f32.mrf.mxu0
    %v3038 = vadd.f32 0.0, %v3037
    %v3039 = vpop.f32.mrf.mxu0
    %v3040 = vpop.f32.mrf.mxu0
    %3041 = vdwg.mxu0
    %3042 = vmatprep.subr.bf16.mxu0 %v2500
    %3043 = vmatpush1.bf16.msra.mxu0 %v2499
    %3044 = vmatprep.subr.bf16.mxu0 %v2496
    %3045 = vmatpush1.bf16.msra.mxu0 %v2495
    %3046 = vmatprep.subr.bf16.mxu0 %v2492
    %3047 = vmatpush1.bf16.msra.mxu0 %v2491
    %3048 = vmatprep.subr.bf16.mxu0 %v2488
    %3049 = vmatpush1.bf16.msra.mxu0 %v2487
    %3050 = vmatprep.subr.bf16.mxu0 %v2484
    %3051 = vmatpush1.bf16.msra.mxu0 %v2483
    %3052 = vmatprep.subr.bf16.mxu0 %v2480
    %3053 = vmatpush1.bf16.msra.mxu0 %v2479
    %3054 = vmatprep.subr.bf16.mxu0 %v2476
    %3055 = vmatpush1.bf16.msra.mxu0 %v2475
    %3056 = vmatprep.subr.bf16.mxu0 %v2472
    %3057 = vmatpush1.bf16.msra.mxu0 %v2471
    %3058 = vmatprep.subr.bf16.mxu0 0
    %3059 = vmatpush2.bf16.msra.mxu0 0
    %3060 = vmatprep.subr.bf16.mxu0 0
    %3061 = vmatpush2.bf16.msra.mxu0 0
    %3062 = vmatprep.subr.bf16.mxu0 0
    %3063 = vmatpush2.bf16.msra.mxu0 0
    %3064 = vmatprep.subr.bf16.mxu0 0
    %3065 = vmatpush2.bf16.msra.mxu0 0
    %3066 = vmatprep.subr.bf16.mxu0 0
    %3067 = vmatpush2.bf16.msra.mxu0 0
    %3068 = vmatprep.subr.bf16.mxu0 0
    %3069 = vmatpush2.bf16.msra.mxu0 0
    %3070 = vmatprep.subr.bf16.mxu0 0
    %3071 = vmatpush2.bf16.msra.mxu0 0
    %3072 = vmatprep.subr.bf16.mxu0 0
    %3073 = vmatpush2.bf16.msra.mxu0 0
    %3074 = vmatprep.mubr.bf16.mxu0 0
    %3075 = vmatmul.mubr.bf16.gmra.mxu0 %v2998
    %v3076 = vpop.f32.mrf.mxu0
    %v3077 = vadd.f32 0.0, %v3076
    %v3078 = vpop.f32.mrf.mxu0
    %v3079 = vadd.f32 0.0, %v3078
    %v3080 = vpop.f32.mrf.mxu0
    %v3081 = vpop.f32.mrf.mxu0
    %3082 = vdwg.mxu0
    %v3083 = vunpack.c.l.bf16 %v2999
    %v3084 = vunpack.c.h.bf16 %v2999
    %v3085 = vunpack.c.l.bf16 %v3000
    %v3086 = vunpack.c.h.bf16 %v3000
    %v3087 = vadd.f32 %v3083, %v3036
    %v3088 = vadd.f32 %v3084, %v3038
    %v3089 = vadd.f32 %v3085, %v3077
    %v3090 = vadd.f32 %v3086, %v3079
    %v3091 = vxor.u32 %v3087, 2147483648
    %v3092 = vxor.u32 %v3088, 2147483648
    %v3093 = vxor.u32 %v3089, 2147483648
    %v3094 = vmul.f32 %v3091, 1.442695
    %v3095 = vpow.pop %v3094
    %v3096 = vmul.f32 %v3092, 1.442695
    %v3097 = vpow.pop %v3096
    %v3098 = vmul.f32 %v3093, 1.442695
    %v3099 = vpow.pop %v3098
    %v3100 = vadd.f32 %v3095, 1.0
    %v3101 = vadd.f32 %v3097, 1.0
    %v3102 = vadd.f32 %v3099, 1.0
    %v3103 = vrcp.pop %v3100
    %v3104 = vmul.f32 1.0, %v3103
    %v3105 = vrcp.pop %v3101
    %v3106 = vmul.f32 1.0, %v3105
    %v3107 = vrcp.pop %v3102
    %v3108 = vmul.f32 1.0, %v3107
    %v3109 = vtanh.pop %v3090
    %v3110 = vmul.f32 %v3106, %v2995
    %v3111 = vmul.f32 %v3104, %v3109
    %v3112 = vadd.f32 %v3110, %v3111
    %v3113 = vtanh.pop %v3112
    %v3114 = vmul.f32 %v3108, %v3113
    %v3115 = vpack.c.bf16 %v3114, %v3114
    %v3116 = vld [vmem:[%s1442] sm:$0xff]
    %v3117 = vld [vmem:[%s1442 + $0x8] sm:$0xff]
    %3118 = vmatprep.subr.bf16.mxu0 %v2498
    %3119 = vmatpush1.bf16.msra.mxu0 %v2497
    %3120 = vmatprep.subr.bf16.mxu0 %v2494
    %3121 = vmatpush1.bf16.msra.mxu0 %v2493
    %3122 = vmatprep.subr.bf16.mxu0 %v2490
    %3123 = vmatpush1.bf16.msra.mxu0 %v2489
    %3124 = vmatprep.subr.bf16.mxu0 %v2486
    %3125 = vmatpush1.bf16.msra.mxu0 %v2485
    %3126 = vmatprep.subr.bf16.mxu0 %v2482
    %3127 = vmatpush1.bf16.msra.mxu0 %v2481
    %3128 = vmatprep.subr.bf16.mxu0 %v2478
    %3129 = vmatpush1.bf16.msra.mxu0 %v2477
    %3130 = vmatprep.subr.bf16.mxu0 %v2474
    %3131 = vmatpush1.bf16.msra.mxu0 %v2473
    %3132 = vmatprep.subr.bf16.mxu0 %v2470
    %3133 = vmatpush1.bf16.msra.mxu0 %v2469
    %3134 = vmatprep.subr.bf16.mxu0 0
    %3135 = vmatpush2.bf16.msra.mxu0 0
    %3136 = vmatprep.subr.bf16.mxu0 0
    %3137 = vmatpush2.bf16.msra.mxu0 0
    %3138 = vmatprep.subr.bf16.mxu0 0
    %3139 = vmatpush2.bf16.msra.mxu0 0
    %3140 = vmatprep.subr.bf16.mxu0 0
    %3141 = vmatpush2.bf16.msra.mxu0 0
    %3142 = vmatprep.subr.bf16.mxu0 0
    %3143 = vmatpush2.bf16.msra.mxu0 0
    %3144 = vmatprep.subr.bf16.mxu0 0
    %3145 = vmatpush2.bf16.msra.mxu0 0
    %3146 = vmatprep.subr.bf16.mxu0 0
    %3147 = vmatpush2.bf16.msra.mxu0 0
    %3148 = vmatprep.subr.bf16.mxu0 0
    %3149 = vmatpush2.bf16.msra.mxu0 0
    %3150 = vmatprep.mubr.bf16.mxu0 0
    %3151 = vmatmul.mubr.bf16.gmra.mxu0 %v3115
    %v3152 = vpop.f32.mrf.mxu0
    %v3153 = vadd.f32 0.0, %v3152
    %v3154 = vpop.f32.mrf.mxu0
    %v3155 = vadd.f32 0.0, %v3154
    %v3156 = vpop.f32.mrf.mxu0
    %v3157 = vpop.f32.mrf.mxu0
    %3158 = vdwg.mxu0
    %3159 = vmatprep.subr.bf16.mxu0 %v2500
    %3160 = vmatpush1.bf16.msra.mxu0 %v2499
    %3161 = vmatprep.subr.bf16.mxu0 %v2496
    %3162 = vmatpush1.bf16.msra.mxu0 %v2495
    %3163 = vmatprep.subr.bf16.mxu0 %v2492
    %3164 = vmatpush1.bf16.msra.mxu0 %v2491
    %3165 = vmatprep.subr.bf16.mxu0 %v2488
    %3166 = vmatpush1.bf16.msra.mxu0 %v2487
    %3167 = vmatprep.subr.bf16.mxu0 %v2484
    %3168 = vmatpush1.bf16.msra.mxu0 %v2483
    %3169 = vmatprep.subr.bf16.mxu0 %v2480
    %3170 = vmatpush1.bf16.msra.mxu0 %v2479
    %3171 = vmatprep.subr.bf16.mxu0 %v2476
    %3172 = vmatpush1.bf16.msra.mxu0 %v2475
    %3173 = vmatprep.subr.bf16.mxu0 %v2472
    %3174 = vmatpush1.bf16.msra.mxu0 %v2471
    %3175 = vmatprep.subr.bf16.mxu0 0
    %3176 = vmatpush2.bf16.msra.mxu0 0
    %3177 = vmatprep.subr.bf16.mxu0 0
    %3178 = vmatpush2.bf16.msra.mxu0 0
    %3179 = vmatprep.subr.bf16.mxu0 0
    %3180 = vmatpush2.bf16.msra.mxu0 0
    %3181 = vmatprep.subr.bf16.mxu0 0
    %3182 = vmatpush2.bf16.msra.mxu0 0
    %3183 = vmatprep.subr.bf16.mxu0 0
    %3184 = vmatpush2.bf16.msra.mxu0 0
    %3185 = vmatprep.subr.bf16.mxu0 0
    %3186 = vmatpush2.bf16.msra.mxu0 0
    %3187 = vmatprep.subr.bf16.mxu0 0
    %3188 = vmatpush2.bf16.msra.mxu0 0
    %3189 = vmatprep.subr.bf16.mxu0 0
    %3190 = vmatpush2.bf16.msra.mxu0 0
    %3191 = vmatprep.mubr.bf16.mxu0 0
    %3192 = vmatmul.mubr.bf16.gmra.mxu0 %v3115
    %v3193 = vpop.f32.mrf.mxu0
    %v3194 = vadd.f32 0.0, %v3193
    %v3195 = vpop.f32.mrf.mxu0
    %v3196 = vadd.f32 0.0, %v3195
    %v3197 = vpop.f32.mrf.mxu0
    %v3198 = vpop.f32.mrf.mxu0
    %3199 = vdwg.mxu0
    %v3200 = vunpack.c.l.bf16 %v3116
    %v3201 = vunpack.c.h.bf16 %v3116
    %v3202 = vunpack.c.l.bf16 %v3117
    %v3203 = vunpack.c.h.bf16 %v3117
    %v3204 = vadd.f32 %v3200, %v3153
    %v3205 = vadd.f32 %v3201, %v3155
    %v3206 = vadd.f32 %v3202, %v3194
    %v3207 = vadd.f32 %v3203, %v3196
    %v3208 = vxor.u32 %v3204, 2147483648
    %v3209 = vxor.u32 %v3205, 2147483648
    %v3210 = vxor.u32 %v3206, 2147483648
    %v3211 = vmul.f32 %v3208, 1.442695
    %v3212 = vpow.pop %v3211
    %v3213 = vmul.f32 %v3209, 1.442695
    %v3214 = vpow.pop %v3213
    %v3215 = vmul.f32 %v3210, 1.442695
    %v3216 = vpow.pop %v3215
    %v3217 = vadd.f32 %v3212, 1.0
    %v3218 = vadd.f32 %v3214, 1.0
    %v3219 = vadd.f32 %v3216, 1.0
    %v3220 = vrcp.pop %v3217
    %v3221 = vmul.f32 1.0, %v3220
    %v3222 = vrcp.pop %v3218
    %v3223 = vmul.f32 1.0, %v3222
    %v3224 = vrcp.pop %v3219
    %v3225 = vmul.f32 1.0, %v3224
    %v3226 = vtanh.pop %v3207
    %v3227 = vmul.f32 %v3223, %v3112
    %v3228 = vmul.f32 %v3221, %v3226
    %v3229 = vadd.f32 %v3227, %v3228
    %v3230 = vtanh.pop %v3229
    %v3231 = vmul.f32 %v3225, %v3230
    %v3232 = vpack.c.bf16 %v3231, %v3231
    %v3233 = vld [vmem:[%s1562] sm:$0xff]
    %v3234 = vld [vmem:[%s1562 + $0x8] sm:$0xff]
    %3235 = vmatprep.subr.bf16.mxu0 %v2498
    %3236 = vmatpush1.bf16.msra.mxu0 %v2497
    %3237 = vmatprep.subr.bf16.mxu0 %v2494
    %3238 = vmatpush1.bf16.msra.mxu0 %v2493
    %3239 = vmatprep.subr.bf16.mxu0 %v2490
    %3240 = vmatpush1.bf16.msra.mxu0 %v2489
    %3241 = vmatprep.subr.bf16.mxu0 %v2486
    %3242 = vmatpush1.bf16.msra.mxu0 %v2485
    %3243 = vmatprep.subr.bf16.mxu0 %v2482
    %3244 = vmatpush1.bf16.msra.mxu0 %v2481
    %3245 = vmatprep.subr.bf16.mxu0 %v2478
    %3246 = vmatpush1.bf16.msra.mxu0 %v2477
    %3247 = vmatprep.subr.bf16.mxu0 %v2474
    %3248 = vmatpush1.bf16.msra.mxu0 %v2473
    %3249 = vmatprep.subr.bf16.mxu0 %v2470
    %3250 = vmatpush1.bf16.msra.mxu0 %v2469
    %3251 = vmatprep.subr.bf16.mxu0 0
    %3252 = vmatpush2.bf16.msra.mxu0 0
    %3253 = vmatprep.subr.bf16.mxu0 0
    %3254 = vmatpush2.bf16.msra.mxu0 0
    %3255 = vmatprep.subr.bf16.mxu0 0
    %3256 = vmatpush2.bf16.msra.mxu0 0
    %3257 = vmatprep.subr.bf16.mxu0 0
    %3258 = vmatpush2.bf16.msra.mxu0 0
    %3259 = vmatprep.subr.bf16.mxu0 0
    %3260 = vmatpush2.bf16.msra.mxu0 0
    %3261 = vmatprep.subr.bf16.mxu0 0
    %3262 = vmatpush2.bf16.msra.mxu0 0
    %3263 = vmatprep.subr.bf16.mxu0 0
    %3264 = vmatpush2.bf16.msra.mxu0 0
    %3265 = vmatprep.subr.bf16.mxu0 0
    %3266 = vmatpush2.bf16.msra.mxu0 0
    %3267 = vmatprep.mubr.bf16.mxu0 0
    %3268 = vmatmul.mubr.bf16.gmra.mxu0 %v3232
    %v3269 = vpop.f32.mrf.mxu0
    %v3270 = vadd.f32 0.0, %v3269
    %v3271 = vpop.f32.mrf.mxu0
    %v3272 = vadd.f32 0.0, %v3271
    %v3273 = vpop.f32.mrf.mxu0
    %v3274 = vpop.f32.mrf.mxu0
    %3275 = vdwg.mxu0
    %3276 = vmatprep.subr.bf16.mxu0 %v2500
    %3277 = vmatpush1.bf16.msra.mxu0 %v2499
    %3278 = vmatprep.subr.bf16.mxu0 %v2496
    %3279 = vmatpush1.bf16.msra.mxu0 %v2495
    %3280 = vmatprep.subr.bf16.mxu0 %v2492
    %3281 = vmatpush1.bf16.msra.mxu0 %v2491
    %3282 = vmatprep.subr.bf16.mxu0 %v2488
    %3283 = vmatpush1.bf16.msra.mxu0 %v2487
    %3284 = vmatprep.subr.bf16.mxu0 %v2484
    %3285 = vmatpush1.bf16.msra.mxu0 %v2483
    %3286 = vmatprep.subr.bf16.mxu0 %v2480
    %3287 = vmatpush1.bf16.msra.mxu0 %v2479
    %3288 = vmatprep.subr.bf16.mxu0 %v2476
    %3289 = vmatpush1.bf16.msra.mxu0 %v2475
    %3290 = vmatprep.subr.bf16.mxu0 %v2472
    %3291 = vmatpush1.bf16.msra.mxu0 %v2471
    %3292 = vmatprep.subr.bf16.mxu0 0
    %3293 = vmatpush2.bf16.msra.mxu0 0
    %3294 = vmatprep.subr.bf16.mxu0 0
    %3295 = vmatpush2.bf16.msra.mxu0 0
    %3296 = vmatprep.subr.bf16.mxu0 0
    %3297 = vmatpush2.bf16.msra.mxu0 0
    %3298 = vmatprep.subr.bf16.mxu0 0
    %3299 = vmatpush2.bf16.msra.mxu0 0
    %3300 = vmatprep.subr.bf16.mxu0 0
    %3301 = vmatpush2.bf16.msra.mxu0 0
    %3302 = vmatprep.subr.bf16.mxu0 0
    %3303 = vmatpush2.bf16.msra.mxu0 0
    %3304 = vmatprep.subr.bf16.mxu0 0
    %3305 = vmatpush2.bf16.msra.mxu0 0
    %3306 = vmatprep.subr.bf16.mxu0 0
    %3307 = vmatpush2.bf16.msra.mxu0 0
    %3308 = vmatprep.mubr.bf16.mxu0 0
    %3309 = vmatmul.mubr.bf16.gmra.mxu0 %v3232
    %v3310 = vpop.f32.mrf.mxu0
    %v3311 = vadd.f32 0.0, %v3310
    %v3312 = vpop.f32.mrf.mxu0
    %v3313 = vadd.f32 0.0, %v3312
    %v3314 = vpop.f32.mrf.mxu0
    %v3315 = vpop.f32.mrf.mxu0
    %3316 = vdwg.mxu0
    %v3317 = vunpack.c.l.bf16 %v3233
    %v3318 = vunpack.c.h.bf16 %v3233
    %v3319 = vunpack.c.l.bf16 %v3234
    %v3320 = vunpack.c.h.bf16 %v3234
    %v3321 = vadd.f32 %v3317, %v3270
    %v3322 = vadd.f32 %v3318, %v3272
    %v3323 = vadd.f32 %v3319, %v3311
    %v3324 = vadd.f32 %v3320, %v3313
    %v3325 = vxor.u32 %v3321, 2147483648
    %v3326 = vxor.u32 %v3322, 2147483648
    %v3327 = vxor.u32 %v3323, 2147483648
    %v3328 = vmul.f32 %v3325, 1.442695
    %v3329 = vpow.pop %v3328
    %v3330 = vmul.f32 %v3326, 1.442695
    %v3331 = vpow.pop %v3330
    %v3332 = vmul.f32 %v3327, 1.442695
    %v3333 = vpow.pop %v3332
    %v3334 = vadd.f32 %v3329, 1.0
    %v3335 = vadd.f32 %v3331, 1.0
    %v3336 = vadd.f32 %v3333, 1.0
    %v3337 = vrcp.pop %v3334
    %v3338 = vmul.f32 1.0, %v3337
    %v3339 = vrcp.pop %v3335
    %v3340 = vmul.f32 1.0, %v3339
    %v3341 = vrcp.pop %v3336
    %v3342 = vmul.f32 1.0, %v3341
    %v3343 = vtanh.pop %v3324
    %v3344 = vmul.f32 %v3340, %v3229
    %v3345 = vmul.f32 %v3338, %v3343
    %v3346 = vadd.f32 %v3344, %v3345
    %v3347 = vtanh.pop %v3346
    %v3348 = vmul.f32 %v3342, %v3347
    %v3349 = vpack.c.bf16 %v3348, %v3348
    %v3350 = vld [vmem:[%s1682] sm:$0xff]
    %v3351 = vld [vmem:[%s1682 + $0x8] sm:$0xff]
    %3352 = vmatprep.subr.bf16.mxu0 %v2498
    %3353 = vmatpush1.bf16.msra.mxu0 %v2497
    %3354 = vmatprep.subr.bf16.mxu0 %v2494
    %3355 = vmatpush1.bf16.msra.mxu0 %v2493
    %3356 = vmatprep.subr.bf16.mxu0 %v2490
    %3357 = vmatpush1.bf16.msra.mxu0 %v2489
    %3358 = vmatprep.subr.bf16.mxu0 %v2486
    %3359 = vmatpush1.bf16.msra.mxu0 %v2485
    %3360 = vmatprep.subr.bf16.mxu0 %v2482
    %3361 = vmatpush1.bf16.msra.mxu0 %v2481
    %3362 = vmatprep.subr.bf16.mxu0 %v2478
    %3363 = vmatpush1.bf16.msra.mxu0 %v2477
    %3364 = vmatprep.subr.bf16.mxu0 %v2474
    %3365 = vmatpush1.bf16.msra.mxu0 %v2473
    %3366 = vmatprep.subr.bf16.mxu0 %v2470
    %3367 = vmatpush1.bf16.msra.mxu0 %v2469
    %3368 = vmatprep.subr.bf16.mxu0 0
    %3369 = vmatpush2.bf16.msra.mxu0 0
    %3370 = vmatprep.subr.bf16.mxu0 0
    %3371 = vmatpush2.bf16.msra.mxu0 0
    %3372 = vmatprep.subr.bf16.mxu0 0
    %3373 = vmatpush2.bf16.msra.mxu0 0
    %3374 = vmatprep.subr.bf16.mxu0 0
    %3375 = vmatpush2.bf16.msra.mxu0 0
    %3376 = vmatprep.subr.bf16.mxu0 0
    %3377 = vmatpush2.bf16.msra.mxu0 0
    %3378 = vmatprep.subr.bf16.mxu0 0
    %3379 = vmatpush2.bf16.msra.mxu0 0
    %3380 = vmatprep.subr.bf16.mxu0 0
    %3381 = vmatpush2.bf16.msra.mxu0 0
    %3382 = vmatprep.subr.bf16.mxu0 0
    %3383 = vmatpush2.bf16.msra.mxu0 0
    %3384 = vmatprep.mubr.bf16.mxu0 0
    %3385 = vmatmul.mubr.bf16.gmra.mxu0 %v3349
    %v3386 = vpop.f32.mrf.mxu0
    %v3387 = vadd.f32 0.0, %v3386
    %v3388 = vpop.f32.mrf.mxu0
    %v3389 = vadd.f32 0.0, %v3388
    %v3390 = vpop.f32.mrf.mxu0
    %v3391 = vpop.f32.mrf.mxu0
    %3392 = vdwg.mxu0
    %3393 = vmatprep.subr.bf16.mxu0 %v2500
    %3394 = vmatpush1.bf16.msra.mxu0 %v2499
    %3395 = vmatprep.subr.bf16.mxu0 %v2496
    %3396 = vmatpush1.bf16.msra.mxu0 %v2495
    %3397 = vmatprep.subr.bf16.mxu0 %v2492
    %3398 = vmatpush1.bf16.msra.mxu0 %v2491
    %3399 = vmatprep.subr.bf16.mxu0 %v2488
    %3400 = vmatpush1.bf16.msra.mxu0 %v2487
    %3401 = vmatprep.subr.bf16.mxu0 %v2484
    %3402 = vmatpush1.bf16.msra.mxu0 %v2483
    %3403 = vmatprep.subr.bf16.mxu0 %v2480
    %3404 = vmatpush1.bf16.msra.mxu0 %v2479
    %3405 = vmatprep.subr.bf16.mxu0 %v2476
    %3406 = vmatpush1.bf16.msra.mxu0 %v2475
    %3407 = vmatprep.subr.bf16.mxu0 %v2472
    %3408 = vmatpush1.bf16.msra.mxu0 %v2471
    %3409 = vmatprep.subr.bf16.mxu0 0
    %3410 = vmatpush2.bf16.msra.mxu0 0
    %3411 = vmatprep.subr.bf16.mxu0 0
    %3412 = vmatpush2.bf16.msra.mxu0 0
    %3413 = vmatprep.subr.bf16.mxu0 0
    %3414 = vmatpush2.bf16.msra.mxu0 0
    %3415 = vmatprep.subr.bf16.mxu0 0
    %3416 = vmatpush2.bf16.msra.mxu0 0
    %3417 = vmatprep.subr.bf16.mxu0 0
    %3418 = vmatpush2.bf16.msra.mxu0 0
    %3419 = vmatprep.subr.bf16.mxu0 0
    %3420 = vmatpush2.bf16.msra.mxu0 0
    %3421 = vmatprep.subr.bf16.mxu0 0
    %3422 = vmatpush2.bf16.msra.mxu0 0
    %3423 = vmatprep.subr.bf16.mxu0 0
    %3424 = vmatpush2.bf16.msra.mxu0 0
    %3425 = vmatprep.mubr.bf16.mxu0 0
    %3426 = vmatmul.mubr.bf16.gmra.mxu0 %v3349
    %v3427 = vpop.f32.mrf.mxu0
    %v3428 = vadd.f32 0.0, %v3427
    %v3429 = vpop.f32.mrf.mxu0
    %v3430 = vadd.f32 0.0, %v3429
    %v3431 = vpop.f32.mrf.mxu0
    %v3432 = vpop.f32.mrf.mxu0
    %3433 = vdwg.mxu0
    %v3434 = vunpack.c.l.bf16 %v3350
    %v3435 = vunpack.c.h.bf16 %v3350
    %v3436 = vunpack.c.l.bf16 %v3351
    %v3437 = vunpack.c.h.bf16 %v3351
    %v3438 = vadd.f32 %v3434, %v3387
    %v3439 = vadd.f32 %v3435, %v3389
    %v3440 = vadd.f32 %v3436, %v3428
    %v3441 = vadd.f32 %v3437, %v3430
    %v3442 = vxor.u32 %v3438, 2147483648
    %v3443 = vxor.u32 %v3439, 2147483648
    %v3444 = vxor.u32 %v3440, 2147483648
    %v3445 = vmul.f32 %v3442, 1.442695
    %v3446 = vpow.pop %v3445
    %v3447 = vmul.f32 %v3443, 1.442695
    %v3448 = vpow.pop %v3447
    %v3449 = vmul.f32 %v3444, 1.442695
    %v3450 = vpow.pop %v3449
    %v3451 = vadd.f32 %v3446, 1.0
    %v3452 = vadd.f32 %v3448, 1.0
    %v3453 = vadd.f32 %v3450, 1.0
    %v3454 = vrcp.pop %v3451
    %v3455 = vmul.f32 1.0, %v3454
    %v3456 = vrcp.pop %v3452
    %v3457 = vmul.f32 1.0, %v3456
    %v3458 = vrcp.pop %v3453
    %v3459 = vmul.f32 1.0, %v3458
    %v3460 = vtanh.pop %v3441
    %v3461 = vmul.f32 %v3457, %v3346
    %v3462 = vmul.f32 %v3455, %v3460
    %v3463 = vadd.f32 %v3461, %v3462
    %v3464 = vtanh.pop %v3463
    %v3465 = vmul.f32 %v3459, %v3464
    %v3466 = vpack.c.bf16 %v3465, %v3465
    %v3467 = vunpack.c.l.bf16 %v3466
    %v3468 = vtanh.pop %v1802
    %v3469 = vtanh.pop %v3467
    %v3470 = vpack.c.bf16 %v3468, %v3468
    %v3471 = vpack.c.bf16 %v1797, %v1797
    %v3472 = vpack.c.bf16 %v3469, %v3469
    %v3473 = vpack.c.bf16 %v3464, %v3464
    %v3474 = vld [vmem:[#allocation13] sm:$0xf]
    %v3475 = vld [vmem:[#allocation13 + $0x4] sm:$0xf]
    %v3476 = vld [vmem:[#allocation13 + $0x8] sm:$0xf]
    %v3477 = vld [vmem:[#allocation13 + $0xc] sm:$0xf]
    %v3478 = vld [vmem:[#allocation13 + $0x10] sm:$0xf]
    %v3479 = vld [vmem:[#allocation13 + $0x14] sm:$0xf]
    %v3480 = vld [vmem:[#allocation13 + $0x18] sm:$0xf]
    %v3481 = vld [vmem:[#allocation13 + $0x1c] sm:$0xf]
    %v3482 = vld [vmem:[#allocation13 + $0x20] sm:$0xf]
    %v3483 = vld [vmem:[#allocation13 + $0x24] sm:$0xf]
    %v3484 = vld [vmem:[#allocation13 + $0x28] sm:$0xf]
    %v3485 = vld [vmem:[#allocation13 + $0x2c] sm:$0xf]
    %v3486 = vld [vmem:[#allocation13 + $0x30] sm:$0xf]
    %v3487 = vld [vmem:[#allocation13 + $0x34] sm:$0xf]
    %v3488 = vld [vmem:[#allocation13 + $0x38] sm:$0xf]
    %v3489 = vld [vmem:[#allocation13 + $0x3c] sm:$0xf]
    %v3490 = vld [vmem:[#allocation13 + $0x40] sm:$0xf]
    %v3491 = vld [vmem:[#allocation13 + $0x44] sm:$0xf]
    %v3492 = vld [vmem:[#allocation13 + $0x48] sm:$0xf]
    %v3493 = vld [vmem:[#allocation13 + $0x4c] sm:$0xf]
    %v3494 = vld [vmem:[#allocation13 + $0x50] sm:$0xf]
    %v3495 = vld [vmem:[#allocation13 + $0x54] sm:$0xf]
    %v3496 = vld [vmem:[#allocation13 + $0x58] sm:$0xf]
    %v3497 = vld [vmem:[#allocation13 + $0x5c] sm:$0xf]
    %v3498 = vld [vmem:[#allocation13 + $0x60] sm:$0xf]
    %v3499 = vld [vmem:[#allocation13 + $0x64] sm:$0xf]
    %v3500 = vld [vmem:[#allocation13 + $0x68] sm:$0xf]
    %v3501 = vld [vmem:[#allocation13 + $0x6c] sm:$0xf]
    %v3502 = vld [vmem:[#allocation13 + $0x70] sm:$0xf]
    %v3503 = vld [vmem:[#allocation13 + $0x74] sm:$0xf]
    %v3504 = vld [vmem:[#allocation13 + $0x78] sm:$0xf]
    %v3505 = vld [vmem:[#allocation13 + $0x7c] sm:$0xf]
    %v3506 = vld [vmem:[#allocation13 + $0x80] sm:$0xf]
    %v3507 = vld [vmem:[#allocation13 + $0x84] sm:$0xf]
    %v3508 = vld [vmem:[#allocation13 + $0x88] sm:$0xf]
    %v3509 = vld [vmem:[#allocation13 + $0x8c] sm:$0xf]
    %v3510 = vld [vmem:[#allocation13 + $0x90] sm:$0xf]
    %v3511 = vld [vmem:[#allocation13 + $0x94] sm:$0xf]
    %v3512 = vld [vmem:[#allocation13 + $0x98] sm:$0xf]
    %v3513 = vld [vmem:[#allocation13 + $0x9c] sm:$0xf]
    %v3514 = vld [vmem:[#allocation13 + $0xa0] sm:$0xf]
    %v3515 = vld [vmem:[#allocation13 + $0xa4] sm:$0xf]
    %v3516 = vld [vmem:[#allocation13 + $0xa8] sm:$0xf]
    %v3517 = vld [vmem:[#allocation13 + $0xac] sm:$0xf]
    %v3518 = vld [vmem:[#allocation13 + $0xb0] sm:$0xf]
    %v3519 = vld [vmem:[#allocation13 + $0xb4] sm:$0xf]
    %v3520 = vld [vmem:[#allocation13 + $0xb8] sm:$0xf]
    %v3521 = vld [vmem:[#allocation13 + $0xbc] sm:$0xf]
    %v3522 = vld [vmem:[#allocation13 + $0xc0] sm:$0xf]
    %v3523 = vld [vmem:[#allocation13 + $0xc4] sm:$0xf]
    %v3524 = vld [vmem:[#allocation13 + $0xc8] sm:$0xf]
    %v3525 = vld [vmem:[#allocation13 + $0xcc] sm:$0xf]
    %v3526 = vld [vmem:[#allocation13 + $0xd0] sm:$0xf]
    %v3527 = vld [vmem:[#allocation13 + $0xd4] sm:$0xf]
    %v3528 = vld [vmem:[#allocation13 + $0xd8] sm:$0xf]
    %v3529 = vld [vmem:[#allocation13 + $0xdc] sm:$0xf]
    %v3530 = vld [vmem:[#allocation13 + $0xe0] sm:$0xf]
    %v3531 = vld [vmem:[#allocation13 + $0xe4] sm:$0xf]
    %v3532 = vld [vmem:[#allocation13 + $0xe8] sm:$0xf]
    %v3533 = vld [vmem:[#allocation13 + $0xec] sm:$0xf]
    %v3534 = vld [vmem:[#allocation13 + $0xf0] sm:$0xf]
    %v3535 = vld [vmem:[#allocation13 + $0xf4] sm:$0xf]
    %v3536 = vld [vmem:[#allocation13 + $0xf8] sm:$0xf]
    %v3537 = vld [vmem:[#allocation13 + $0xfc] sm:$0xf]
    %v3538 = vld [vmem:[%s8] sm:$0x1]
    %v3540 = vlaneseq
    %v3541 = vshrl.u32 %v3540, 7
    %v3542 = vsub.s32 0, %v3541
    %v3543 = vrot.slane %v3538, %v3542
    %v3609 = vunpack.c.l.b16 %v3474
    %v3610 = vunpack.c.l.b16 %v3475
    %v3611 = vunpack.c.l.b16 %v3476
    %v3612 = vunpack.c.l.b16 %v3477
    %v3613 = vunpack.c.l.b16 %v3478
    %v3614 = vunpack.c.l.b16 %v3479
    %v3615 = vunpack.c.l.b16 %v3480
    %v3616 = vunpack.c.l.b16 %v3481
    %v3617 = vunpack.c.l.b16 %v3482
    %v3618 = vunpack.c.l.b16 %v3483
    %v3619 = vunpack.c.l.b16 %v3484
    %v3620 = vunpack.c.l.b16 %v3485
    %v3621 = vunpack.c.l.b16 %v3486
    %v3622 = vunpack.c.l.b16 %v3487
    %v3623 = vunpack.c.l.b16 %v3488
    %v3624 = vunpack.c.l.b16 %v3489
    %v3625 = vunpack.c.l.b16 %v3490
    %v3626 = vunpack.c.l.b16 %v3491
    %v3627 = vunpack.c.l.b16 %v3492
    %v3628 = vunpack.c.l.b16 %v3493
    %v3629 = vunpack.c.l.b16 %v3494
    %v3630 = vunpack.c.l.b16 %v3495
    %v3631 = vunpack.c.l.b16 %v3496
    %v3632 = vunpack.c.l.b16 %v3497
    %v3633 = vunpack.c.l.b16 %v3498
    %v3634 = vunpack.c.l.b16 %v3499
    %v3635 = vunpack.c.l.b16 %v3500
    %v3636 = vunpack.c.l.b16 %v3501
    %v3637 = vunpack.c.l.b16 %v3502
    %v3638 = vunpack.c.l.b16 %v3503
    %v3639 = vunpack.c.l.b16 %v3504
    %v3640 = vunpack.c.l.b16 %v3505
    %v3641 = vunpack.c.l.b16 %v3506
    %v3642 = vunpack.c.l.b16 %v3507
    %v3643 = vunpack.c.l.b16 %v3508
    %v3644 = vunpack.c.l.b16 %v3509
    %v3645 = vunpack.c.l.b16 %v3510
    %v3646 = vunpack.c.l.b16 %v3511
    %v3647 = vunpack.c.l.b16 %v3512
    %v3648 = vunpack.c.l.b16 %v3513
    %v3649 = vunpack.c.l.b16 %v3514
    %v3650 = vunpack.c.l.b16 %v3515
    %v3651 = vunpack.c.l.b16 %v3516
    %v3652 = vunpack.c.l.b16 %v3517
    %v3653 = vunpack.c.l.b16 %v3518
    %v3654 = vunpack.c.l.b16 %v3519
    %v3655 = vunpack.c.l.b16 %v3520
    %v3656 = vunpack.c.l.b16 %v3521
    %v3657 = vunpack.c.l.b16 %v3522
    %v3658 = vunpack.c.l.b16 %v3523
    %v3659 = vunpack.c.l.b16 %v3524
    %v3660 = vunpack.c.l.b16 %v3525
    %v3661 = vunpack.c.l.b16 %v3526
    %v3662 = vunpack.c.l.b16 %v3527
    %v3663 = vunpack.c.l.b16 %v3528
    %v3664 = vunpack.c.l.b16 %v3529
    %v3665 = vunpack.c.l.b16 %v3530
    %v3666 = vunpack.c.l.b16 %v3531
    %v3667 = vunpack.c.l.b16 %v3532
    %v3668 = vunpack.c.l.b16 %v3533
    %v3669 = vunpack.c.l.b16 %v3534
    %v3670 = vunpack.c.l.b16 %v3535
    %v3671 = vunpack.c.l.b16 %v3536
    %v3672 = vunpack.c.l.b16 %v3537
    %v3673 = vpack.c.b16 %v3610, %v3609
    %v3674 = vpack.c.b16 %v3612, %v3611
    %v3675 = vpack.c.b16 %v3614, %v3613
    %v3676 = vpack.c.b16 %v3616, %v3615
    %v3677 = vpack.c.b16 %v3618, %v3617
    %v3678 = vpack.c.b16 %v3620, %v3619
    %v3679 = vpack.c.b16 %v3622, %v3621
    %v3680 = vpack.c.b16 %v3624, %v3623
    %v3681 = vpack.c.b16 %v3626, %v3625
    %v3682 = vpack.c.b16 %v3628, %v3627
    %v3683 = vpack.c.b16 %v3630, %v3629
    %v3684 = vpack.c.b16 %v3632, %v3631
    %v3685 = vpack.c.b16 %v3634, %v3633
    %v3686 = vpack.c.b16 %v3636, %v3635
    %v3687 = vpack.c.b16 %v3638, %v3637
    %v3688 = vpack.c.b16 %v3640, %v3639
    %v3689 = vpack.c.b16 %v3642, %v3641
    %v3690 = vpack.c.b16 %v3644, %v3643
    %v3691 = vpack.c.b16 %v3646, %v3645
    %v3692 = vpack.c.b16 %v3648, %v3647
    %v3693 = vpack.c.b16 %v3650, %v3649
    %v3694 = vpack.c.b16 %v3652, %v3651
    %v3695 = vpack.c.b16 %v3654, %v3653
    %v3696 = vpack.c.b16 %v3656, %v3655
    %v3697 = vpack.c.b16 %v3658, %v3657
    %v3698 = vpack.c.b16 %v3660, %v3659
    %v3699 = vpack.c.b16 %v3662, %v3661
    %v3700 = vpack.c.b16 %v3664, %v3663
    %v3701 = vpack.c.b16 %v3666, %v3665
    %v3702 = vpack.c.b16 %v3668, %v3667
    %v3703 = vpack.c.b16 %v3670, %v3669
    %v3704 = vpack.c.b16 %v3672, %v3671
    %3737 = vmatprep.subr.bf16.mxu0 0
    %3738 = vmatpush1.bf16.msra.mxu0 %v3680
    %3739 = vmatprep.subr.bf16.mxu0 0
    %3740 = vmatpush1.bf16.msra.mxu0 %v3679
    %3741 = vmatprep.subr.bf16.mxu0 0
    %3742 = vmatpush1.bf16.msra.mxu0 %v3678
    %3743 = vmatprep.subr.bf16.mxu0 0
    %3744 = vmatpush1.bf16.msra.mxu0 %v3677
    %3745 = vmatprep.subr.bf16.mxu0 0
    %3746 = vmatpush1.bf16.msra.mxu0 %v3676
    %3747 = vmatprep.subr.bf16.mxu0 0
    %3748 = vmatpush1.bf16.msra.mxu0 %v3675
    %3749 = vmatprep.subr.bf16.mxu0 0
    %3750 = vmatpush1.bf16.msra.mxu0 %v3674
    %3751 = vmatprep.subr.bf16.mxu0 0
    %3752 = vmatpush1.bf16.msra.mxu0 %v3673
    %3753 = vmatprep.subr.bf16.mxu0 0
    %3754 = vmatpush2.bf16.msra.mxu0 %v3688
    %3755 = vmatprep.subr.bf16.mxu0 0
    %3756 = vmatpush2.bf16.msra.mxu0 %v3687
    %3757 = vmatprep.subr.bf16.mxu0 0
    %3758 = vmatpush2.bf16.msra.mxu0 %v3686
    %3759 = vmatprep.subr.bf16.mxu0 0
    %3760 = vmatpush2.bf16.msra.mxu0 %v3685
    %3761 = vmatprep.subr.bf16.mxu0 0
    %3762 = vmatpush2.bf16.msra.mxu0 %v3684
    %3763 = vmatprep.subr.bf16.mxu0 0
    %3764 = vmatpush2.bf16.msra.mxu0 %v3683
    %3765 = vmatprep.subr.bf16.mxu0 0
    %3766 = vmatpush2.bf16.msra.mxu0 %v3682
    %3767 = vmatprep.subr.bf16.mxu0 0
    %3768 = vmatpush2.bf16.msra.mxu0 %v3681
    %3769 = vmatprep.mubr.bf16.mxu0 %v3471
    %3770 = vmatmul.mubr.bf16.gmra.mxu0 %v3470
    %v3771 = vpop.f32.mrf.mxu0
    %v3772 = vadd.f32 %v3543, %v3771
    %v3773 = vpop.f32.mrf.mxu0
    %v3774 = vpop.f32.mrf.mxu0
    %v3775 = vpop.f32.mrf.mxu0
    %3776 = vdwg.mxu0
    %3777 = vmatprep.subr.bf16.mxu0 0
    %3778 = vmatpush1.bf16.msra.mxu0 %v3696
    %3779 = vmatprep.subr.bf16.mxu0 0
    %3780 = vmatpush1.bf16.msra.mxu0 %v3695
    %3781 = vmatprep.subr.bf16.mxu0 0
    %3782 = vmatpush1.bf16.msra.mxu0 %v3694
    %3783 = vmatprep.subr.bf16.mxu0 0
    %3784 = vmatpush1.bf16.msra.mxu0 %v3693
    %3785 = vmatprep.subr.bf16.mxu0 0
    %3786 = vmatpush1.bf16.msra.mxu0 %v3692
    %3787 = vmatprep.subr.bf16.mxu0 0
    %3788 = vmatpush1.bf16.msra.mxu0 %v3691
    %3789 = vmatprep.subr.bf16.mxu0 0
    %3790 = vmatpush1.bf16.msra.mxu0 %v3690
    %3791 = vmatprep.subr.bf16.mxu0 0
    %3792 = vmatpush1.bf16.msra.mxu0 %v3689
    %3793 = vmatprep.subr.bf16.mxu0 0
    %3794 = vmatpush2.bf16.msra.mxu0 %v3704
    %3795 = vmatprep.subr.bf16.mxu0 0
    %3796 = vmatpush2.bf16.msra.mxu0 %v3703
    %3797 = vmatprep.subr.bf16.mxu0 0
    %3798 = vmatpush2.bf16.msra.mxu0 %v3702
    %3799 = vmatprep.subr.bf16.mxu0 0
    %3800 = vmatpush2.bf16.msra.mxu0 %v3701
    %3801 = vmatprep.subr.bf16.mxu0 0
    %3802 = vmatpush2.bf16.msra.mxu0 %v3700
    %3803 = vmatprep.subr.bf16.mxu0 0
    %3804 = vmatpush2.bf16.msra.mxu0 %v3699
    %3805 = vmatprep.subr.bf16.mxu0 0
    %3806 = vmatpush2.bf16.msra.mxu0 %v3698
    %3807 = vmatprep.subr.bf16.mxu0 0
    %3808 = vmatpush2.bf16.msra.mxu0 %v3697
    %3809 = vmatprep.mubr.bf16.mxu0 %v3473
    %3810 = vmatmul.mubr.bf16.gmra.mxu0 %v3472
    %v3811 = vpop.f32.mrf.mxu0
    %v3812 = vadd.f32 %v3772, %v3811
    %v3813 = vpop.f32.mrf.mxu0
    %v3814 = vpop.f32.mrf.mxu0
    %v3815 = vpop.f32.mrf.mxu0
    %3816 = vdwg.mxu0
    %3817 = vst [vmem:[#allocation15] sm:$0xff] %v3812
    // Predicated region
    $region62: #{tpu_custom_call.1} parent=1 // pred_check
      _
    $region63: #{tpu_custom_call.1} parent=1 // pred_check_branch
      %3819 = sbr.rel (0) target = $region65
    $region64: #{tpu_custom_call.1} parent=1 // pred_region
      %s3821 = ssub.s32 128, 128
      %3822 = vsyncadd [#allocation6], %s3821
      %s3824 = sshll.u32 [#allocation15], 4
      %s3825 = int_to_ptr.vmem [resolvable:$true] %s3824
      %3827 = dma.vmem_to_hbm [thread:$0]  %s3825, 128, %s9, [#allocation6]
    $region65: #{tpu_custom_call.1} parent=1 // pred_fallthru
      _
    // Predicated region
    $region66: #{tpu_custom_call.1} parent=1 // pred_check
      _
    $region67: #{tpu_custom_call.1} parent=1 // pred_check_branch
      %3829 = sbr.rel (0) target = $region69
    $region68: #{tpu_custom_call.1} parent=1 // pred_region
      %3830 = dma.done [#allocation6], 128
    $region69: #{tpu_custom_call.1} parent=1 // pred_fallthru
      _
    %3831 = vsyncpa [#allocation5], 1
    %3832 = vsyncpa [#allocation8], 1
    %3833 = vsyncpa [#allocation11], 1
    %3834 = vsyncpa [#allocation14], 1
    %3835 = vsyncpa [#allocation6], 1

</llo_original>
